<compile_context>
chip_gen: v6e
topology: v6e:2x2x1
jax: 0.10.0
libtpu: 0.0.40
codegen_flags: <defaults>
</compile_context>

<pallas_src>
import functools

import jax
import jax.numpy as jnp
from jax.experimental import pallas as pl
from jax.experimental.pallas import tpu as pltpu


# ----------------------------- hyperparameters ------------------------------
class HP:
    batch = 2
    MAX_DRUG_LEN = 8
    MAX_PROTEIN_LEN = 16
    pro_emb = 26      # protein vocab size
    smi_emb = 64      # SMILES vocab size


HID = 32              # hid_dim
FFN = 64              # encoder FFN inner dim
OUT_HID = 512         # nn.Linear(64, 512)
N_CLASSES = 2         # nn.Linear(512, 2)
LN_EPS = 1e-5
B = HP.batch


# --------------------------- in-kernel building blocks -----------------------
def _embed_onehot(ids2d, table, vocab):
    """ids2d: (B*L, 1) int32; table: (vocab, HID) -> (B*L, HID).

    One-hot matmul on the MXU; padding_idx=0 rows of the table are zero, so
    id 0 embeds to zeros (matches nn.Embedding(padding_idx=0)).
    """
    rows = ids2d.shape[0]
    iota = jax.lax.broadcasted_iota(jnp.int32, (rows, vocab), 1)
    onehot = (ids2d == iota).astype(jnp.float32)          # lane-broadcast compare
    return jnp.dot(onehot, table, preferred_element_type=jnp.float32)


def _layernorm(h, g, b):
    mu = jnp.mean(h, axis=-1, keepdims=True)
    var = jnp.mean((h - mu) * (h - mu), axis=-1, keepdims=True)
    return (h - mu) * jax.lax.rsqrt(var + LN_EPS) * g + b


def _encoder(x2d, bb, seq_len, wqkvo, ln1g, ln1b, w1, b1, w2, b2, ln2g, ln2b):
    """One encoder block + max-pool over the sequence axis.

    x2d: (B*L, HID) -> (B, HID)
    wqkvo: (HID, 4*HID) = [Wq | Wk | Wv | Wo] packed lane-dense.
    """
    # --- fused Q/K/V(/O) projection: one (B*L,32)@(32,128) MXU matmul ---
    xw = jnp.dot(x2d, wqkvo, preferred_element_type=jnp.float32)      # (B*L, 128)
    q = xw[:, 0 * HID:1 * HID].reshape(bb, seq_len, HID)
    k = xw[:, 1 * HID:2 * HID].reshape(bb, seq_len, HID)
    v = xw[:, 2 * HID:3 * HID].reshape(bb, seq_len, HID)
    wo = wqkvo[:, 3 * HID:4 * HID]                                    # (32, 32)

    # --- single-head self-attention (batched contraction, no K^T copy) ---
    scale = 1.0 / jnp.sqrt(jnp.float32(HID))
    s = jnp.einsum('bqd,bkd->bqk', q, k,
                   preferred_element_type=jnp.float32) * scale        # (B, L, L)
    s = s - jnp.max(s, axis=-1, keepdims=True)
    p = jnp.exp(s)
    p = p * pl.reciprocal(jnp.sum(p, axis=-1, keepdims=True), approx=True)
    attn = jnp.einsum('bqk,bkd->bqd', p, v,
                      preferred_element_type=jnp.float32)             # (B, L, 32)
    attn = jnp.dot(attn.reshape(bb * seq_len, HID), wo,
                   preferred_element_type=jnp.float32)                # (B*L, 32)

    # --- residual + layernorm 1 ---
    h = _layernorm(x2d + attn, ln1g, ln1b)

    # --- feed-forward (Linear -> ReLU -> Linear) ---
    f = jnp.dot(h, w1, preferred_element_type=jnp.float32) + b1
    f = jnp.maximum(f, 0.0)
    f = jnp.dot(f, w2, preferred_element_type=jnp.float32) + b2

    # --- residual + layernorm 2 ---
    h2 = _layernorm(h + f, ln2g, ln2b)

    # --- max over the sequence axis (torch .max(dim=1)[0]) ---
    return jnp.max(h2.reshape(bb, seq_len, HID), axis=1)              # (B, 32)


# ------------------------------ fused kernel ---------------------------------
def fused_trans_kernel(smi_ids_ref, prot_ids_ref,
                       smi_tab_ref, pro_tab_ref,
                       s_wqkvo, s_ln1g, s_ln1b, s_w1, s_b1, s_w2, s_b2,
                       s_ln2g, s_ln2b,
                       p_wqkvo, p_ln1g, p_ln1b, p_w1, p_b1, p_w2, p_b2,
                       p_ln2g, p_ln2b,
                       out_w1s, out_w1p, out_b1, out_w2, out_b2,
                       o_ref):
    # Embedding lookups (in-kernel one-hot matmuls).
    x_smi = _embed_onehot(smi_ids_ref[...], smi_tab_ref[...], HP.smi_emb)
    x_pro = _embed_onehot(prot_ids_ref[...], pro_tab_ref[...], HP.pro_emb)

    # Both tiny encoders run back-to-back in the same kernel body.
    inf_smi = _encoder(x_smi, B, HP.MAX_DRUG_LEN,
                       s_wqkvo[...], s_ln1g[...], s_ln1b[...],
                       s_w1[...], s_b1[...], s_w2[...], s_b2[...],
                       s_ln2g[...], s_ln2b[...])
    inf_pro = _encoder(x_pro, B, HP.MAX_PROTEIN_LEN,
                       p_wqkvo[...], p_ln1g[...], p_ln1b[...],
                       p_w1[...], p_b1[...], p_w2[...], p_b2[...],
                       p_ln2g[...], p_ln2b[...])

    # torch.cat([inf_smi, inf_pro], dim=1) @ W1 + b1, expressed as two
    # half-width matmuls so no lane-concatenate copy is materialized.
    h = (jnp.dot(inf_smi, out_w1s[...], preferred_element_type=jnp.float32)
         + jnp.dot(inf_pro, out_w1p[...], preferred_element_type=jnp.float32)
         + out_b1[...])
    # nn.Sequential: Linear(64,512) -> Dropout(eval=identity) -> ReLU -> Linear(512,2)
    h = jnp.maximum(h, 0.0)
    o_ref[...] = jnp.dot(h, out_w2[...], preferred_element_type=jnp.float32) + out_b2[...]


# ------------------------------- full forward --------------------------------
def trans_forward(compound, adj, smi_ids, prot_ids, params):
    # compound / adj are accepted but unused (GAT output is never used in the
    # reference forward).
    del compound, adj

    # ids reshaped to (B*L, 1) outside the kernel so the in-kernel one-hot
    # needs only a lane-broadcast compare (layout-safe).
    smi_ids2d = smi_ids.reshape(-1, 1).astype(jnp.int32)     # (B*Ld, 1)
    prot_ids2d = prot_ids.reshape(-1, 1).astype(jnp.int32)   # (B*Lp, 1)

    se = params["smi_enc"]
    pe = params["pro_enc"]
    args = (
        smi_ids2d, prot_ids2d,
        params["smi_emb_table"], params["pro_emb_table"],
        se["wqkvo"], se["ln1_g"], se["ln1_b"], se["ffn_w1"], se["ffn_b1"],
        se["ffn_w2"], se["ffn_b2"], se["ln2_g"], se["ln2_b"],
        pe["wqkvo"], pe["ln1_g"], pe["ln1_b"], pe["ffn_w1"], pe["ffn_b1"],
        pe["ffn_w2"], pe["ffn_b2"], pe["ln2_g"], pe["ln2_b"],
        params["out_w1_smi"], params["out_w1_pro"], params["out_b1"],
        params["out_w2"], params["out_b2"],
    )
    return pl.pallas_call(
        fused_trans_kernel,
        out_shape=jax.ShapeDtypeStruct((B, N_CLASSES), jnp.float32),
        cost_estimate=pl.CostEstimate(
            flops=1_500_000, transcendentals=1_000, bytes_accessed=250_000),
        compiler_params=pltpu.CompilerParams(vmem_limit_bytes=16 << 20),
    )(*args)


# ------------------------------ parameter init --------------------------------
def init_encoder_params(key):
    ks = jax.random.split(key, 8)
    scale = 0.1
    wq = scale * jax.random.normal(ks[0], (HID, HID), jnp.float32)
    wk = scale * jax.random.normal(ks[1], (HID, HID), jnp.float32)
    wv = scale * jax.random.normal(ks[2], (HID, HID), jnp.float32)
    wo = scale * jax.random.normal(ks[3], (HID, HID), jnp.float32)
    return {
        # [Wq | Wk | Wv | Wo] packed into one lane-dense (32, 128) weight.
        "wqkvo": jnp.concatenate([wq, wk, wv, wo], axis=1),
        "ln1_g": jnp.ones((1, HID), jnp.float32),
        "ln1_b": jnp.zeros((1, HID), jnp.float32),
        "ffn_w1": scale * jax.random.normal(ks[4], (HID, FFN), jnp.float32),
        "ffn_b1": jnp.zeros((1, FFN), jnp.float32),
        "ffn_w2": scale * jax.random.normal(ks[5], (FFN, HID), jnp.float32),
        "ffn_b2": jnp.zeros((1, HID), jnp.float32),
        "ln2_g": jnp.ones((1, HID), jnp.float32),
        "ln2_b": jnp.zeros((1, HID), jnp.float32),
    }


def init_params(key):
    ks = jax.random.split(key, 8)
    scale = 0.1
    pro_tab = scale * jax.random.normal(ks[0], (HP.pro_emb, HID), jnp.float32)
    smi_tab = scale * jax.random.normal(ks[1], (HP.smi_emb, HID), jnp.float32)
    # padding_idx=0 -> zero row
    pro_tab = pro_tab.at[0].set(0.0)
    smi_tab = smi_tab.at[0].set(0.0)
    # Linear(64, 512): rows [:32] multiply inf_smi, rows [32:] multiply inf_pro
    # (matches torch.cat([inf_smi, inf_pro], dim=1) ordering).
    out_w1 = scale * jax.random.normal(ks[4], (2 * HID, OUT_HID), jnp.float32)
    return {
        "pro_emb_table": pro_tab,
        "smi_emb_table": smi_tab,
        "pro_enc": init_encoder_params(ks[2]),
        "smi_enc": init_encoder_params(ks[3]),
        "out_w1_smi": out_w1[:HID, :],
        "out_w1_pro": out_w1[HID:, :],
        "out_b1": jnp.zeros((1, OUT_HID), jnp.float32),
        "out_w2": scale * jax.random.normal(ks[5], (OUT_HID, N_CLASSES), jnp.float32),
        "out_b2": jnp.zeros((1, N_CLASSES), jnp.float32),
    }


# ----------------------------------- main -------------------------------------
if __name__ == "__main__":
    key = jax.random.PRNGKey(0)
    k_params, k_smi, k_pro, k_comp, k_adj = jax.random.split(key, 5)

    params = init_params(k_params)

    n_atoms = 6  # dummy graph size for the unused GAT inputs
    smi_ids = jax.random.randint(k_smi, (B, HP.MAX_DRUG_LEN), 0, HP.smi_emb, jnp.int32)
    prot_ids = jax.random.randint(k_pro, (B, HP.MAX_PROTEIN_LEN), 0, HP.pro_emb, jnp.int32)
    compound = jax.random.normal(k_comp, (B, n_atoms, 34), jnp.float32)   # unused
    adj = (jax.random.uniform(k_adj, (B, n_atoms, n_atoms)) > 0.5).astype(jnp.float32)  # unused

    fwd = jax.jit(functools.partial(trans_forward, params=params))
    out = fwd(compound, adj, smi_ids, prot_ids)
    out = jax.block_until_ready(out)

    assert out.shape == (B, N_CLASSES), out.shape
    assert out.dtype == jnp.float32
    assert bool(jnp.all(jnp.isfinite(out)))
    print("KERNEL_OK")
</pallas_src>

<mosaic_0001>
module attributes {stable_mosaic.version = 11 : i64} {
  func.func @fused_trans_kernel(%arg0: memref<16x1xi32, #tpu.memory_space<vmem>>, %arg1: memref<32x1xi32, #tpu.memory_space<vmem>>, %arg2: memref<64x32xf32, #tpu.memory_space<vmem>>, %arg3: memref<26x32xf32, #tpu.memory_space<vmem>>, %arg4: memref<32x128xf32, #tpu.memory_space<vmem>>, %arg5: memref<1x32xf32, #tpu.memory_space<vmem>>, %arg6: memref<1x32xf32, #tpu.memory_space<vmem>>, %arg7: memref<32x64xf32, #tpu.memory_space<vmem>>, %arg8: memref<1x64xf32, #tpu.memory_space<vmem>>, %arg9: memref<64x32xf32, #tpu.memory_space<vmem>>, %arg10: memref<1x32xf32, #tpu.memory_space<vmem>>, %arg11: memref<1x32xf32, #tpu.memory_space<vmem>>, %arg12: memref<1x32xf32, #tpu.memory_space<vmem>>, %arg13: memref<32x128xf32, #tpu.memory_space<vmem>>, %arg14: memref<1x32xf32, #tpu.memory_space<vmem>>, %arg15: memref<1x32xf32, #tpu.memory_space<vmem>>, %arg16: memref<32x64xf32, #tpu.memory_space<vmem>>, %arg17: memref<1x64xf32, #tpu.memory_space<vmem>>, %arg18: memref<64x32xf32, #tpu.memory_space<vmem>>, %arg19: memref<1x32xf32, #tpu.memory_space<vmem>>, %arg20: memref<1x32xf32, #tpu.memory_space<vmem>>, %arg21: memref<1x32xf32, #tpu.memory_space<vmem>>, %arg22: memref<32x512xf32, #tpu.memory_space<vmem>>, %arg23: memref<32x512xf32, #tpu.memory_space<vmem>>, %arg24: memref<1x512xf32, #tpu.memory_space<vmem>>, %arg25: memref<512x2xf32, #tpu.memory_space<vmem>>, %arg26: memref<1x2xf32, #tpu.memory_space<vmem>>, %arg27: memref<2x2xf32, #tpu.memory_space<vmem>>) attributes {dimension_semantics = [], scalar_prefetch = 0 : i64, scratch_operands = 0 : i64, tpu.core_type = #tpu.core_type<tc>} {
    %c0 = arith.constant 0 : index
    %c0_0 = arith.constant 0 : index
    %0 = vector.load %arg0[%c0, %c0_0] : memref<16x1xi32, #tpu.memory_space<vmem>>, vector<16x1xi32>
    %c0_1 = arith.constant 0 : index
    %c0_2 = arith.constant 0 : index
    %1 = vector.load %arg2[%c0_1, %c0_2] : memref<64x32xf32, #tpu.memory_space<vmem>>, vector<64x32xf32>
    %2 = tpu.iota {dimensions = array<i32: 1>} : vector<16x64xi32>
    %3 = vector.broadcast %0 : vector<16x1xi32> to vector<16x64xi32>
    %4 = arith.cmpi eq, %3, %2 : vector<16x64xi32>
    %5 = arith.extui %4 : vector<16x64xi1> to vector<16x64xi32>
    %6 = arith.sitofp %5 : vector<16x64xi32> to vector<16x64xf32>
    %cst = arith.constant dense<0.000000e+00> : vector<16x32xf32>
    %7 = tpu.matmul %6, %1, %cst {dimension_numbers = #tpu.dot_dimension_numbers<[1], [0], [0], [1], [0, 0, 1, 1], [], []>} : vector<16x64xf32>, vector<64x32xf32>, vector<16x32xf32> -> vector<16x32xf32>
    %c0_3 = arith.constant 0 : index
    %c0_4 = arith.constant 0 : index
    %8 = vector.load %arg1[%c0_3, %c0_4] : memref<32x1xi32, #tpu.memory_space<vmem>>, vector<32x1xi32>
    %c0_5 = arith.constant 0 : index
    %c0_6 = arith.constant 0 : index
    %9 = vector.load %arg3[%c0_5, %c0_6] : memref<26x32xf32, #tpu.memory_space<vmem>>, vector<26x32xf32>
    %10 = tpu.iota {dimensions = array<i32: 1>} : vector<32x26xi32>
    %11 = vector.broadcast %8 : vector<32x1xi32> to vector<32x26xi32>
    %12 = arith.cmpi eq, %11, %10 : vector<32x26xi32>
    %13 = arith.extui %12 : vector<32x26xi1> to vector<32x26xi32>
    %14 = arith.sitofp %13 : vector<32x26xi32> to vector<32x26xf32>
    %cst_7 = arith.constant dense<0.000000e+00> : vector<32x32xf32>
    %15 = tpu.matmul %14, %9, %cst_7 {dimension_numbers = #tpu.dot_dimension_numbers<[1], [0], [0], [1], [0, 0, 1, 1], [], []>} : vector<32x26xf32>, vector<26x32xf32>, vector<32x32xf32> -> vector<32x32xf32>
    %c0_8 = arith.constant 0 : index
    %c0_9 = arith.constant 0 : index
    %16 = vector.load %arg4[%c0_8, %c0_9] : memref<32x128xf32, #tpu.memory_space<vmem>>, vector<32x128xf32>
    %c0_10 = arith.constant 0 : index
    %c0_11 = arith.constant 0 : index
    %17 = vector.load %arg5[%c0_10, %c0_11] : memref<1x32xf32, #tpu.memory_space<vmem>>, vector<1x32xf32>
    %c0_12 = arith.constant 0 : index
    %c0_13 = arith.constant 0 : index
    %18 = vector.load %arg6[%c0_12, %c0_13] : memref<1x32xf32, #tpu.memory_space<vmem>>, vector<1x32xf32>
    %c0_14 = arith.constant 0 : index
    %c0_15 = arith.constant 0 : index
    %19 = vector.load %arg7[%c0_14, %c0_15] : memref<32x64xf32, #tpu.memory_space<vmem>>, vector<32x64xf32>
    %c0_16 = arith.constant 0 : index
    %c0_17 = arith.constant 0 : index
    %20 = vector.load %arg8[%c0_16, %c0_17] : memref<1x64xf32, #tpu.memory_space<vmem>>, vector<1x64xf32>
    %c0_18 = arith.constant 0 : index
    %c0_19 = arith.constant 0 : index
    %21 = vector.load %arg9[%c0_18, %c0_19] : memref<64x32xf32, #tpu.memory_space<vmem>>, vector<64x32xf32>
    %c0_20 = arith.constant 0 : index
    %c0_21 = arith.constant 0 : index
    %22 = vector.load %arg10[%c0_20, %c0_21] : memref<1x32xf32, #tpu.memory_space<vmem>>, vector<1x32xf32>
    %c0_22 = arith.constant 0 : index
    %c0_23 = arith.constant 0 : index
    %23 = vector.load %arg11[%c0_22, %c0_23] : memref<1x32xf32, #tpu.memory_space<vmem>>, vector<1x32xf32>
    %c0_24 = arith.constant 0 : index
    %c0_25 = arith.constant 0 : index
    %24 = vector.load %arg12[%c0_24, %c0_25] : memref<1x32xf32, #tpu.memory_space<vmem>>, vector<1x32xf32>
    %cst_26 = arith.constant dense<0.000000e+00> : vector<16x128xf32>
    %25 = tpu.matmul %7, %16, %cst_26 {dimension_numbers = #tpu.dot_dimension_numbers<[1], [0], [0], [1], [0, 0, 1, 1], [], []>} : vector<16x32xf32>, vector<32x128xf32>, vector<16x128xf32> -> vector<16x128xf32>
    %26 = vector.extract_strided_slice %25 {offsets = [0, 0], sizes = [16, 32], strides = [1, 1]} : vector<16x128xf32> to vector<16x32xf32>
    %27 = vector.shape_cast %26 : vector<16x32xf32> to vector<2x8x32xf32>
    %28 = vector.extract_strided_slice %25 {offsets = [0, 32], sizes = [16, 32], strides = [1, 1]} : vector<16x128xf32> to vector<16x32xf32>
    %29 = vector.shape_cast %28 : vector<16x32xf32> to vector<2x8x32xf32>
    %30 = vector.extract_strided_slice %25 {offsets = [0, 64], sizes = [16, 32], strides = [1, 1]} : vector<16x128xf32> to vector<16x32xf32>
    %31 = vector.shape_cast %30 : vector<16x32xf32> to vector<2x8x32xf32>
    %32 = vector.extract_strided_slice %16 {offsets = [0, 96], sizes = [32, 32], strides = [1, 1]} : vector<32x128xf32> to vector<32x32xf32>
    %cst_27 = arith.constant 3.200000e+01 : f32
    %33 = math.sqrt %cst_27 : f32
    %cst_28 = arith.constant 1.000000e+00 : f32
    %34 = arith.divf %cst_28, %33 : f32
    "tpu.trace_start"() <{level = 10 : i32, message = "bqd,bkd->bqk"}> : () -> ()
    %cst_29 = arith.constant dense<0.000000e+00> : vector<2x8x8xf32>
    %35 = tpu.matmul %27, %29, %cst_29 {dimension_numbers = #tpu.dot_dimension_numbers<[2], [2], [1], [1], [0, 0, 0, 1, 1, 1], [0], [0]>} : vector<2x8x32xf32>, vector<2x8x32xf32>, vector<2x8x8xf32> -> vector<2x8x8xf32>
    "tpu.trace_stop"() : () -> ()
    %36 = vector.broadcast %34 : f32 to vector<2x8x8xf32>
    %37 = arith.mulf %35, %36 : vector<2x8x8xf32>
    %cst_30 = arith.constant dense<0xFF800000> : vector<2x8xf32>
    %38 = vector.multi_reduction <maximumf>, %37, %cst_30 [2] : vector<2x8x8xf32> to vector<2x8xf32>
    %39 = vector.shape_cast %38 : vector<2x8xf32> to vector<2x8x1xf32>
    %40 = vector.broadcast %39 : vector<2x8x1xf32> to vector<2x8x8xf32>
    %41 = arith.subf %37, %40 : vector<2x8x8xf32>
    %42 = math.exp %41 : vector<2x8x8xf32>
    %cst_31 = arith.constant dense<0.000000e+00> : vector<2x8xf32>
    %43 = vector.multi_reduction <add>, %42, %cst_31 [2] : vector<2x8x8xf32> to vector<2x8xf32>
    %44 = vector.shape_cast %43 : vector<2x8xf32> to vector<2x8x1xf32>
    %45 = tpu.reciprocal %44 {approx = true} : vector<2x8x1xf32> -> vector<2x8x1xf32>
    %46 = vector.broadcast %45 : vector<2x8x1xf32> to vector<2x8x8xf32>
    %47 = arith.mulf %42, %46 : vector<2x8x8xf32>
    "tpu.trace_start"() <{level = 10 : i32, message = "bqk,bkd->bqd"}> : () -> ()
    %cst_32 = arith.constant dense<0.000000e+00> : vector<2x8x32xf32>
    %48 = tpu.matmul %47, %31, %cst_32 {dimension_numbers = #tpu.dot_dimension_numbers<[2], [1], [1], [2], [0, 0, 0, 1, 1, 2], [0], [0]>} : vector<2x8x8xf32>, vector<2x8x32xf32>, vector<2x8x32xf32> -> vector<2x8x32xf32>
    "tpu.trace_stop"() : () -> ()
    %49 = vector.shape_cast %48 : vector<2x8x32xf32> to vector<16x32xf32>
    %cst_33 = arith.constant dense<0.000000e+00> : vector<16x32xf32>
    %50 = tpu.matmul %49, %32, %cst_33 {dimension_numbers = #tpu.dot_dimension_numbers<[1], [0], [0], [1], [0, 0, 1, 1], [], []>} : vector<16x32xf32>, vector<32x32xf32>, vector<16x32xf32> -> vector<16x32xf32>
    %51 = arith.addf %7, %50 : vector<16x32xf32>
    %cst_34 = arith.constant dense<0.000000e+00> : vector<16xf32>
    %52 = vector.multi_reduction <add>, %51, %cst_34 [1] : vector<16x32xf32> to vector<16xf32>
    %53 = vector.shape_cast %52 : vector<16xf32> to vector<16x1xf32>
    %cst_35 = arith.constant 3.200000e+01 : f32
    %54 = vector.broadcast %cst_35 : f32 to vector<16x1xf32>
    %55 = arith.divf %53, %54 : vector<16x1xf32>
    %56 = vector.broadcast %55 : vector<16x1xf32> to vector<16x32xf32>
    %57 = arith.subf %51, %56 : vector<16x32xf32>
    %58 = vector.broadcast %55 : vector<16x1xf32> to vector<16x32xf32>
    %59 = arith.subf %51, %58 : vector<16x32xf32>
    %60 = arith.mulf %57, %59 : vector<16x32xf32>
    %cst_36 = arith.constant dense<0.000000e+00> : vector<16xf32>
    %61 = vector.multi_reduction <add>, %60, %cst_36 [1] : vector<16x32xf32> to vector<16xf32>
    %62 = vector.shape_cast %61 : vector<16xf32> to vector<16x1xf32>
    %cst_37 = arith.constant 3.200000e+01 : f32
    %63 = vector.broadcast %cst_37 : f32 to vector<16x1xf32>
    %64 = arith.divf %62, %63 : vector<16x1xf32>
    %65 = vector.broadcast %55 : vector<16x1xf32> to vector<16x32xf32>
    %66 = arith.subf %51, %65 : vector<16x32xf32>
    %cst_38 = arith.constant 9.99999974E-6 : f32
    %67 = vector.broadcast %cst_38 : f32 to vector<16x1xf32>
    %68 = arith.addf %64, %67 : vector<16x1xf32>
    %69 = math.rsqrt %68 : vector<16x1xf32>
    %70 = vector.broadcast %69 : vector<16x1xf32> to vector<16x32xf32>
    %71 = arith.mulf %66, %70 : vector<16x32xf32>
    %72 = vector.broadcast %17 : vector<1x32xf32> to vector<16x32xf32>
    %73 = arith.mulf %71, %72 : vector<16x32xf32>
    %74 = vector.broadcast %18 : vector<1x32xf32> to vector<16x32xf32>
    %75 = arith.addf %73, %74 : vector<16x32xf32>
    %cst_39 = arith.constant dense<0.000000e+00> : vector<16x64xf32>
    %76 = tpu.matmul %75, %19, %cst_39 {dimension_numbers = #tpu.dot_dimension_numbers<[1], [0], [0], [1], [0, 0, 1, 1], [], []>} : vector<16x32xf32>, vector<32x64xf32>, vector<16x64xf32> -> vector<16x64xf32>
    %77 = vector.broadcast %20 : vector<1x64xf32> to vector<16x64xf32>
    %78 = arith.addf %76, %77 : vector<16x64xf32>
    %cst_40 = arith.constant 0.000000e+00 : f32
    %79 = vector.broadcast %cst_40 : f32 to vector<16x64xf32>
    %80 = arith.maximumf %78, %79 : vector<16x64xf32>
    %cst_41 = arith.constant dense<0.000000e+00> : vector<16x32xf32>
    %81 = tpu.matmul %80, %21, %cst_41 {dimension_numbers = #tpu.dot_dimension_numbers<[1], [0], [0], [1], [0, 0, 1, 1], [], []>} : vector<16x64xf32>, vector<64x32xf32>, vector<16x32xf32> -> vector<16x32xf32>
    %82 = vector.broadcast %22 : vector<1x32xf32> to vector<16x32xf32>
    %83 = arith.addf %81, %82 : vector<16x32xf32>
    %84 = arith.addf %75, %83 : vector<16x32xf32>
    %cst_42 = arith.constant dense<0.000000e+00> : vector<16xf32>
    %85 = vector.multi_reduction <add>, %84, %cst_42 [1] : vector<16x32xf32> to vector<16xf32>
    %86 = vector.shape_cast %85 : vector<16xf32> to vector<16x1xf32>
    %cst_43 = arith.constant 3.200000e+01 : f32
    %87 = vector.broadcast %cst_43 : f32 to vector<16x1xf32>
    %88 = arith.divf %86, %87 : vector<16x1xf32>
    %89 = vector.broadcast %88 : vector<16x1xf32> to vector<16x32xf32>
    %90 = arith.subf %84, %89 : vector<16x32xf32>
    %91 = vector.broadcast %88 : vector<16x1xf32> to vector<16x32xf32>
    %92 = arith.subf %84, %91 : vector<16x32xf32>
    %93 = arith.mulf %90, %92 : vector<16x32xf32>
    %cst_44 = arith.constant dense<0.000000e+00> : vector<16xf32>
    %94 = vector.multi_reduction <add>, %93, %cst_44 [1] : vector<16x32xf32> to vector<16xf32>
    %95 = vector.shape_cast %94 : vector<16xf32> to vector<16x1xf32>
    %cst_45 = arith.constant 3.200000e+01 : f32
    %96 = vector.broadcast %cst_45 : f32 to vector<16x1xf32>
    %97 = arith.divf %95, %96 : vector<16x1xf32>
    %98 = vector.broadcast %88 : vector<16x1xf32> to vector<16x32xf32>
    %99 = arith.subf %84, %98 : vector<16x32xf32>
    %cst_46 = arith.constant 9.99999974E-6 : f32
    %100 = vector.broadcast %cst_46 : f32 to vector<16x1xf32>
    %101 = arith.addf %97, %100 : vector<16x1xf32>
    %102 = math.rsqrt %101 : vector<16x1xf32>
    %103 = vector.broadcast %102 : vector<16x1xf32> to vector<16x32xf32>
    %104 = arith.mulf %99, %103 : vector<16x32xf32>
    %105 = vector.broadcast %23 : vector<1x32xf32> to vector<16x32xf32>
    %106 = arith.mulf %104, %105 : vector<16x32xf32>
    %107 = vector.broadcast %24 : vector<1x32xf32> to vector<16x32xf32>
    %108 = arith.addf %106, %107 : vector<16x32xf32>
    %109 = vector.shape_cast %108 : vector<16x32xf32> to vector<2x8x32xf32>
    %cst_47 = arith.constant dense<0xFF800000> : vector<2x32xf32>
    %110 = vector.multi_reduction <maximumf>, %109, %cst_47 [1] : vector<2x8x32xf32> to vector<2x32xf32>
    %c0_48 = arith.constant 0 : index
    %c0_49 = arith.constant 0 : index
    %111 = vector.load %arg13[%c0_48, %c0_49] : memref<32x128xf32, #tpu.memory_space<vmem>>, vector<32x128xf32>
    %c0_50 = arith.constant 0 : index
    %c0_51 = arith.constant 0 : index
    %112 = vector.load %arg14[%c0_50, %c0_51] : memref<1x32xf32, #tpu.memory_space<vmem>>, vector<1x32xf32>
    %c0_52 = arith.constant 0 : index
    %c0_53 = arith.constant 0 : index
    %113 = vector.load %arg15[%c0_52, %c0_53] : memref<1x32xf32, #tpu.memory_space<vmem>>, vector<1x32xf32>
    %c0_54 = arith.constant 0 : index
    %c0_55 = arith.constant 0 : index
    %114 = vector.load %arg16[%c0_54, %c0_55] : memref<32x64xf32, #tpu.memory_space<vmem>>, vector<32x64xf32>
    %c0_56 = arith.constant 0 : index
    %c0_57 = arith.constant 0 : index
    %115 = vector.load %arg17[%c0_56, %c0_57] : memref<1x64xf32, #tpu.memory_space<vmem>>, vector<1x64xf32>
    %c0_58 = arith.constant 0 : index
    %c0_59 = arith.constant 0 : index
    %116 = vector.load %arg18[%c0_58, %c0_59] : memref<64x32xf32, #tpu.memory_space<vmem>>, vector<64x32xf32>
    %c0_60 = arith.constant 0 : index
    %c0_61 = arith.constant 0 : index
    %117 = vector.load %arg19[%c0_60, %c0_61] : memref<1x32xf32, #tpu.memory_space<vmem>>, vector<1x32xf32>
    %c0_62 = arith.constant 0 : index
    %c0_63 = arith.constant 0 : index
    %118 = vector.load %arg20[%c0_62, %c0_63] : memref<1x32xf32, #tpu.memory_space<vmem>>, vector<1x32xf32>
    %c0_64 = arith.constant 0 : index
    %c0_65 = arith.constant 0 : index
    %119 = vector.load %arg21[%c0_64, %c0_65] : memref<1x32xf32, #tpu.memory_space<vmem>>, vector<1x32xf32>
    %cst_66 = arith.constant dense<0.000000e+00> : vector<32x128xf32>
    %120 = tpu.matmul %15, %111, %cst_66 {dimension_numbers = #tpu.dot_dimension_numbers<[1], [0], [0], [1], [0, 0, 1, 1], [], []>} : vector<32x32xf32>, vector<32x128xf32>, vector<32x128xf32> -> vector<32x128xf32>
    %121 = vector.extract_strided_slice %120 {offsets = [0, 0], sizes = [32, 32], strides = [1, 1]} : vector<32x128xf32> to vector<32x32xf32>
    %122 = vector.shape_cast %121 : vector<32x32xf32> to vector<2x16x32xf32>
    %123 = vector.extract_strided_slice %120 {offsets = [0, 32], sizes = [32, 32], strides = [1, 1]} : vector<32x128xf32> to vector<32x32xf32>
    %124 = vector.shape_cast %123 : vector<32x32xf32> to vector<2x16x32xf32>
    %125 = vector.extract_strided_slice %120 {offsets = [0, 64], sizes = [32, 32], strides = [1, 1]} : vector<32x128xf32> to vector<32x32xf32>
    %126 = vector.shape_cast %125 : vector<32x32xf32> to vector<2x16x32xf32>
    %127 = vector.extract_strided_slice %111 {offsets = [0, 96], sizes = [32, 32], strides = [1, 1]} : vector<32x128xf32> to vector<32x32xf32>
    %cst_67 = arith.constant 3.200000e+01 : f32
    %128 = math.sqrt %cst_67 : f32
    %cst_68 = arith.constant 1.000000e+00 : f32
    %129 = arith.divf %cst_68, %128 : f32
    "tpu.trace_start"() <{level = 10 : i32, message = "bqd,bkd->bqk"}> : () -> ()
    %cst_69 = arith.constant dense<0.000000e+00> : vector<2x16x16xf32>
    %130 = tpu.matmul %122, %124, %cst_69 {dimension_numbers = #tpu.dot_dimension_numbers<[2], [2], [1], [1], [0, 0, 0, 1, 1, 1], [0], [0]>} : vector<2x16x32xf32>, vector<2x16x32xf32>, vector<2x16x16xf32> -> vector<2x16x16xf32>
    "tpu.trace_stop"() : () -> ()
    %131 = vector.broadcast %129 : f32 to vector<2x16x16xf32>
    %132 = arith.mulf %130, %131 : vector<2x16x16xf32>
    %cst_70 = arith.constant dense<0xFF800000> : vector<2x16xf32>
    %133 = vector.multi_reduction <maximumf>, %132, %cst_70 [2] : vector<2x16x16xf32> to vector<2x16xf32>
    %134 = vector.shape_cast %133 : vector<2x16xf32> to vector<2x16x1xf32>
    %135 = vector.broadcast %134 : vector<2x16x1xf32> to vector<2x16x16xf32>
    %136 = arith.subf %132, %135 : vector<2x16x16xf32>
    %137 = math.exp %136 : vector<2x16x16xf32>
    %cst_71 = arith.constant dense<0.000000e+00> : vector<2x16xf32>
    %138 = vector.multi_reduction <add>, %137, %cst_71 [2] : vector<2x16x16xf32> to vector<2x16xf32>
    %139 = vector.shape_cast %138 : vector<2x16xf32> to vector<2x16x1xf32>
    %140 = tpu.reciprocal %139 {approx = true} : vector<2x16x1xf32> -> vector<2x16x1xf32>
    %141 = vector.broadcast %140 : vector<2x16x1xf32> to vector<2x16x16xf32>
    %142 = arith.mulf %137, %141 : vector<2x16x16xf32>
    "tpu.trace_start"() <{level = 10 : i32, message = "bqk,bkd->bqd"}> : () -> ()
    %cst_72 = arith.constant dense<0.000000e+00> : vector<2x16x32xf32>
    %143 = tpu.matmul %142, %126, %cst_72 {dimension_numbers = #tpu.dot_dimension_numbers<[2], [1], [1], [2], [0, 0, 0, 1, 1, 2], [0], [0]>} : vector<2x16x16xf32>, vector<2x16x32xf32>, vector<2x16x32xf32> -> vector<2x16x32xf32>
    "tpu.trace_stop"() : () -> ()
    %144 = vector.shape_cast %143 : vector<2x16x32xf32> to vector<32x32xf32>
    %cst_73 = arith.constant dense<0.000000e+00> : vector<32x32xf32>
    %145 = tpu.matmul %144, %127, %cst_73 {dimension_numbers = #tpu.dot_dimension_numbers<[1], [0], [0], [1], [0, 0, 1, 1], [], []>} : vector<32x32xf32>, vector<32x32xf32>, vector<32x32xf32> -> vector<32x32xf32>
    %146 = arith.addf %15, %145 : vector<32x32xf32>
    %cst_74 = arith.constant dense<0.000000e+00> : vector<32xf32>
    %147 = vector.multi_reduction <add>, %146, %cst_74 [1] : vector<32x32xf32> to vector<32xf32>
    %148 = vector.shape_cast %147 : vector<32xf32> to vector<32x1xf32>
    %cst_75 = arith.constant 3.200000e+01 : f32
    %149 = vector.broadcast %cst_75 : f32 to vector<32x1xf32>
    %150 = arith.divf %148, %149 : vector<32x1xf32>
    %151 = vector.broadcast %150 : vector<32x1xf32> to vector<32x32xf32>
    %152 = arith.subf %146, %151 : vector<32x32xf32>
    %153 = vector.broadcast %150 : vector<32x1xf32> to vector<32x32xf32>
    %154 = arith.subf %146, %153 : vector<32x32xf32>
    %155 = arith.mulf %152, %154 : vector<32x32xf32>
    %cst_76 = arith.constant dense<0.000000e+00> : vector<32xf32>
    %156 = vector.multi_reduction <add>, %155, %cst_76 [1] : vector<32x32xf32> to vector<32xf32>
    %157 = vector.shape_cast %156 : vector<32xf32> to vector<32x1xf32>
    %cst_77 = arith.constant 3.200000e+01 : f32
    %158 = vector.broadcast %cst_77 : f32 to vector<32x1xf32>
    %159 = arith.divf %157, %158 : vector<32x1xf32>
    %160 = vector.broadcast %150 : vector<32x1xf32> to vector<32x32xf32>
    %161 = arith.subf %146, %160 : vector<32x32xf32>
    %cst_78 = arith.constant 9.99999974E-6 : f32
    %162 = vector.broadcast %cst_78 : f32 to vector<32x1xf32>
    %163 = arith.addf %159, %162 : vector<32x1xf32>
    %164 = math.rsqrt %163 : vector<32x1xf32>
    %165 = vector.broadcast %164 : vector<32x1xf32> to vector<32x32xf32>
    %166 = arith.mulf %161, %165 : vector<32x32xf32>
    %167 = vector.broadcast %112 : vector<1x32xf32> to vector<32x32xf32>
    %168 = arith.mulf %166, %167 : vector<32x32xf32>
    %169 = vector.broadcast %113 : vector<1x32xf32> to vector<32x32xf32>
    %170 = arith.addf %168, %169 : vector<32x32xf32>
    %cst_79 = arith.constant dense<0.000000e+00> : vector<32x64xf32>
    %171 = tpu.matmul %170, %114, %cst_79 {dimension_numbers = #tpu.dot_dimension_numbers<[1], [0], [0], [1], [0, 0, 1, 1], [], []>} : vector<32x32xf32>, vector<32x64xf32>, vector<32x64xf32> -> vector<32x64xf32>
    %172 = vector.broadcast %115 : vector<1x64xf32> to vector<32x64xf32>
    %173 = arith.addf %171, %172 : vector<32x64xf32>
    %cst_80 = arith.constant 0.000000e+00 : f32
    %174 = vector.broadcast %cst_80 : f32 to vector<32x64xf32>
    %175 = arith.maximumf %173, %174 : vector<32x64xf32>
    %cst_81 = arith.constant dense<0.000000e+00> : vector<32x32xf32>
    %176 = tpu.matmul %175, %116, %cst_81 {dimension_numbers = #tpu.dot_dimension_numbers<[1], [0], [0], [1], [0, 0, 1, 1], [], []>} : vector<32x64xf32>, vector<64x32xf32>, vector<32x32xf32> -> vector<32x32xf32>
    %177 = vector.broadcast %117 : vector<1x32xf32> to vector<32x32xf32>
    %178 = arith.addf %176, %177 : vector<32x32xf32>
    %179 = arith.addf %170, %178 : vector<32x32xf32>
    %cst_82 = arith.constant dense<0.000000e+00> : vector<32xf32>
    %180 = vector.multi_reduction <add>, %179, %cst_82 [1] : vector<32x32xf32> to vector<32xf32>
    %181 = vector.shape_cast %180 : vector<32xf32> to vector<32x1xf32>
    %cst_83 = arith.constant 3.200000e+01 : f32
    %182 = vector.broadcast %cst_83 : f32 to vector<32x1xf32>
    %183 = arith.divf %181, %182 : vector<32x1xf32>
    %184 = vector.broadcast %183 : vector<32x1xf32> to vector<32x32xf32>
    %185 = arith.subf %179, %184 : vector<32x32xf32>
    %186 = vector.broadcast %183 : vector<32x1xf32> to vector<32x32xf32>
    %187 = arith.subf %179, %186 : vector<32x32xf32>
    %188 = arith.mulf %185, %187 : vector<32x32xf32>
    %cst_84 = arith.constant dense<0.000000e+00> : vector<32xf32>
    %189 = vector.multi_reduction <add>, %188, %cst_84 [1] : vector<32x32xf32> to vector<32xf32>
    %190 = vector.shape_cast %189 : vector<32xf32> to vector<32x1xf32>
    %cst_85 = arith.constant 3.200000e+01 : f32
    %191 = vector.broadcast %cst_85 : f32 to vector<32x1xf32>
    %192 = arith.divf %190, %191 : vector<32x1xf32>
    %193 = vector.broadcast %183 : vector<32x1xf32> to vector<32x32xf32>
    %194 = arith.subf %179, %193 : vector<32x32xf32>
    %cst_86 = arith.constant 9.99999974E-6 : f32
    %195 = vector.broadcast %cst_86 : f32 to vector<32x1xf32>
    %196 = arith.addf %192, %195 : vector<32x1xf32>
    %197 = math.rsqrt %196 : vector<32x1xf32>
    %198 = vector.broadcast %197 : vector<32x1xf32> to vector<32x32xf32>
    %199 = arith.mulf %194, %198 : vector<32x32xf32>
    %200 = vector.broadcast %118 : vector<1x32xf32> to vector<32x32xf32>
    %201 = arith.mulf %199, %200 : vector<32x32xf32>
    %202 = vector.broadcast %119 : vector<1x32xf32> to vector<32x32xf32>
    %203 = arith.addf %201, %202 : vector<32x32xf32>
    %204 = vector.shape_cast %203 : vector<32x32xf32> to vector<2x16x32xf32>
    %cst_87 = arith.constant dense<0xFF800000> : vector<2x32xf32>
    %205 = vector.multi_reduction <maximumf>, %204, %cst_87 [1] : vector<2x16x32xf32> to vector<2x32xf32>
    %c0_88 = arith.constant 0 : index
    %c0_89 = arith.constant 0 : index
    %206 = vector.load %arg22[%c0_88, %c0_89] : memref<32x512xf32, #tpu.memory_space<vmem>>, vector<32x512xf32>
    %cst_90 = arith.constant dense<0.000000e+00> : vector<2x512xf32>
    %207 = tpu.matmul %110, %206, %cst_90 {dimension_numbers = #tpu.dot_dimension_numbers<[1], [0], [0], [1], [0, 0, 1, 1], [], []>} : vector<2x32xf32>, vector<32x512xf32>, vector<2x512xf32> -> vector<2x512xf32>
    %c0_91 = arith.constant 0 : index
    %c0_92 = arith.constant 0 : index
    %208 = vector.load %arg23[%c0_91, %c0_92] : memref<32x512xf32, #tpu.memory_space<vmem>>, vector<32x512xf32>
    %cst_93 = arith.constant dense<0.000000e+00> : vector<2x512xf32>
    %209 = tpu.matmul %205, %208, %cst_93 {dimension_numbers = #tpu.dot_dimension_numbers<[1], [0], [0], [1], [0, 0, 1, 1], [], []>} : vector<2x32xf32>, vector<32x512xf32>, vector<2x512xf32> -> vector<2x512xf32>
    %210 = arith.addf %207, %209 : vector<2x512xf32>
    %c0_94 = arith.constant 0 : index
    %c0_95 = arith.constant 0 : index
    %211 = vector.load %arg24[%c0_94, %c0_95] : memref<1x512xf32, #tpu.memory_space<vmem>>, vector<1x512xf32>
    %212 = vector.broadcast %211 : vector<1x512xf32> to vector<2x512xf32>
    %213 = arith.addf %210, %212 : vector<2x512xf32>
    %cst_96 = arith.constant 0.000000e+00 : f32
    %214 = vector.broadcast %cst_96 : f32 to vector<2x512xf32>
    %215 = arith.maximumf %213, %214 : vector<2x512xf32>
    %c0_97 = arith.constant 0 : index
    %c0_98 = arith.constant 0 : index
    %216 = vector.load %arg25[%c0_97, %c0_98] : memref<512x2xf32, #tpu.memory_space<vmem>>, vector<512x2xf32>
    %cst_99 = arith.constant dense<0.000000e+00> : vector<2x2xf32>
    %217 = tpu.matmul %215, %216, %cst_99 {dimension_numbers = #tpu.dot_dimension_numbers<[1], [0], [0], [1], [0, 0, 1, 1], [], []>} : vector<2x512xf32>, vector<512x2xf32>, vector<2x2xf32> -> vector<2x2xf32>
    %c0_100 = arith.constant 0 : index
    %c0_101 = arith.constant 0 : index
    %218 = vector.load %arg26[%c0_100, %c0_101] : memref<1x2xf32, #tpu.memory_space<vmem>>, vector<1x2xf32>
    %219 = vector.broadcast %218 : vector<1x2xf32> to vector<2x2xf32>
    %220 = arith.addf %217, %219 : vector<2x2xf32>
    %c0_102 = arith.constant 0 : index
    %c0_103 = arith.constant 0 : index
    %221 = vector.load %arg27[%c0_102, %c0_103] : memref<2x2xf32, #tpu.memory_space<vmem>>, vector<2x2xf32>
    tpu.vector_store %arg27[%c0_102, %c0_103], %220 {strides = array<i32>} : memref<2x2xf32, #tpu.memory_space<vmem>>, vector<2x2xf32>,
    return
  }
}

</mosaic_0001>

<llo_original>
// kernel: trans_forward.1
$region0: #{trans_forward.1}
  #allocation0 [shape = 'u32[]', space=smem, size = 0x4, offset = 0x4, fixed_abs, tag = 'smem constant byte address 0x4 - core index']
  #allocation1 [shape = 'u32[144,128]{1,0:T(1,128)}', space=vmem, size = 0x12000, scoped, tag = 'internal scratch']
  %s0 = inlined_call_operand.vmem [shape: s32[16,1], index: 0, kind: input, shape index: {}]
  %s1 = inlined_call_operand.vmem [shape: s32[32,1], index: 1, kind: input, shape index: {}]
  %s2 = inlined_call_operand.hbm [shape: f32[64,32], index: 2, kind: input, shape index: {}]
  %s3 = inlined_call_operand.hbm [shape: f32[26,32], index: 3, kind: input, shape index: {}]
  %s4 = inlined_call_operand.hbm [shape: f32[32,128], index: 4, kind: input, shape index: {}]
  %s5 = inlined_call_operand.vmem [shape: f32[1,32], index: 5, kind: input, shape index: {}, may-alias: {5,11,14,20}]
  %s6 = inlined_call_operand.vmem [shape: f32[1,32], index: 6, kind: input, shape index: {}, may-alias: {6,10,12,15,19,21}]
  %s7 = inlined_call_operand.hbm [shape: f32[32,64], index: 7, kind: input, shape index: {}]
  %s8 = inlined_call_operand.vmem [shape: f32[1,64], index: 8, kind: input, shape index: {}, may-alias: {8,17}]
  %s9 = inlined_call_operand.hbm [shape: f32[64,32], index: 9, kind: input, shape index: {}]
  %s10 = inlined_call_operand.vmem [shape: f32[1,32], index: 10, kind: input, shape index: {}, may-alias: {6,10,12,15,19,21}]
  %s11 = inlined_call_operand.vmem [shape: f32[1,32], index: 11, kind: input, shape index: {}, may-alias: {5,11,14,20}]
  %s12 = inlined_call_operand.vmem [shape: f32[1,32], index: 12, kind: input, shape index: {}, may-alias: {6,10,12,15,19,21}]
  %s13 = inlined_call_operand.hbm [shape: f32[32,128], index: 13, kind: input, shape index: {}]
  %s14 = inlined_call_operand.vmem [shape: f32[1,32], index: 14, kind: input, shape index: {}, may-alias: {5,11,14,20}]
  %s15 = inlined_call_operand.vmem [shape: f32[1,32], index: 15, kind: input, shape index: {}, may-alias: {6,10,12,15,19,21}]
  %s16 = inlined_call_operand.hbm [shape: f32[32,64], index: 16, kind: input, shape index: {}]
  %s17 = inlined_call_operand.vmem [shape: f32[1,64], index: 17, kind: input, shape index: {}, may-alias: {8,17}]
  %s18 = inlined_call_operand.vmem [shape: f32[64,32], index: 18, kind: input, shape index: {}]
  %s19 = inlined_call_operand.vmem [shape: f32[1,32], index: 19, kind: input, shape index: {}, may-alias: {6,10,12,15,19,21}]
  %s20 = inlined_call_operand.vmem [shape: f32[1,32], index: 20, kind: input, shape index: {}, may-alias: {5,11,14,20}]
  %s21 = inlined_call_operand.vmem [shape: f32[1,32], index: 21, kind: input, shape index: {}, may-alias: {6,10,12,15,19,21}]
  %s22 = inlined_call_operand.hbm [shape: f32[32,512], index: 22, kind: input, shape index: {}]
  %s23 = inlined_call_operand.hbm [shape: f32[32,512], index: 23, kind: input, shape index: {}]
  %s24 = inlined_call_operand.vmem [shape: f32[1,512], index: 24, kind: input, shape index: {}]
  %s25 = inlined_call_operand.hbm [shape: f32[512,2], index: 25, kind: input, shape index: {}]
  %s26 = inlined_call_operand.vmem [shape: f32[1,2], index: 26, kind: input, shape index: {}]
  %s27 = inlined_call_operand.hbm [shape: f32[2,2], index: 27, kind: output, shape index: {}]
  %s28 = sld [smem:[#allocation0]]
  $region158: #{trans_forward.1} parent=0
    _
  %s30 = ssub.s32 1, %s28
  %s31 = scalar_select 0, %s30, %s28
  $region1: #{trans_forward.1} parent=0
    #allocation2 [shape = 'u8[32768]{0}', space=vmem, size = 0x8000, scoped, tag = 'input window, operand 2, single buffered']
    #allocation3 [shape = 's32[1]{0}', space=sflag, size = 0x4, scoped, tag = 'scoped memory for trans_forward.1']
    #allocation4 [shape = 's32[1]{0}', space=sflag, size = 0x4, scoped, tag = 'scoped memory for trans_forward.1']
    #allocation5 [shape = 'u8[16384]{0}', space=vmem, size = 0x4000, scoped, tag = 'input window, operand 3, single buffered']
    #allocation6 [shape = 's32[1]{0}', space=sflag, size = 0x4, scoped, tag = 'scoped memory for trans_forward.1']
    #allocation7 [shape = 'u8[16384]{0}', space=vmem, size = 0x4000, scoped, tag = 'input window, operand 4, single buffered']
    #allocation8 [shape = 'u8[16384]{0}', space=vmem, size = 0x4000, scoped, tag = 'input window, operand 7, single buffered']
    #allocation9 [shape = 's32[1]{0}', space=sflag, size = 0x4, scoped, tag = 'scoped memory for trans_forward.1']
    #allocation10 [shape = 'u8[32768]{0}', space=vmem, size = 0x8000, scoped, tag = 'input window, operand 9, single buffered']
    #allocation11 [shape = 'u8[16384]{0}', space=vmem, size = 0x4000, scoped, tag = 'input window, operand 13, single buffered']
    #allocation12 [shape = 's32[1]{0}', space=sflag, size = 0x4, scoped, tag = 'scoped memory for trans_forward.1']
    #allocation13 [shape = 'u8[16384]{0}', space=vmem, size = 0x4000, scoped, tag = 'input window, operand 16, single buffered']
    #allocation14 [shape = 'u8[65536]{0}', space=vmem, size = 0x10000, scoped, tag = 'input window, operand 22, single buffered']
    #allocation15 [shape = 's32[1]{0}', space=sflag, size = 0x4, scoped, tag = 'scoped memory for trans_forward.1']
    #allocation16 [shape = 'u8[65536]{0}', space=vmem, size = 0x10000, scoped, tag = 'input window, operand 23, single buffered']
    #allocation17 [shape = 'u8[262144]{0}', space=vmem, size = 0x40000, scoped, tag = 'input window, operand 25, single buffered']
    #allocation18 [shape = 's32[1]{0}', space=sflag, size = 0x4, scoped, tag = 'scoped memory for trans_forward.1']
    #allocation19 [shape = 'u8[1024]{0}', space=vmem, size = 0x400, scoped, tag = 'output window, operand 0, single buffered']
    %32 = vsyncpa [#allocation3], 0
    %33 = vsyncpa [#allocation6], 0
    %34 = vsyncpa [#allocation9], 0
    %35 = vsyncpa [#allocation12], 0
    %36 = vsyncpa [#allocation15], 0
    %37 = vsyncpa [#allocation18], 0
    %38 = vsyncpa [#allocation4], 0
    // Predicated region
    $region2: #{trans_forward.1} parent=1 // pred_check
      _
    $region3: #{trans_forward.1} parent=1 // pred_check_branch
      %40 = sbr.rel (0) target = $region5
    $region4: #{trans_forward.1} parent=1 // pred_region
      _
    $region5: #{trans_forward.1} parent=1 // pred_fallthru
      _
    // Predicated region
    $region6: #{trans_forward.1} parent=1 // pred_check
      _
    $region7: #{trans_forward.1} parent=1 // pred_check_branch
      %42 = sbr.rel (0) target = $region9
    $region8: #{trans_forward.1} parent=1 // pred_region
      _
    $region9: #{trans_forward.1} parent=1 // pred_fallthru
      _
    // Predicated region
    $region10: #{trans_forward.1} parent=1 // pred_check
      _
    $region11: #{trans_forward.1} parent=1 // pred_check_branch
      %44 = sbr.rel (0) target = $region13
    $region12: #{trans_forward.1} parent=1 // pred_region
      %s46 = ssub.s32 1024, 1024
      %47 = vsyncadd [#allocation3], %s46
      %s48 = sshll.u32 [#allocation2], 4
      %s49 = int_to_ptr.vmem [resolvable:$true] %s48
      %54 = dma.hbm_to_vmem [thread:$0]  %s2, 1024, %s49, [#allocation3], 128, 128, 8
    $region13: #{trans_forward.1} parent=1 // pred_fallthru
      _
    // Predicated region
    $region14: #{trans_forward.1} parent=1 // pred_check
      _
    $region15: #{trans_forward.1} parent=1 // pred_check_branch
      %56 = sbr.rel (0) target = $region17
    $region16: #{trans_forward.1} parent=1 // pred_region
      %s58 = ssub.s32 512, 512
      %59 = vsyncadd [#allocation6], %s58
      %s60 = sshll.u32 [#allocation5], 4
      %s61 = int_to_ptr.vmem [resolvable:$true] %s60
      %66 = dma.hbm_to_vmem [thread:$0]  %s3, 512, %s61, [#allocation6], 128, 128, 8
    $region17: #{trans_forward.1} parent=1 // pred_fallthru
      _
    // Predicated region
    $region18: #{trans_forward.1} parent=1 // pred_check
      _
    $region19: #{trans_forward.1} parent=1 // pred_check_branch
      %68 = sbr.rel (0) target = $region21
    $region20: #{trans_forward.1} parent=1 // pred_region
      %s70 = ssub.s32 512, 512
      %71 = vsyncadd [#allocation6], %s70
      %s72 = sshll.u32 [#allocation7], 4
      %s73 = int_to_ptr.vmem [resolvable:$true] %s72
      %78 = dma.hbm_to_vmem [thread:$0]  %s4, 512, %s73, [#allocation6], 128, 128, 8
    $region21: #{trans_forward.1} parent=1 // pred_fallthru
      _
    // Predicated region
    $region22: #{trans_forward.1} parent=1 // pred_check
      _
    $region23: #{trans_forward.1} parent=1 // pred_check_branch
      %80 = sbr.rel (0) target = $region25
    $region24: #{trans_forward.1} parent=1 // pred_region
      _
    $region25: #{trans_forward.1} parent=1 // pred_fallthru
      _
    // Predicated region
    $region26: #{trans_forward.1} parent=1 // pred_check
      _
    $region27: #{trans_forward.1} parent=1 // pred_check_branch
      %82 = sbr.rel (0) target = $region29
    $region28: #{trans_forward.1} parent=1 // pred_region
      _
    $region29: #{trans_forward.1} parent=1 // pred_fallthru
      _
    // Predicated region
    $region30: #{trans_forward.1} parent=1 // pred_check
      _
    $region31: #{trans_forward.1} parent=1 // pred_check_branch
      %84 = sbr.rel (0) target = $region33
    $region32: #{trans_forward.1} parent=1 // pred_region
      %s86 = ssub.s32 512, 512
      %87 = vsyncadd [#allocation9], %s86
      %s88 = sshll.u32 [#allocation8], 4
      %s89 = int_to_ptr.vmem [resolvable:$true] %s88
      %94 = dma.hbm_to_vmem [thread:$0]  %s7, 512, %s89, [#allocation9], 128, 128, 8
    $region33: #{trans_forward.1} parent=1 // pred_fallthru
      _
    // Predicated region
    $region34: #{trans_forward.1} parent=1 // pred_check
      _
    $region35: #{trans_forward.1} parent=1 // pred_check_branch
      %96 = sbr.rel (0) target = $region37
    $region36: #{trans_forward.1} parent=1 // pred_region
      _
    $region37: #{trans_forward.1} parent=1 // pred_fallthru
      _
    // Predicated region
    $region38: #{trans_forward.1} parent=1 // pred_check
      _
    $region39: #{trans_forward.1} parent=1 // pred_check_branch
      %98 = sbr.rel (0) target = $region41
    $region40: #{trans_forward.1} parent=1 // pred_region
      %s100 = ssub.s32 1024, 1024
      %101 = vsyncadd [#allocation9], %s100
      %s102 = sshll.u32 [#allocation10], 4
      %s103 = int_to_ptr.vmem [resolvable:$true] %s102
      %108 = dma.hbm_to_vmem [thread:$0]  %s9, 1024, %s103, [#allocation9], 128, 128, 8
    $region41: #{trans_forward.1} parent=1 // pred_fallthru
      _
    // Predicated region
    $region42: #{trans_forward.1} parent=1 // pred_check
      _
    $region43: #{trans_forward.1} parent=1 // pred_check_branch
      %110 = sbr.rel (0) target = $region45
    $region44: #{trans_forward.1} parent=1 // pred_region
      _
    $region45: #{trans_forward.1} parent=1 // pred_fallthru
      _
    // Predicated region
    $region46: #{trans_forward.1} parent=1 // pred_check
      _
    $region47: #{trans_forward.1} parent=1 // pred_check_branch
      %112 = sbr.rel (0) target = $region49
    $region48: #{trans_forward.1} parent=1 // pred_region
      _
    $region49: #{trans_forward.1} parent=1 // pred_fallthru
      _
    // Predicated region
    $region50: #{trans_forward.1} parent=1 // pred_check
      _
    $region51: #{trans_forward.1} parent=1 // pred_check_branch
      %114 = sbr.rel (0) target = $region53
    $region52: #{trans_forward.1} parent=1 // pred_region
      _
    $region53: #{trans_forward.1} parent=1 // pred_fallthru
      _
    // Predicated region
    $region54: #{trans_forward.1} parent=1 // pred_check
      _
    $region55: #{trans_forward.1} parent=1 // pred_check_branch
      %116 = sbr.rel (0) target = $region57
    $region56: #{trans_forward.1} parent=1 // pred_region
      %s118 = ssub.s32 512, 512
      %119 = vsyncadd [#allocation12], %s118
      %s120 = sshll.u32 [#allocation11], 4
      %s121 = int_to_ptr.vmem [resolvable:$true] %s120
      %126 = dma.hbm_to_vmem [thread:$0]  %s13, 512, %s121, [#allocation12], 128, 128, 8
    $region57: #{trans_forward.1} parent=1 // pred_fallthru
      _
    // Predicated region
    $region58: #{trans_forward.1} parent=1 // pred_check
      _
    $region59: #{trans_forward.1} parent=1 // pred_check_branch
      %128 = sbr.rel (0) target = $region61
    $region60: #{trans_forward.1} parent=1 // pred_region
      _
    $region61: #{trans_forward.1} parent=1 // pred_fallthru
      _
    // Predicated region
    $region62: #{trans_forward.1} parent=1 // pred_check
      _
    $region63: #{trans_forward.1} parent=1 // pred_check_branch
      %130 = sbr.rel (0) target = $region65
    $region64: #{trans_forward.1} parent=1 // pred_region
      _
    $region65: #{trans_forward.1} parent=1 // pred_fallthru
      _
    // Predicated region
    $region66: #{trans_forward.1} parent=1 // pred_check
      _
    $region67: #{trans_forward.1} parent=1 // pred_check_branch
      %132 = sbr.rel (0) target = $region69
    $region68: #{trans_forward.1} parent=1 // pred_region
      %s134 = ssub.s32 512, 512
      %135 = vsyncadd [#allocation12], %s134
      %s136 = sshll.u32 [#allocation13], 4
      %s137 = int_to_ptr.vmem [resolvable:$true] %s136
      %142 = dma.hbm_to_vmem [thread:$0]  %s16, 512, %s137, [#allocation12], 128, 128, 8
    $region69: #{trans_forward.1} parent=1 // pred_fallthru
      _
    // Predicated region
    $region70: #{trans_forward.1} parent=1 // pred_check
      _
    $region71: #{trans_forward.1} parent=1 // pred_check_branch
      %144 = sbr.rel (0) target = $region73
    $region72: #{trans_forward.1} parent=1 // pred_region
      _
    $region73: #{trans_forward.1} parent=1 // pred_fallthru
      _
    // Predicated region
    $region74: #{trans_forward.1} parent=1 // pred_check
      _
    $region75: #{trans_forward.1} parent=1 // pred_check_branch
      %146 = sbr.rel (0) target = $region77
    $region76: #{trans_forward.1} parent=1 // pred_region
      _
    $region77: #{trans_forward.1} parent=1 // pred_fallthru
      _
    // Predicated region
    $region78: #{trans_forward.1} parent=1 // pred_check
      _
    $region79: #{trans_forward.1} parent=1 // pred_check_branch
      %148 = sbr.rel (0) target = $region81
    $region80: #{trans_forward.1} parent=1 // pred_region
      _
    $region81: #{trans_forward.1} parent=1 // pred_fallthru
      _
    // Predicated region
    $region82: #{trans_forward.1} parent=1 // pred_check
      _
    $region83: #{trans_forward.1} parent=1 // pred_check_branch
      %150 = sbr.rel (0) target = $region85
    $region84: #{trans_forward.1} parent=1 // pred_region
      _
    $region85: #{trans_forward.1} parent=1 // pred_fallthru
      _
    // Predicated region
    $region86: #{trans_forward.1} parent=1 // pred_check
      _
    $region87: #{trans_forward.1} parent=1 // pred_check_branch
      %152 = sbr.rel (0) target = $region89
    $region88: #{trans_forward.1} parent=1 // pred_region
      _
    $region89: #{trans_forward.1} parent=1 // pred_fallthru
      _
    // Predicated region
    $region90: #{trans_forward.1} parent=1 // pred_check
      _
    $region91: #{trans_forward.1} parent=1 // pred_check_branch
      %154 = sbr.rel (0) target = $region93
    $region92: #{trans_forward.1} parent=1 // pred_region
      %s156 = ssub.s32 2048, 2048
      %157 = vsyncadd [#allocation15], %s156
      %s158 = sshll.u32 [#allocation14], 4
      %s159 = int_to_ptr.vmem [resolvable:$true] %s158
      %164 = dma.hbm_to_vmem [thread:$0]  %s22, 2048, %s159, [#allocation15], 512, 512, 32
    $region93: #{trans_forward.1} parent=1 // pred_fallthru
      _
    // Predicated region
    $region94: #{trans_forward.1} parent=1 // pred_check
      _
    $region95: #{trans_forward.1} parent=1 // pred_check_branch
      %166 = sbr.rel (0) target = $region97
    $region96: #{trans_forward.1} parent=1 // pred_region
      %s168 = ssub.s32 2048, 2048
      %169 = vsyncadd [#allocation15], %s168
      %s170 = sshll.u32 [#allocation16], 4
      %s171 = int_to_ptr.vmem [resolvable:$true] %s170
      %176 = dma.hbm_to_vmem [thread:$0]  %s23, 2048, %s171, [#allocation15], 512, 512, 32
    $region97: #{trans_forward.1} parent=1 // pred_fallthru
      _
    // Predicated region
    $region98: #{trans_forward.1} parent=1 // pred_check
      _
    $region99: #{trans_forward.1} parent=1 // pred_check_branch
      %178 = sbr.rel (0) target = $region101
    $region100: #{trans_forward.1} parent=1 // pred_region
      _
    $region101: #{trans_forward.1} parent=1 // pred_fallthru
      _
    // Predicated region
    $region102: #{trans_forward.1} parent=1 // pred_check
      _
    $region103: #{trans_forward.1} parent=1 // pred_check_branch
      %180 = sbr.rel (0) target = $region105
    $region104: #{trans_forward.1} parent=1 // pred_region
      %s182 = ssub.s32 8192, 8192
      %183 = vsyncadd [#allocation18], %s182
      %s184 = sshll.u32 [#allocation17], 4
      %s185 = int_to_ptr.vmem [resolvable:$true] %s184
      %190 = dma.hbm_to_vmem [thread:$0]  %s25, 8192, %s185, [#allocation18], 128, 128, 8
    $region105: #{trans_forward.1} parent=1 // pred_fallthru
      _
    // Predicated region
    $region106: #{trans_forward.1} parent=1 // pred_check
      _
    $region107: #{trans_forward.1} parent=1 // pred_check_branch
      %192 = sbr.rel (0) target = $region109
    $region108: #{trans_forward.1} parent=1 // pred_region
      _
    $region109: #{trans_forward.1} parent=1 // pred_fallthru
      _
    // Predicated region
    $region110: #{trans_forward.1} parent=1 // pred_check
      _
    $region111: #{trans_forward.1} parent=1 // pred_check_branch
      %194 = sbr.rel (0) target = $region113
    $region112: #{trans_forward.1} parent=1 // pred_region
      %195 = dma.done [#allocation3], 1024
    $region113: #{trans_forward.1} parent=1 // pred_fallthru
      _
    // Predicated region
    $region114: #{trans_forward.1} parent=1 // pred_check
      _
    $region115: #{trans_forward.1} parent=1 // pred_check_branch
      %197 = sbr.rel (0) target = $region117
    $region116: #{trans_forward.1} parent=1 // pred_region
      %198 = dma.done [#allocation6], 512
    $region117: #{trans_forward.1} parent=1 // pred_fallthru
      _
    // Predicated region
    $region118: #{trans_forward.1} parent=1 // pred_check
      _
    $region119: #{trans_forward.1} parent=1 // pred_check_branch
      %200 = sbr.rel (0) target = $region121
    $region120: #{trans_forward.1} parent=1 // pred_region
      %201 = dma.done [#allocation6], 512
    $region121: #{trans_forward.1} parent=1 // pred_fallthru
      _
    // Predicated region
    $region122: #{trans_forward.1} parent=1 // pred_check
      _
    $region123: #{trans_forward.1} parent=1 // pred_check_branch
      %203 = sbr.rel (0) target = $region125
    $region124: #{trans_forward.1} parent=1 // pred_region
      %204 = dma.done [#allocation9], 512
    $region125: #{trans_forward.1} parent=1 // pred_fallthru
      _
    // Predicated region
    $region126: #{trans_forward.1} parent=1 // pred_check
      _
    $region127: #{trans_forward.1} parent=1 // pred_check_branch
      %206 = sbr.rel (0) target = $region129
    $region128: #{trans_forward.1} parent=1 // pred_region
      %207 = dma.done [#allocation9], 1024
    $region129: #{trans_forward.1} parent=1 // pred_fallthru
      _
    // Predicated region
    $region130: #{trans_forward.1} parent=1 // pred_check
      _
    $region131: #{trans_forward.1} parent=1 // pred_check_branch
      %209 = sbr.rel (0) target = $region133
    $region132: #{trans_forward.1} parent=1 // pred_region
      %210 = dma.done [#allocation12], 512
    $region133: #{trans_forward.1} parent=1 // pred_fallthru
      _
    // Predicated region
    $region134: #{trans_forward.1} parent=1 // pred_check
      _
    $region135: #{trans_forward.1} parent=1 // pred_check_branch
      %212 = sbr.rel (0) target = $region137
    $region136: #{trans_forward.1} parent=1 // pred_region
      %213 = dma.done [#allocation12], 512
    $region137: #{trans_forward.1} parent=1 // pred_fallthru
      _
    // Predicated region
    $region138: #{trans_forward.1} parent=1 // pred_check
      _
    $region139: #{trans_forward.1} parent=1 // pred_check_branch
      %215 = sbr.rel (0) target = $region141
    $region140: #{trans_forward.1} parent=1 // pred_region
      %216 = dma.done [#allocation15], 2048
    $region141: #{trans_forward.1} parent=1 // pred_fallthru
      _
    // Predicated region
    $region142: #{trans_forward.1} parent=1 // pred_check
      _
    $region143: #{trans_forward.1} parent=1 // pred_check_branch
      %218 = sbr.rel (0) target = $region145
    $region144: #{trans_forward.1} parent=1 // pred_region
      %219 = dma.done [#allocation15], 2048
    $region145: #{trans_forward.1} parent=1 // pred_fallthru
      _
    // Predicated region
    $region146: #{trans_forward.1} parent=1 // pred_check
      _
    $region147: #{trans_forward.1} parent=1 // pred_check_branch
      %221 = sbr.rel (0) target = $region149
    $region148: #{trans_forward.1} parent=1 // pred_region
      %222 = dma.done [#allocation18], 8192
    $region149: #{trans_forward.1} parent=1 // pred_fallthru
      _
    %v223 = vld [vmem:[%s0] sm:$0xff]
    %v224 = vld [vmem:[%s0 + $0x8] sm:$0xff]
    %v225 = vld [vmem:[#allocation2] sm:$0xff]
    %v226 = vld [vmem:[#allocation2 + $0x8] sm:$0xff]
    %v227 = vld [vmem:[#allocation2 + $0x10] sm:$0xff]
    %v228 = vld [vmem:[#allocation2 + $0x18] sm:$0xff]
    %v229 = vld [vmem:[#allocation2 + $0x20] sm:$0xff]
    %v230 = vld [vmem:[#allocation2 + $0x28] sm:$0xff]
    %v231 = vld [vmem:[#allocation2 + $0x30] sm:$0xff]
    %v232 = vld [vmem:[#allocation2 + $0x38] sm:$0xff]
    %v233 = vlaneseq
    %v234 = vand.u32 %v233, 127
    %235 = vset.pattern.permute.xlu0 0
    %236 = vperm.xlu0 %235, %v223
    %v237 = vpop.permute.xlu0 %236
    %238 = vset.pattern.permute.xlu0 0
    %239 = vperm.xlu0 %238, %v224
    %v240 = vpop.permute.xlu0 %239
    %vm241 = vcmp.eq.s32.totalorder %v237, %v234
    %vm242 = vcmp.eq.s32.totalorder %v240, %v234
    %v243 = vsel %vm241, 1, 0
    %v244 = vsel %vm242, 1, 0
    %v245 = vcvt.s32.f32 %v243
    %v246 = vcvt.s32.f32 %v244
    %vm247 = vcmask 523264
    %v249 = vsel %vm247, %v245, 0
    %v252 = vsel %vm247, %v246, 0
    %254 = vmatprep.subr.mxu0 0.0
    %255 = vmatpush1.msra.mxu0 0.0
    %256 = vmatprep.subr.mxu0 0.0
    %257 = vmatpush1.msra.mxu0 0.0
    %258 = vmatprep.subr.mxu0 0.0
    %259 = vmatpush1.msra.mxu0 0.0
    %260 = vmatprep.subr.mxu0 0.0
    %261 = vmatpush1.msra.mxu0 0.0
    %262 = vmatprep.subr.mxu0 0.0
    %263 = vmatpush1.msra.mxu0 0.0
    %264 = vmatprep.subr.mxu0 0.0
    %265 = vmatpush1.msra.mxu0 0.0
    %266 = vmatprep.subr.mxu0 0.0
    %267 = vmatpush1.msra.mxu0 0.0
    %268 = vmatprep.subr.mxu0 0.0
    %269 = vmatpush1.msra.mxu0 0.0
    %270 = vmatprep.subr.mxu0 0.0
    %271 = vmatpush1.msra.mxu0 %v232
    %272 = vmatprep.subr.mxu0 0.0
    %273 = vmatpush1.msra.mxu0 %v231
    %274 = vmatprep.subr.mxu0 0.0
    %275 = vmatpush1.msra.mxu0 %v230
    %276 = vmatprep.subr.mxu0 0.0
    %277 = vmatpush1.msra.mxu0 %v229
    %278 = vmatprep.subr.mxu0 0.0
    %279 = vmatpush1.msra.mxu0 %v228
    %280 = vmatprep.subr.mxu0 0.0
    %281 = vmatpush1.msra.mxu0 %v227
    %282 = vmatprep.subr.mxu0 0.0
    %283 = vmatpush1.msra.mxu0 %v226
    %284 = vmatprep.subr.mxu0 0.0
    %285 = vmatpush1.msra.mxu0 %v225
    %286 = vmatprep.subr.mxu0 0.0
    %287 = vmatpush2.msra.mxu0 0.0
    %288 = vmatprep.subr.mxu0 0.0
    %289 = vmatpush2.msra.mxu0 0.0
    %290 = vmatprep.subr.mxu0 0.0
    %291 = vmatpush2.msra.mxu0 0.0
    %292 = vmatprep.subr.mxu0 0.0
    %293 = vmatpush2.msra.mxu0 0.0
    %294 = vmatprep.subr.mxu0 0.0
    %295 = vmatpush2.msra.mxu0 0.0
    %296 = vmatprep.subr.mxu0 0.0
    %297 = vmatpush2.msra.mxu0 0.0
    %298 = vmatprep.subr.mxu0 0.0
    %299 = vmatpush2.msra.mxu0 0.0
    %300 = vmatprep.subr.mxu0 0.0
    %301 = vmatpush2.msra.mxu0 0.0
    %302 = vmatprep.subr.mxu0 0.0
    %303 = vmatpush2.msra.mxu0 0.0
    %304 = vmatprep.subr.mxu0 0.0
    %305 = vmatpush2.msra.mxu0 0.0
    %306 = vmatprep.subr.mxu0 0.0
    %307 = vmatpush2.msra.mxu0 0.0
    %308 = vmatprep.subr.mxu0 0.0
    %309 = vmatpush2.msra.mxu0 0.0
    %310 = vmatprep.subr.mxu0 0.0
    %311 = vmatpush2.msra.mxu0 0.0
    %312 = vmatprep.subr.mxu0 0.0
    %313 = vmatpush2.msra.mxu0 0.0
    %314 = vmatprep.subr.mxu0 0.0
    %315 = vmatpush2.msra.mxu0 0.0
    %316 = vmatprep.subr.mxu0 0.0
    %317 = vmatpush2.msra.mxu0 0.0
    %318 = vmatprep.mubr.f32.mxu0 0.0
    %319 = vmatmul.mubr.f32.gmra.mxu0 %v249
    %v320 = vpop.f32.mrf.mxu0
    %v321 = vadd.f32 0.0, %v320
    %v322 = vpop.f32.mrf.mxu0
    %323 = vmatprep.mubr.f32.mxu0 0.0
    %324 = vmatmul.mubr.f32.gmra.mxu0 %v252
    %v325 = vpop.f32.mrf.mxu0
    %v326 = vadd.f32 0.0, %v325
    %v327 = vpop.f32.mrf.mxu0
    %328 = vdwg.mxu0
    %v329 = vld [vmem:[%s1] sm:$0xff]
    %v330 = vld [vmem:[%s1 + $0x8] sm:$0xff]
    %v331 = vld [vmem:[%s1 + $0x10] sm:$0xff]
    %v332 = vld [vmem:[%s1 + $0x18] sm:$0xff]
    %v333 = vld [vmem:[#allocation5] sm:$0xff]
    %v334 = vld [vmem:[#allocation5 + $0x8] sm:$0xff]
    %v335 = vld [vmem:[#allocation5 + $0x10] sm:$0xff]
    %v336 = vld [vmem:[#allocation5 + $0x18] sm:$0x3]
    %337 = vset.pattern.permute.xlu0 0
    %338 = vperm.xlu0 %337, %v329
    %v339 = vpop.permute.xlu0 %338
    %340 = vset.pattern.permute.xlu0 0
    %341 = vperm.xlu0 %340, %v330
    %v342 = vpop.permute.xlu0 %341
    %343 = vset.pattern.permute.xlu0 0
    %344 = vperm.xlu0 %343, %v331
    %v345 = vpop.permute.xlu0 %344
    %346 = vset.pattern.permute.xlu0 0
    %347 = vperm.xlu0 %346, %v332
    %v348 = vpop.permute.xlu0 %347
    %vm349 = vcmp.eq.s32.totalorder %v339, %v234
    %vm350 = vcmp.eq.s32.totalorder %v342, %v234
    %vm351 = vcmp.eq.s32.totalorder %v345, %v234
    %vm352 = vcmp.eq.s32.totalorder %v348, %v234
    %v353 = vsel %vm349, 1, 0
    %v354 = vsel %vm350, 1, 0
    %v355 = vsel %vm351, 1, 0
    %v356 = vsel %vm352, 1, 0
    %v357 = vcvt.s32.f32 %v353
    %v358 = vcvt.s32.f32 %v354
    %v359 = vcvt.s32.f32 %v355
    %v360 = vcvt.s32.f32 %v356
    %vm361 = vcmask 211968
    %v363 = vsel %vm361, %v357, 0
    %v366 = vsel %vm361, %v358, 0
    %v369 = vsel %vm361, %v359, 0
    %v372 = vsel %vm361, %v360, 0
    %vm374 = vcmask 1041408
    %v376 = vsel %vm374, %v336, 0
    %378 = vmatprep.subr.mxu0 0.0
    %379 = vmatpush1.msra.mxu0 0.0
    %380 = vmatprep.subr.mxu0 0.0
    %381 = vmatpush1.msra.mxu0 0.0
    %382 = vmatprep.subr.mxu0 0.0
    %383 = vmatpush1.msra.mxu0 0.0
    %384 = vmatprep.subr.mxu0 0.0
    %385 = vmatpush1.msra.mxu0 0.0
    %386 = vmatprep.subr.mxu0 0.0
    %387 = vmatpush1.msra.mxu0 0.0
    %388 = vmatprep.subr.mxu0 0.0
    %389 = vmatpush1.msra.mxu0 0.0
    %390 = vmatprep.subr.mxu0 0.0
    %391 = vmatpush1.msra.mxu0 0.0
    %392 = vmatprep.subr.mxu0 0.0
    %393 = vmatpush1.msra.mxu0 0.0
    %394 = vmatprep.subr.mxu0 0.0
    %395 = vmatpush1.msra.mxu0 0.0
    %396 = vmatprep.subr.mxu0 0.0
    %397 = vmatpush1.msra.mxu0 0.0
    %398 = vmatprep.subr.mxu0 0.0
    %399 = vmatpush1.msra.mxu0 0.0
    %400 = vmatprep.subr.mxu0 0.0
    %401 = vmatpush1.msra.mxu0 0.0
    %402 = vmatprep.subr.mxu0 0.0
    %403 = vmatpush1.msra.mxu0 %v376
    %404 = vmatprep.subr.mxu0 0.0
    %405 = vmatpush1.msra.mxu0 %v335
    %406 = vmatprep.subr.mxu0 0.0
    %407 = vmatpush1.msra.mxu0 %v334
    %408 = vmatprep.subr.mxu0 0.0
    %409 = vmatpush1.msra.mxu0 %v333
    %410 = vmatprep.subr.mxu0 0.0
    %411 = vmatpush2.msra.mxu0 0.0
    %412 = vmatprep.subr.mxu0 0.0
    %413 = vmatpush2.msra.mxu0 0.0
    %414 = vmatprep.subr.mxu0 0.0
    %415 = vmatpush2.msra.mxu0 0.0
    %416 = vmatprep.subr.mxu0 0.0
    %417 = vmatpush2.msra.mxu0 0.0
    %418 = vmatprep.subr.mxu0 0.0
    %419 = vmatpush2.msra.mxu0 0.0
    %420 = vmatprep.subr.mxu0 0.0
    %421 = vmatpush2.msra.mxu0 0.0
    %422 = vmatprep.subr.mxu0 0.0
    %423 = vmatpush2.msra.mxu0 0.0
    %424 = vmatprep.subr.mxu0 0.0
    %425 = vmatpush2.msra.mxu0 0.0
    %426 = vmatprep.subr.mxu0 0.0
    %427 = vmatpush2.msra.mxu0 0.0
    %428 = vmatprep.subr.mxu0 0.0
    %429 = vmatpush2.msra.mxu0 0.0
    %430 = vmatprep.subr.mxu0 0.0
    %431 = vmatpush2.msra.mxu0 0.0
    %432 = vmatprep.subr.mxu0 0.0
    %433 = vmatpush2.msra.mxu0 0.0
    %434 = vmatprep.subr.mxu0 0.0
    %435 = vmatpush2.msra.mxu0 0.0
    %436 = vmatprep.subr.mxu0 0.0
    %437 = vmatpush2.msra.mxu0 0.0
    %438 = vmatprep.subr.mxu0 0.0
    %439 = vmatpush2.msra.mxu0 0.0
    %440 = vmatprep.subr.mxu0 0.0
    %441 = vmatpush2.msra.mxu0 0.0
    %442 = vmatprep.mubr.f32.mxu0 0.0
    %443 = vmatmul.mubr.f32.gmra.mxu0 %v363
    %v444 = vpop.f32.mrf.mxu0
    %v445 = vadd.f32 0.0, %v444
    %v446 = vpop.f32.mrf.mxu0
    %447 = vmatprep.mubr.f32.mxu0 0.0
    %448 = vmatmul.mubr.f32.gmra.mxu0 %v366
    %v449 = vpop.f32.mrf.mxu0
    %v450 = vadd.f32 0.0, %v449
    %v451 = vpop.f32.mrf.mxu0
    %452 = vmatprep.mubr.f32.mxu0 0.0
    %453 = vmatmul.mubr.f32.gmra.mxu0 %v369
    %v454 = vpop.f32.mrf.mxu0
    %v455 = vadd.f32 0.0, %v454
    %v456 = vpop.f32.mrf.mxu0
    %457 = vmatprep.mubr.f32.mxu0 0.0
    %458 = vmatmul.mubr.f32.gmra.mxu0 %v372
    %v459 = vpop.f32.mrf.mxu0
    %v460 = vadd.f32 0.0, %v459
    %v461 = vpop.f32.mrf.mxu0
    %462 = vdwg.mxu0
    %v463 = vld [vmem:[#allocation7] sm:$0xff]
    %v464 = vld [vmem:[#allocation7 + $0x8] sm:$0xff]
    %v465 = vld [vmem:[#allocation7 + $0x10] sm:$0xff]
    %v466 = vld [vmem:[#allocation7 + $0x18] sm:$0xff]
    %v467 = vld [vmem:[%s5] sm:$0x1]
    %v468 = vld [vmem:[%s6] sm:$0x1]
    %v469 = vld [vmem:[#allocation8] sm:$0xff]
    %v470 = vld [vmem:[#allocation8 + $0x8] sm:$0xff]
    %v471 = vld [vmem:[#allocation8 + $0x10] sm:$0xff]
    %v472 = vld [vmem:[#allocation8 + $0x18] sm:$0xff]
    %v473 = vld [vmem:[%s8] sm:$0x1]
    %v474 = vld [vmem:[#allocation10] sm:$0xff]
    %v475 = vld [vmem:[#allocation10 + $0x8] sm:$0xff]
    %v476 = vld [vmem:[#allocation10 + $0x10] sm:$0xff]
    %v477 = vld [vmem:[#allocation10 + $0x18] sm:$0xff]
    %v478 = vld [vmem:[#allocation10 + $0x20] sm:$0xff]
    %v479 = vld [vmem:[#allocation10 + $0x28] sm:$0xff]
    %v480 = vld [vmem:[#allocation10 + $0x30] sm:$0xff]
    %v481 = vld [vmem:[#allocation10 + $0x38] sm:$0xff]
    %v482 = vld [vmem:[%s10] sm:$0x1]
    %v483 = vld [vmem:[%s11] sm:$0x1]
    %v484 = vld [vmem:[%s12] sm:$0x1]
    %vm485 = vcmask 261120
    %v487 = vsel %vm485, %v321, 0
    %v490 = vsel %vm485, %v326, 0
    %492 = vmatprep.subr.mxu0 0.0
    %493 = vmatpush1.msra.mxu0 0.0
    %494 = vmatprep.subr.mxu0 0.0
    %495 = vmatpush1.msra.mxu0 0.0
    %496 = vmatprep.subr.mxu0 0.0
    %497 = vmatpush1.msra.mxu0 0.0
    %498 = vmatprep.subr.mxu0 0.0
    %499 = vmatpush1.msra.mxu0 0.0
    %500 = vmatprep.subr.mxu0 0.0
    %501 = vmatpush1.msra.mxu0 0.0
    %502 = vmatprep.subr.mxu0 0.0
    %503 = vmatpush1.msra.mxu0 0.0
    %504 = vmatprep.subr.mxu0 0.0
    %505 = vmatpush1.msra.mxu0 0.0
    %506 = vmatprep.subr.mxu0 0.0
    %507 = vmatpush1.msra.mxu0 0.0
    %508 = vmatprep.subr.mxu0 0.0
    %509 = vmatpush1.msra.mxu0 0.0
    %510 = vmatprep.subr.mxu0 0.0
    %511 = vmatpush1.msra.mxu0 0.0
    %512 = vmatprep.subr.mxu0 0.0
    %513 = vmatpush1.msra.mxu0 0.0
    %514 = vmatprep.subr.mxu0 0.0
    %515 = vmatpush1.msra.mxu0 0.0
    %516 = vmatprep.subr.mxu0 0.0
    %517 = vmatpush1.msra.mxu0 %v466
    %518 = vmatprep.subr.mxu0 0.0
    %519 = vmatpush1.msra.mxu0 %v465
    %520 = vmatprep.subr.mxu0 0.0
    %521 = vmatpush1.msra.mxu0 %v464
    %522 = vmatprep.subr.mxu0 0.0
    %523 = vmatpush1.msra.mxu0 %v463
    %524 = vmatprep.subr.mxu0 0.0
    %525 = vmatpush2.msra.mxu0 0.0
    %526 = vmatprep.subr.mxu0 0.0
    %527 = vmatpush2.msra.mxu0 0.0
    %528 = vmatprep.subr.mxu0 0.0
    %529 = vmatpush2.msra.mxu0 0.0
    %530 = vmatprep.subr.mxu0 0.0
    %531 = vmatpush2.msra.mxu0 0.0
    %532 = vmatprep.subr.mxu0 0.0
    %533 = vmatpush2.msra.mxu0 0.0
    %534 = vmatprep.subr.mxu0 0.0
    %535 = vmatpush2.msra.mxu0 0.0
    %536 = vmatprep.subr.mxu0 0.0
    %537 = vmatpush2.msra.mxu0 0.0
    %538 = vmatprep.subr.mxu0 0.0
    %539 = vmatpush2.msra.mxu0 0.0
    %540 = vmatprep.subr.mxu0 0.0
    %541 = vmatpush2.msra.mxu0 0.0
    %542 = vmatprep.subr.mxu0 0.0
    %543 = vmatpush2.msra.mxu0 0.0
    %544 = vmatprep.subr.mxu0 0.0
    %545 = vmatpush2.msra.mxu0 0.0
    %546 = vmatprep.subr.mxu0 0.0
    %547 = vmatpush2.msra.mxu0 0.0
    %548 = vmatprep.subr.mxu0 0.0
    %549 = vmatpush2.msra.mxu0 0.0
    %550 = vmatprep.subr.mxu0 0.0
    %551 = vmatpush2.msra.mxu0 0.0
    %552 = vmatprep.subr.mxu0 0.0
    %553 = vmatpush2.msra.mxu0 0.0
    %554 = vmatprep.subr.mxu0 0.0
    %555 = vmatpush2.msra.mxu0 0.0
    %556 = vmatprep.mubr.f32.mxu0 0.0
    %557 = vmatmul.mubr.f32.gmra.mxu0 %v487
    %v558 = vpop.f32.mrf.mxu0
    %v559 = vadd.f32 0.0, %v558
    %v560 = vpop.f32.mrf.mxu0
    %561 = vmatprep.mubr.f32.mxu0 0.0
    %562 = vmatmul.mubr.f32.gmra.mxu0 %v490
    %v563 = vpop.f32.mrf.mxu0
    %v564 = vadd.f32 0.0, %v563
    %v565 = vpop.f32.mrf.mxu0
    %566 = vdwg.mxu0
    %568 = vrot.lane.b32.xlu0 %v559, 96
    %v569 = vpop.permute.xlu0 %568
    %v570 = vsel %vm485, %v559, 0
    %v572 = vsel %vm485, %v569, 0
    %574 = vmatprep.subr.mxu0 0.0
    %575 = vmatpush1.xpose.msra.mxu0 0.0
    %576 = vmatprep.subr.mxu0 0.0
    %577 = vmatpush1.xpose.msra.mxu0 0.0
    %578 = vmatprep.subr.mxu0 0.0
    %579 = vmatpush1.xpose.msra.mxu0 0.0
    %580 = vmatprep.subr.mxu0 0.0
    %581 = vmatpush1.xpose.msra.mxu0 0.0
    %582 = vmatprep.subr.mxu0 0.0
    %583 = vmatpush1.xpose.msra.mxu0 0.0
    %584 = vmatprep.subr.mxu0 0.0
    %585 = vmatpush1.xpose.msra.mxu0 0.0
    %586 = vmatprep.subr.mxu0 0.0
    %587 = vmatpush1.xpose.msra.mxu0 0.0
    %588 = vmatprep.subr.mxu0 0.0
    %589 = vmatpush1.xpose.msra.mxu0 0.0
    %590 = vmatprep.subr.mxu0 0.0
    %591 = vmatpush1.xpose.msra.mxu0 0.0
    %592 = vmatprep.subr.mxu0 0.0
    %593 = vmatpush1.xpose.msra.mxu0 0.0
    %594 = vmatprep.subr.mxu0 0.0
    %595 = vmatpush1.xpose.msra.mxu0 0.0
    %596 = vmatprep.subr.mxu0 0.0
    %597 = vmatpush1.xpose.msra.mxu0 0.0
    %598 = vmatprep.subr.mxu0 0.0
    %599 = vmatpush1.xpose.msra.mxu0 0.0
    %600 = vmatprep.subr.mxu0 0.0
    %601 = vmatpush1.xpose.msra.mxu0 0.0
    %602 = vmatprep.subr.mxu0 0.0
    %603 = vmatpush1.xpose.msra.mxu0 0.0
    %604 = vmatprep.subr.mxu0 0.0
    %605 = vmatpush1.xpose.msra.mxu0 %v572
    %606 = vmatprep.subr.mxu0 0.0
    %607 = vmatpush2.xpose.msra.mxu0 0.0
    %608 = vmatprep.subr.mxu0 0.0
    %609 = vmatpush2.xpose.msra.mxu0 0.0
    %610 = vmatprep.subr.mxu0 0.0
    %611 = vmatpush2.xpose.msra.mxu0 0.0
    %612 = vmatprep.subr.mxu0 0.0
    %613 = vmatpush2.xpose.msra.mxu0 0.0
    %614 = vmatprep.subr.mxu0 0.0
    %615 = vmatpush2.xpose.msra.mxu0 0.0
    %616 = vmatprep.subr.mxu0 0.0
    %617 = vmatpush2.xpose.msra.mxu0 0.0
    %618 = vmatprep.subr.mxu0 0.0
    %619 = vmatpush2.xpose.msra.mxu0 0.0
    %620 = vmatprep.subr.mxu0 0.0
    %621 = vmatpush2.xpose.msra.mxu0 0.0
    %622 = vmatprep.subr.mxu0 0.0
    %623 = vmatpush2.xpose.msra.mxu0 0.0
    %624 = vmatprep.subr.mxu0 0.0
    %625 = vmatpush2.xpose.msra.mxu0 0.0
    %626 = vmatprep.subr.mxu0 0.0
    %627 = vmatpush2.xpose.msra.mxu0 0.0
    %628 = vmatprep.subr.mxu0 0.0
    %629 = vmatpush2.xpose.msra.mxu0 0.0
    %630 = vmatprep.subr.mxu0 0.0
    %631 = vmatpush2.xpose.msra.mxu0 0.0
    %632 = vmatprep.subr.mxu0 0.0
    %633 = vmatpush2.xpose.msra.mxu0 0.0
    %634 = vmatprep.subr.mxu0 0.0
    %635 = vmatpush2.xpose.msra.mxu0 0.0
    %636 = vmatprep.subr.mxu0 0.0
    %637 = vmatpush2.xpose.msra.mxu0 0.0
    %638 = vmatprep.mubr.f32.mxu0 0.0
    %639 = vmatmul.mubr.f32.gmra.mxu0 %v570
    %v640 = vpop.f32.mrf.mxu0
    %v641 = vadd.f32 0.0, %v640
    %v642 = vpop.f32.mrf.mxu0
    %643 = vdwg.mxu0
    %645 = vrot.lane.b32.xlu0 %v564, 96
    %v646 = vpop.permute.xlu0 %645
    %v647 = vsel %vm485, %v564, 0
    %v649 = vsel %vm485, %v646, 0
    %651 = vmatprep.subr.mxu0 0.0
    %652 = vmatpush1.xpose.msra.mxu0 0.0
    %653 = vmatprep.subr.mxu0 0.0
    %654 = vmatpush1.xpose.msra.mxu0 0.0
    %655 = vmatprep.subr.mxu0 0.0
    %656 = vmatpush1.xpose.msra.mxu0 0.0
    %657 = vmatprep.subr.mxu0 0.0
    %658 = vmatpush1.xpose.msra.mxu0 0.0
    %659 = vmatprep.subr.mxu0 0.0
    %660 = vmatpush1.xpose.msra.mxu0 0.0
    %661 = vmatprep.subr.mxu0 0.0
    %662 = vmatpush1.xpose.msra.mxu0 0.0
    %663 = vmatprep.subr.mxu0 0.0
    %664 = vmatpush1.xpose.msra.mxu0 0.0
    %665 = vmatprep.subr.mxu0 0.0
    %666 = vmatpush1.xpose.msra.mxu0 0.0
    %667 = vmatprep.subr.mxu0 0.0
    %668 = vmatpush1.xpose.msra.mxu0 0.0
    %669 = vmatprep.subr.mxu0 0.0
    %670 = vmatpush1.xpose.msra.mxu0 0.0
    %671 = vmatprep.subr.mxu0 0.0
    %672 = vmatpush1.xpose.msra.mxu0 0.0
    %673 = vmatprep.subr.mxu0 0.0
    %674 = vmatpush1.xpose.msra.mxu0 0.0
    %675 = vmatprep.subr.mxu0 0.0
    %676 = vmatpush1.xpose.msra.mxu0 0.0
    %677 = vmatprep.subr.mxu0 0.0
    %678 = vmatpush1.xpose.msra.mxu0 0.0
    %679 = vmatprep.subr.mxu0 0.0
    %680 = vmatpush1.xpose.msra.mxu0 0.0
    %681 = vmatprep.subr.mxu0 0.0
    %682 = vmatpush1.xpose.msra.mxu0 %v649
    %683 = vmatprep.subr.mxu0 0.0
    %684 = vmatpush2.xpose.msra.mxu0 0.0
    %685 = vmatprep.subr.mxu0 0.0
    %686 = vmatpush2.xpose.msra.mxu0 0.0
    %687 = vmatprep.subr.mxu0 0.0
    %688 = vmatpush2.xpose.msra.mxu0 0.0
    %689 = vmatprep.subr.mxu0 0.0
    %690 = vmatpush2.xpose.msra.mxu0 0.0
    %691 = vmatprep.subr.mxu0 0.0
    %692 = vmatpush2.xpose.msra.mxu0 0.0
    %693 = vmatprep.subr.mxu0 0.0
    %694 = vmatpush2.xpose.msra.mxu0 0.0
    %695 = vmatprep.subr.mxu0 0.0
    %696 = vmatpush2.xpose.msra.mxu0 0.0
    %697 = vmatprep.subr.mxu0 0.0
    %698 = vmatpush2.xpose.msra.mxu0 0.0
    %699 = vmatprep.subr.mxu0 0.0
    %700 = vmatpush2.xpose.msra.mxu0 0.0
    %701 = vmatprep.subr.mxu0 0.0
    %702 = vmatpush2.xpose.msra.mxu0 0.0
    %703 = vmatprep.subr.mxu0 0.0
    %704 = vmatpush2.xpose.msra.mxu0 0.0
    %705 = vmatprep.subr.mxu0 0.0
    %706 = vmatpush2.xpose.msra.mxu0 0.0
    %707 = vmatprep.subr.mxu0 0.0
    %708 = vmatpush2.xpose.msra.mxu0 0.0
    %709 = vmatprep.subr.mxu0 0.0
    %710 = vmatpush2.xpose.msra.mxu0 0.0
    %711 = vmatprep.subr.mxu0 0.0
    %712 = vmatpush2.xpose.msra.mxu0 0.0
    %713 = vmatprep.subr.mxu0 0.0
    %714 = vmatpush2.xpose.msra.mxu0 0.0
    %715 = vmatprep.mubr.f32.mxu0 0.0
    %716 = vmatmul.mubr.f32.gmra.mxu0 %v647
    %v717 = vpop.f32.mrf.mxu0
    %v718 = vadd.f32 0.0, %v717
    %v719 = vpop.f32.mrf.mxu0
    %720 = vdwg.mxu0
    %v721 = vmul.f32 %v641, 0.17677669
    %v722 = vmul.f32 %v718, 0.17677669
    %vm723 = vcmask 64512
    %v724 = vsel %vm723, %v721, -inf
    %725 = vmax.xlane.f32.xlu0 %v724
    %v726 = vpop.xlane.xlu0 %725
    %v727 = vsel %vm723, %v722, -inf
    %728 = vmax.xlane.f32.xlu0 %v727
    %v729 = vpop.xlane.xlu0 %728
    %v730 = vsub.f32 %v721, %v726
    %v731 = vsub.f32 %v722, %v729
    %v732 = vmul.f32 %v730, 1.442695
    %v733 = vpow.pop %v732
    %v734 = vmul.f32 %v731, 1.442695
    %v735 = vpow.pop %v734
    %v736 = vsel %vm723, %v733, 0.0
    %737 = vadd.xlane.f32.xlu0 %v736
    %v738 = vpop.xlane.xlu0 %737
    %v739 = vsel %vm723, %v735, 0.0
    %740 = vadd.xlane.f32.xlu0 %v739
    %v741 = vpop.xlane.xlu0 %740
    %v742 = vrcp.pop %v738
    %v743 = vrcp.pop %v741
    %v744 = vmul.f32 %v733, %v742
    %v745 = vmul.f32 %v735, %v743
    %746 = vrot.lane.b32.xlu0 %v559, 64
    %v747 = vpop.permute.xlu0 %746
    %v750 = vsel %vm723, %v744, 0
    %752 = vmatprep.subr.mxu0 0.0
    %753 = vmatpush1.msra.mxu0 0.0
    %754 = vmatprep.subr.mxu0 0.0
    %755 = vmatpush1.msra.mxu0 0.0
    %756 = vmatprep.subr.mxu0 0.0
    %757 = vmatpush1.msra.mxu0 0.0
    %758 = vmatprep.subr.mxu0 0.0
    %759 = vmatpush1.msra.mxu0 0.0
    %760 = vmatprep.subr.mxu0 0.0
    %761 = vmatpush1.msra.mxu0 0.0
    %762 = vmatprep.subr.mxu0 0.0
    %763 = vmatpush1.msra.mxu0 0.0
    %764 = vmatprep.subr.mxu0 0.0
    %765 = vmatpush1.msra.mxu0 0.0
    %766 = vmatprep.subr.mxu0 0.0
    %767 = vmatpush1.msra.mxu0 0.0
    %768 = vmatprep.subr.mxu0 0.0
    %769 = vmatpush1.msra.mxu0 0.0
    %770 = vmatprep.subr.mxu0 0.0
    %771 = vmatpush1.msra.mxu0 0.0
    %772 = vmatprep.subr.mxu0 0.0
    %773 = vmatpush1.msra.mxu0 0.0
    %774 = vmatprep.subr.mxu0 0.0
    %775 = vmatpush1.msra.mxu0 0.0
    %776 = vmatprep.subr.mxu0 0.0
    %777 = vmatpush1.msra.mxu0 0.0
    %778 = vmatprep.subr.mxu0 0.0
    %779 = vmatpush1.msra.mxu0 0.0
    %780 = vmatprep.subr.mxu0 0.0
    %781 = vmatpush1.msra.mxu0 0.0
    %782 = vmatprep.subr.mxu0 0.0
    %783 = vmatpush1.msra.mxu0 %v747
    %784 = vmatprep.subr.mxu0 0.0
    %785 = vmatpush2.msra.mxu0 0.0
    %786 = vmatprep.subr.mxu0 0.0
    %787 = vmatpush2.msra.mxu0 0.0
    %788 = vmatprep.subr.mxu0 0.0
    %789 = vmatpush2.msra.mxu0 0.0
    %790 = vmatprep.subr.mxu0 0.0
    %791 = vmatpush2.msra.mxu0 0.0
    %792 = vmatprep.subr.mxu0 0.0
    %793 = vmatpush2.msra.mxu0 0.0
    %794 = vmatprep.subr.mxu0 0.0
    %795 = vmatpush2.msra.mxu0 0.0
    %796 = vmatprep.subr.mxu0 0.0
    %797 = vmatpush2.msra.mxu0 0.0
    %798 = vmatprep.subr.mxu0 0.0
    %799 = vmatpush2.msra.mxu0 0.0
    %800 = vmatprep.subr.mxu0 0.0
    %801 = vmatpush2.msra.mxu0 0.0
    %802 = vmatprep.subr.mxu0 0.0
    %803 = vmatpush2.msra.mxu0 0.0
    %804 = vmatprep.subr.mxu0 0.0
    %805 = vmatpush2.msra.mxu0 0.0
    %806 = vmatprep.subr.mxu0 0.0
    %807 = vmatpush2.msra.mxu0 0.0
    %808 = vmatprep.subr.mxu0 0.0
    %809 = vmatpush2.msra.mxu0 0.0
    %810 = vmatprep.subr.mxu0 0.0
    %811 = vmatpush2.msra.mxu0 0.0
    %812 = vmatprep.subr.mxu0 0.0
    %813 = vmatpush2.msra.mxu0 0.0
    %814 = vmatprep.subr.mxu0 0.0
    %815 = vmatpush2.msra.mxu0 0.0
    %816 = vmatprep.mubr.f32.mxu0 0.0
    %817 = vmatmul.mubr.f32.gmra.mxu0 %v750
    %v818 = vpop.f32.mrf.mxu0
    %v819 = vadd.f32 0.0, %v818
    %v820 = vpop.f32.mrf.mxu0
    %821 = vdwg.mxu0
    %822 = vrot.lane.b32.xlu0 %v564, 64
    %v823 = vpop.permute.xlu0 %822
    %v826 = vsel %vm723, %v745, 0
    %828 = vmatprep.subr.mxu0 0.0
    %829 = vmatpush1.msra.mxu0 0.0
    %830 = vmatprep.subr.mxu0 0.0
    %831 = vmatpush1.msra.mxu0 0.0
    %832 = vmatprep.subr.mxu0 0.0
    %833 = vmatpush1.msra.mxu0 0.0
    %834 = vmatprep.subr.mxu0 0.0
    %835 = vmatpush1.msra.mxu0 0.0
    %836 = vmatprep.subr.mxu0 0.0
    %837 = vmatpush1.msra.mxu0 0.0
    %838 = vmatprep.subr.mxu0 0.0
    %839 = vmatpush1.msra.mxu0 0.0
    %840 = vmatprep.subr.mxu0 0.0
    %841 = vmatpush1.msra.mxu0 0.0
    %842 = vmatprep.subr.mxu0 0.0
    %843 = vmatpush1.msra.mxu0 0.0
    %844 = vmatprep.subr.mxu0 0.0
    %845 = vmatpush1.msra.mxu0 0.0
    %846 = vmatprep.subr.mxu0 0.0
    %847 = vmatpush1.msra.mxu0 0.0
    %848 = vmatprep.subr.mxu0 0.0
    %849 = vmatpush1.msra.mxu0 0.0
    %850 = vmatprep.subr.mxu0 0.0
    %851 = vmatpush1.msra.mxu0 0.0
    %852 = vmatprep.subr.mxu0 0.0
    %853 = vmatpush1.msra.mxu0 0.0
    %854 = vmatprep.subr.mxu0 0.0
    %855 = vmatpush1.msra.mxu0 0.0
    %856 = vmatprep.subr.mxu0 0.0
    %857 = vmatpush1.msra.mxu0 0.0
    %858 = vmatprep.subr.mxu0 0.0
    %859 = vmatpush1.msra.mxu0 %v823
    %860 = vmatprep.subr.mxu0 0.0
    %861 = vmatpush2.msra.mxu0 0.0
    %862 = vmatprep.subr.mxu0 0.0
    %863 = vmatpush2.msra.mxu0 0.0
    %864 = vmatprep.subr.mxu0 0.0
    %865 = vmatpush2.msra.mxu0 0.0
    %866 = vmatprep.subr.mxu0 0.0
    %867 = vmatpush2.msra.mxu0 0.0
    %868 = vmatprep.subr.mxu0 0.0
    %869 = vmatpush2.msra.mxu0 0.0
    %870 = vmatprep.subr.mxu0 0.0
    %871 = vmatpush2.msra.mxu0 0.0
    %872 = vmatprep.subr.mxu0 0.0
    %873 = vmatpush2.msra.mxu0 0.0
    %874 = vmatprep.subr.mxu0 0.0
    %875 = vmatpush2.msra.mxu0 0.0
    %876 = vmatprep.subr.mxu0 0.0
    %877 = vmatpush2.msra.mxu0 0.0
    %878 = vmatprep.subr.mxu0 0.0
    %879 = vmatpush2.msra.mxu0 0.0
    %880 = vmatprep.subr.mxu0 0.0
    %881 = vmatpush2.msra.mxu0 0.0
    %882 = vmatprep.subr.mxu0 0.0
    %883 = vmatpush2.msra.mxu0 0.0
    %884 = vmatprep.subr.mxu0 0.0
    %885 = vmatpush2.msra.mxu0 0.0
    %886 = vmatprep.subr.mxu0 0.0
    %887 = vmatpush2.msra.mxu0 0.0
    %888 = vmatprep.subr.mxu0 0.0
    %889 = vmatpush2.msra.mxu0 0.0
    %890 = vmatprep.subr.mxu0 0.0
    %891 = vmatpush2.msra.mxu0 0.0
    %892 = vmatprep.mubr.f32.mxu0 0.0
    %893 = vmatmul.mubr.f32.gmra.mxu0 %v826
    %v894 = vpop.f32.mrf.mxu0
    %v895 = vadd.f32 0.0, %v894
    %v896 = vpop.f32.mrf.mxu0
    %897 = vdwg.mxu0
    %902 = vrot.lane.b32.xlu0 %v463, 32
    %v903 = vpop.permute.xlu0 %902
    %904 = vrot.lane.b32.xlu0 %v464, 32
    %v905 = vpop.permute.xlu0 %904
    %906 = vrot.lane.b32.xlu0 %v465, 32
    %v907 = vpop.permute.xlu0 %906
    %908 = vrot.lane.b32.xlu0 %v466, 32
    %v909 = vpop.permute.xlu0 %908
    %v915 = vsel %vm485, %v819, 0
    %v918 = vsel %vm485, %v895, 0
    %920 = vmatprep.subr.mxu0 0.0
    %921 = vmatpush1.msra.mxu0 0.0
    %922 = vmatprep.subr.mxu0 0.0
    %923 = vmatpush1.msra.mxu0 0.0
    %924 = vmatprep.subr.mxu0 0.0
    %925 = vmatpush1.msra.mxu0 0.0
    %926 = vmatprep.subr.mxu0 0.0
    %927 = vmatpush1.msra.mxu0 0.0
    %928 = vmatprep.subr.mxu0 0.0
    %929 = vmatpush1.msra.mxu0 0.0
    %930 = vmatprep.subr.mxu0 0.0
    %931 = vmatpush1.msra.mxu0 0.0
    %932 = vmatprep.subr.mxu0 0.0
    %933 = vmatpush1.msra.mxu0 0.0
    %934 = vmatprep.subr.mxu0 0.0
    %935 = vmatpush1.msra.mxu0 0.0
    %936 = vmatprep.subr.mxu0 0.0
    %937 = vmatpush1.msra.mxu0 0.0
    %938 = vmatprep.subr.mxu0 0.0
    %939 = vmatpush1.msra.mxu0 0.0
    %940 = vmatprep.subr.mxu0 0.0
    %941 = vmatpush1.msra.mxu0 0.0
    %942 = vmatprep.subr.mxu0 0.0
    %943 = vmatpush1.msra.mxu0 0.0
    %944 = vmatprep.subr.mxu0 0.0
    %945 = vmatpush1.msra.mxu0 %v909
    %946 = vmatprep.subr.mxu0 0.0
    %947 = vmatpush1.msra.mxu0 %v907
    %948 = vmatprep.subr.mxu0 0.0
    %949 = vmatpush1.msra.mxu0 %v905
    %950 = vmatprep.subr.mxu0 0.0
    %951 = vmatpush1.msra.mxu0 %v903
    %952 = vmatprep.subr.mxu0 0.0
    %953 = vmatpush2.msra.mxu0 0.0
    %954 = vmatprep.subr.mxu0 0.0
    %955 = vmatpush2.msra.mxu0 0.0
    %956 = vmatprep.subr.mxu0 0.0
    %957 = vmatpush2.msra.mxu0 0.0
    %958 = vmatprep.subr.mxu0 0.0
    %959 = vmatpush2.msra.mxu0 0.0
    %960 = vmatprep.subr.mxu0 0.0
    %961 = vmatpush2.msra.mxu0 0.0
    %962 = vmatprep.subr.mxu0 0.0
    %963 = vmatpush2.msra.mxu0 0.0
    %964 = vmatprep.subr.mxu0 0.0
    %965 = vmatpush2.msra.mxu0 0.0
    %966 = vmatprep.subr.mxu0 0.0
    %967 = vmatpush2.msra.mxu0 0.0
    %968 = vmatprep.subr.mxu0 0.0
    %969 = vmatpush2.msra.mxu0 0.0
    %970 = vmatprep.subr.mxu0 0.0
    %971 = vmatpush2.msra.mxu0 0.0
    %972 = vmatprep.subr.mxu0 0.0
    %973 = vmatpush2.msra.mxu0 0.0
    %974 = vmatprep.subr.mxu0 0.0
    %975 = vmatpush2.msra.mxu0 0.0
    %976 = vmatprep.subr.mxu0 0.0
    %977 = vmatpush2.msra.mxu0 0.0
    %978 = vmatprep.subr.mxu0 0.0
    %979 = vmatpush2.msra.mxu0 0.0
    %980 = vmatprep.subr.mxu0 0.0
    %981 = vmatpush2.msra.mxu0 0.0
    %982 = vmatprep.subr.mxu0 0.0
    %983 = vmatpush2.msra.mxu0 0.0
    %984 = vmatprep.mubr.f32.mxu0 0.0
    %985 = vmatmul.mubr.f32.gmra.mxu0 %v915
    %v986 = vpop.f32.mrf.mxu0
    %v987 = vadd.f32 0.0, %v986
    %v988 = vpop.f32.mrf.mxu0
    %989 = vmatprep.mubr.f32.mxu0 0.0
    %990 = vmatmul.mubr.f32.gmra.mxu0 %v918
    %v991 = vpop.f32.mrf.mxu0
    %v992 = vadd.f32 0.0, %v991
    %v993 = vpop.f32.mrf.mxu0
    %994 = vdwg.mxu0
    %v995 = vadd.f32 %v321, %v987
    %v996 = vadd.f32 %v326, %v992
    %v997 = vsel %vm485, %v995, 0.0
    %998 = vadd.xlane.f32.xlu0 %v997
    %v999 = vpop.xlane.xlu0 %998
    %v1000 = vsel %vm485, %v996, 0.0
    %1001 = vadd.xlane.f32.xlu0 %v1000
    %v1002 = vpop.xlane.xlu0 %1001
    %v1003 = vrcp.pop 32.0
    %v1004 = vmul.f32 %v999, %v1003
    %v1005 = vmul.f32 %v1002, %v1003
    %v1006 = vsub.f32 %v995, %v1004
    %v1007 = vsub.f32 %v996, %v1005
    %v1008 = vmul.f32 %v1006, %v1006
    %v1009 = vmul.f32 %v1007, %v1007
    %v1010 = vsel %vm485, %v1008, 0.0
    %1011 = vadd.xlane.f32.xlu0 %v1010
    %v1012 = vpop.xlane.xlu0 %1011
    %v1013 = vsel %vm485, %v1009, 0.0
    %1014 = vadd.xlane.f32.xlu0 %v1013
    %v1015 = vpop.xlane.xlu0 %1014
    %v1016 = vmul.f32 %v1012, %v1003
    %v1017 = vmul.f32 %v1015, %v1003
    %v1018 = vadd.f32 %v1016, 1e-05
    %v1019 = vadd.f32 %v1017, 1e-05
    %v1020 = vrsqrt.pop %v1018
    %v1021 = vrsqrt.pop %v1019
    %v1022 = vmul.f32 %v1006, %v1020
    %v1023 = vmul.f32 %v1007, %v1021
    %v1025 = vlaneseq
    %v1026 = vshrl.u32 %v1025, 7
    %v1027 = vsub.s32 0, %v1026
    %v1028 = vrot.slane %v467, %v1027
    %v1030 = vmul.f32 %v1022, %v1028
    %v1031 = vmul.f32 %v1023, %v1028
    %v1033 = vlaneseq
    %v1034 = vshrl.u32 %v1033, 7
    %v1035 = vsub.s32 0, %v1034
    %v1036 = vrot.slane %v468, %v1035
    %v1038 = vadd.f32 %v1030, %v1036
    %v1039 = vadd.f32 %v1031, %v1036
    %v1041 = vlaneseq
    %v1042 = vshrl.u32 %v1041, 7
    %v1043 = vsub.s32 0, %v1042
    %v1044 = vrot.slane %v473, %v1043
    %v1047 = vsel %vm485, %v1038, 0
    %v1050 = vsel %vm485, %v1039, 0
    %1052 = vmatprep.subr.mxu0 0.0
    %1053 = vmatpush1.msra.mxu0 0.0
    %1054 = vmatprep.subr.mxu0 0.0
    %1055 = vmatpush1.msra.mxu0 0.0
    %1056 = vmatprep.subr.mxu0 0.0
    %1057 = vmatpush1.msra.mxu0 0.0
    %1058 = vmatprep.subr.mxu0 0.0
    %1059 = vmatpush1.msra.mxu0 0.0
    %1060 = vmatprep.subr.mxu0 0.0
    %1061 = vmatpush1.msra.mxu0 0.0
    %1062 = vmatprep.subr.mxu0 0.0
    %1063 = vmatpush1.msra.mxu0 0.0
    %1064 = vmatprep.subr.mxu0 0.0
    %1065 = vmatpush1.msra.mxu0 0.0
    %1066 = vmatprep.subr.mxu0 0.0
    %1067 = vmatpush1.msra.mxu0 0.0
    %1068 = vmatprep.subr.mxu0 0.0
    %1069 = vmatpush1.msra.mxu0 0.0
    %1070 = vmatprep.subr.mxu0 0.0
    %1071 = vmatpush1.msra.mxu0 0.0
    %1072 = vmatprep.subr.mxu0 0.0
    %1073 = vmatpush1.msra.mxu0 0.0
    %1074 = vmatprep.subr.mxu0 0.0
    %1075 = vmatpush1.msra.mxu0 0.0
    %1076 = vmatprep.subr.mxu0 0.0
    %1077 = vmatpush1.msra.mxu0 %v472
    %1078 = vmatprep.subr.mxu0 0.0
    %1079 = vmatpush1.msra.mxu0 %v471
    %1080 = vmatprep.subr.mxu0 0.0
    %1081 = vmatpush1.msra.mxu0 %v470
    %1082 = vmatprep.subr.mxu0 0.0
    %1083 = vmatpush1.msra.mxu0 %v469
    %1084 = vmatprep.subr.mxu0 0.0
    %1085 = vmatpush2.msra.mxu0 0.0
    %1086 = vmatprep.subr.mxu0 0.0
    %1087 = vmatpush2.msra.mxu0 0.0
    %1088 = vmatprep.subr.mxu0 0.0
    %1089 = vmatpush2.msra.mxu0 0.0
    %1090 = vmatprep.subr.mxu0 0.0
    %1091 = vmatpush2.msra.mxu0 0.0
    %1092 = vmatprep.subr.mxu0 0.0
    %1093 = vmatpush2.msra.mxu0 0.0
    %1094 = vmatprep.subr.mxu0 0.0
    %1095 = vmatpush2.msra.mxu0 0.0
    %1096 = vmatprep.subr.mxu0 0.0
    %1097 = vmatpush2.msra.mxu0 0.0
    %1098 = vmatprep.subr.mxu0 0.0
    %1099 = vmatpush2.msra.mxu0 0.0
    %1100 = vmatprep.subr.mxu0 0.0
    %1101 = vmatpush2.msra.mxu0 0.0
    %1102 = vmatprep.subr.mxu0 0.0
    %1103 = vmatpush2.msra.mxu0 0.0
    %1104 = vmatprep.subr.mxu0 0.0
    %1105 = vmatpush2.msra.mxu0 0.0
    %1106 = vmatprep.subr.mxu0 0.0
    %1107 = vmatpush2.msra.mxu0 0.0
    %1108 = vmatprep.subr.mxu0 0.0
    %1109 = vmatpush2.msra.mxu0 0.0
    %1110 = vmatprep.subr.mxu0 0.0
    %1111 = vmatpush2.msra.mxu0 0.0
    %1112 = vmatprep.subr.mxu0 0.0
    %1113 = vmatpush2.msra.mxu0 0.0
    %1114 = vmatprep.subr.mxu0 0.0
    %1115 = vmatpush2.msra.mxu0 0.0
    %1116 = vmatprep.mubr.f32.mxu0 0.0
    %1117 = vmatmul.mubr.f32.gmra.mxu0 %v1047
    %v1118 = vpop.f32.mrf.mxu0
    %v1119 = vadd.f32 %v1044, %v1118
    %v1120 = vpop.f32.mrf.mxu0
    %1121 = vmatprep.mubr.f32.mxu0 0.0
    %1122 = vmatmul.mubr.f32.gmra.mxu0 %v1050
    %v1123 = vpop.f32.mrf.mxu0
    %v1124 = vadd.f32 %v1044, %v1123
    %v1125 = vpop.f32.mrf.mxu0
    %1126 = vdwg.mxu0
    %v1127 = vmax.f32 %v1119, 0.0
    %v1128 = vmax.f32 %v1124, 0.0
    %v1130 = vlaneseq
    %v1131 = vshrl.u32 %v1130, 7
    %v1132 = vsub.s32 0, %v1131
    %v1133 = vrot.slane %v482, %v1132
    %v1136 = vsel %vm247, %v1127, 0
    %v1139 = vsel %vm247, %v1128, 0
    %1141 = vmatprep.subr.mxu0 0.0
    %1142 = vmatpush1.msra.mxu0 0.0
    %1143 = vmatprep.subr.mxu0 0.0
    %1144 = vmatpush1.msra.mxu0 0.0
    %1145 = vmatprep.subr.mxu0 0.0
    %1146 = vmatpush1.msra.mxu0 0.0
    %1147 = vmatprep.subr.mxu0 0.0
    %1148 = vmatpush1.msra.mxu0 0.0
    %1149 = vmatprep.subr.mxu0 0.0
    %1150 = vmatpush1.msra.mxu0 0.0
    %1151 = vmatprep.subr.mxu0 0.0
    %1152 = vmatpush1.msra.mxu0 0.0
    %1153 = vmatprep.subr.mxu0 0.0
    %1154 = vmatpush1.msra.mxu0 0.0
    %1155 = vmatprep.subr.mxu0 0.0
    %1156 = vmatpush1.msra.mxu0 0.0
    %1157 = vmatprep.subr.mxu0 0.0
    %1158 = vmatpush1.msra.mxu0 %v481
    %1159 = vmatprep.subr.mxu0 0.0
    %1160 = vmatpush1.msra.mxu0 %v480
    %1161 = vmatprep.subr.mxu0 0.0
    %1162 = vmatpush1.msra.mxu0 %v479
    %1163 = vmatprep.subr.mxu0 0.0
    %1164 = vmatpush1.msra.mxu0 %v478
    %1165 = vmatprep.subr.mxu0 0.0
    %1166 = vmatpush1.msra.mxu0 %v477
    %1167 = vmatprep.subr.mxu0 0.0
    %1168 = vmatpush1.msra.mxu0 %v476
    %1169 = vmatprep.subr.mxu0 0.0
    %1170 = vmatpush1.msra.mxu0 %v475
    %1171 = vmatprep.subr.mxu0 0.0
    %1172 = vmatpush1.msra.mxu0 %v474
    %1173 = vmatprep.subr.mxu0 0.0
    %1174 = vmatpush2.msra.mxu0 0.0
    %1175 = vmatprep.subr.mxu0 0.0
    %1176 = vmatpush2.msra.mxu0 0.0
    %1177 = vmatprep.subr.mxu0 0.0
    %1178 = vmatpush2.msra.mxu0 0.0
    %1179 = vmatprep.subr.mxu0 0.0
    %1180 = vmatpush2.msra.mxu0 0.0
    %1181 = vmatprep.subr.mxu0 0.0
    %1182 = vmatpush2.msra.mxu0 0.0
    %1183 = vmatprep.subr.mxu0 0.0
    %1184 = vmatpush2.msra.mxu0 0.0
    %1185 = vmatprep.subr.mxu0 0.0
    %1186 = vmatpush2.msra.mxu0 0.0
    %1187 = vmatprep.subr.mxu0 0.0
    %1188 = vmatpush2.msra.mxu0 0.0
    %1189 = vmatprep.subr.mxu0 0.0
    %1190 = vmatpush2.msra.mxu0 0.0
    %1191 = vmatprep.subr.mxu0 0.0
    %1192 = vmatpush2.msra.mxu0 0.0
    %1193 = vmatprep.subr.mxu0 0.0
    %1194 = vmatpush2.msra.mxu0 0.0
    %1195 = vmatprep.subr.mxu0 0.0
    %1196 = vmatpush2.msra.mxu0 0.0
    %1197 = vmatprep.subr.mxu0 0.0
    %1198 = vmatpush2.msra.mxu0 0.0
    %1199 = vmatprep.subr.mxu0 0.0
    %1200 = vmatpush2.msra.mxu0 0.0
    %1201 = vmatprep.subr.mxu0 0.0
    %1202 = vmatpush2.msra.mxu0 0.0
    %1203 = vmatprep.subr.mxu0 0.0
    %1204 = vmatpush2.msra.mxu0 0.0
    %1205 = vmatprep.mubr.f32.mxu0 0.0
    %1206 = vmatmul.mubr.f32.gmra.mxu0 %v1136
    %v1207 = vpop.f32.mrf.mxu0
    %v1208 = vadd.f32 %v1133, %v1207
    %v1209 = vpop.f32.mrf.mxu0
    %1210 = vmatprep.mubr.f32.mxu0 0.0
    %1211 = vmatmul.mubr.f32.gmra.mxu0 %v1139
    %v1212 = vpop.f32.mrf.mxu0
    %v1213 = vadd.f32 %v1133, %v1212
    %v1214 = vpop.f32.mrf.mxu0
    %1215 = vdwg.mxu0
    %v1216 = vadd.f32 %v1038, %v1208
    %v1217 = vadd.f32 %v1039, %v1213
    %v1218 = vsel %vm485, %v1216, 0.0
    %1219 = vadd.xlane.f32.xlu0 %v1218
    %v1220 = vpop.xlane.xlu0 %1219
    %v1221 = vsel %vm485, %v1217, 0.0
    %1222 = vadd.xlane.f32.xlu0 %v1221
    %v1223 = vpop.xlane.xlu0 %1222
    %v1224 = vmul.f32 %v1220, %v1003
    %v1225 = vmul.f32 %v1223, %v1003
    %v1226 = vsub.f32 %v1216, %v1224
    %v1227 = vsub.f32 %v1217, %v1225
    %v1228 = vmul.f32 %v1226, %v1226
    %v1229 = vmul.f32 %v1227, %v1227
    %v1230 = vsel %vm485, %v1228, 0.0
    %1231 = vadd.xlane.f32.xlu0 %v1230
    %v1232 = vpop.xlane.xlu0 %1231
    %v1233 = vsel %vm485, %v1229, 0.0
    %1234 = vadd.xlane.f32.xlu0 %v1233
    %v1235 = vpop.xlane.xlu0 %1234
    %v1236 = vmul.f32 %v1232, %v1003
    %v1237 = vmul.f32 %v1235, %v1003
    %v1238 = vadd.f32 %v1236, 1e-05
    %v1239 = vadd.f32 %v1237, 1e-05
    %v1240 = vrsqrt.pop %v1238
    %v1241 = vrsqrt.pop %v1239
    %v1242 = vmul.f32 %v1226, %v1240
    %v1243 = vmul.f32 %v1227, %v1241
    %v1245 = vlaneseq
    %v1246 = vshrl.u32 %v1245, 7
    %v1247 = vsub.s32 0, %v1246
    %v1248 = vrot.slane %v483, %v1247
    %v1250 = vmul.f32 %v1242, %v1248
    %v1251 = vmul.f32 %v1243, %v1248
    %v1253 = vlaneseq
    %v1254 = vshrl.u32 %v1253, 7
    %v1255 = vsub.s32 0, %v1254
    %v1256 = vrot.slane %v484, %v1255
    %v1258 = vadd.f32 %v1250, %v1256
    %v1259 = vadd.f32 %v1251, %v1256
    %v1260 = vsel %vm485, %v1258, -inf
    %v1261 = vrot.slane %v1260, 4
    %v1262 = vmax.f32 %v1260, %v1261
    %v1263 = vrot.slane %v1262, 2
    %v1264 = vmax.f32 %v1262, %v1263
    %v1265 = vrot.slane %v1264, 1
    %v1266 = vmax.f32 %v1264, %v1265
    %v1267 = vsel %vm485, %v1259, -inf
    %v1268 = vrot.slane %v1267, 4
    %v1269 = vmax.f32 %v1267, %v1268
    %v1270 = vrot.slane %v1269, 2
    %v1271 = vmax.f32 %v1269, %v1270
    %v1272 = vrot.slane %v1271, 1
    %v1273 = vmax.f32 %v1271, %v1272
    %v1274 = vld [vmem:[#allocation11] sm:$0xff]
    %v1275 = vld [vmem:[#allocation11 + $0x8] sm:$0xff]
    %v1276 = vld [vmem:[#allocation11 + $0x10] sm:$0xff]
    %v1277 = vld [vmem:[#allocation11 + $0x18] sm:$0xff]
    %v1278 = vld [vmem:[%s14] sm:$0x1]
    %v1279 = vld [vmem:[%s15] sm:$0x1]
    %v1280 = vld [vmem:[#allocation13] sm:$0xff]
    %v1281 = vld [vmem:[#allocation13 + $0x8] sm:$0xff]
    %v1282 = vld [vmem:[#allocation13 + $0x10] sm:$0xff]
    %v1283 = vld [vmem:[#allocation13 + $0x18] sm:$0xff]
    %v1284 = vld [vmem:[%s17] sm:$0x1]
    %v1285 = vld [vmem:[%s18] sm:$0xff]
    %v1286 = vld [vmem:[%s18 + $0x8] sm:$0xff]
    %v1287 = vld [vmem:[%s18 + $0x10] sm:$0xff]
    %v1288 = vld [vmem:[%s18 + $0x18] sm:$0xff]
    %v1289 = vld [vmem:[%s18 + $0x20] sm:$0xff]
    %v1290 = vld [vmem:[%s18 + $0x28] sm:$0xff]
    %v1291 = vld [vmem:[%s18 + $0x30] sm:$0xff]
    %v1292 = vld [vmem:[%s18 + $0x38] sm:$0xff]
    %v1293 = vld [vmem:[%s19] sm:$0x1]
    %v1294 = vld [vmem:[%s20] sm:$0x1]
    %v1295 = vld [vmem:[%s21] sm:$0x1]
    %v1297 = vsel %vm485, %v445, 0
    %v1300 = vsel %vm485, %v450, 0
    %v1303 = vsel %vm485, %v455, 0
    %v1306 = vsel %vm485, %v460, 0
    %1308 = vmatprep.subr.mxu0 0.0
    %1309 = vmatpush1.msra.mxu0 0.0
    %1310 = vmatprep.subr.mxu0 0.0
    %1311 = vmatpush1.msra.mxu0 0.0
    %1312 = vmatprep.subr.mxu0 0.0
    %1313 = vmatpush1.msra.mxu0 0.0
    %1314 = vmatprep.subr.mxu0 0.0
    %1315 = vmatpush1.msra.mxu0 0.0
    %1316 = vmatprep.subr.mxu0 0.0
    %1317 = vmatpush1.msra.mxu0 0.0
    %1318 = vmatprep.subr.mxu0 0.0
    %1319 = vmatpush1.msra.mxu0 0.0
    %1320 = vmatprep.subr.mxu0 0.0
    %1321 = vmatpush1.msra.mxu0 0.0
    %1322 = vmatprep.subr.mxu0 0.0
    %1323 = vmatpush1.msra.mxu0 0.0
    %1324 = vmatprep.subr.mxu0 0.0
    %1325 = vmatpush1.msra.mxu0 0.0
    %1326 = vmatprep.subr.mxu0 0.0
    %1327 = vmatpush1.msra.mxu0 0.0
    %1328 = vmatprep.subr.mxu0 0.0
    %1329 = vmatpush1.msra.mxu0 0.0
    %1330 = vmatprep.subr.mxu0 0.0
    %1331 = vmatpush1.msra.mxu0 0.0
    %1332 = vmatprep.subr.mxu0 0.0
    %1333 = vmatpush1.msra.mxu0 %v1277
    %1334 = vmatprep.subr.mxu0 0.0
    %1335 = vmatpush1.msra.mxu0 %v1276
    %1336 = vmatprep.subr.mxu0 0.0
    %1337 = vmatpush1.msra.mxu0 %v1275
    %1338 = vmatprep.subr.mxu0 0.0
    %1339 = vmatpush1.msra.mxu0 %v1274
    %1340 = vmatprep.subr.mxu0 0.0
    %1341 = vmatpush2.msra.mxu0 0.0
    %1342 = vmatprep.subr.mxu0 0.0
    %1343 = vmatpush2.msra.mxu0 0.0
    %1344 = vmatprep.subr.mxu0 0.0
    %1345 = vmatpush2.msra.mxu0 0.0
    %1346 = vmatprep.subr.mxu0 0.0
    %1347 = vmatpush2.msra.mxu0 0.0
    %1348 = vmatprep.subr.mxu0 0.0
    %1349 = vmatpush2.msra.mxu0 0.0
    %1350 = vmatprep.subr.mxu0 0.0
    %1351 = vmatpush2.msra.mxu0 0.0
    %1352 = vmatprep.subr.mxu0 0.0
    %1353 = vmatpush2.msra.mxu0 0.0
    %1354 = vmatprep.subr.mxu0 0.0
    %1355 = vmatpush2.msra.mxu0 0.0
    %1356 = vmatprep.subr.mxu0 0.0
    %1357 = vmatpush2.msra.mxu0 0.0
    %1358 = vmatprep.subr.mxu0 0.0
    %1359 = vmatpush2.msra.mxu0 0.0
    %1360 = vmatprep.subr.mxu0 0.0
    %1361 = vmatpush2.msra.mxu0 0.0
    %1362 = vmatprep.subr.mxu0 0.0
    %1363 = vmatpush2.msra.mxu0 0.0
    %1364 = vmatprep.subr.mxu0 0.0
    %1365 = vmatpush2.msra.mxu0 0.0
    %1366 = vmatprep.subr.mxu0 0.0
    %1367 = vmatpush2.msra.mxu0 0.0
    %1368 = vmatprep.subr.mxu0 0.0
    %1369 = vmatpush2.msra.mxu0 0.0
    %1370 = vmatprep.subr.mxu0 0.0
    %1371 = vmatpush2.msra.mxu0 0.0
    %1372 = vmatprep.mubr.f32.mxu0 0.0
    %1373 = vmatmul.mubr.f32.gmra.mxu0 %v1297
    %v1374 = vpop.f32.mrf.mxu0
    %v1375 = vadd.f32 0.0, %v1374
    %v1376 = vpop.f32.mrf.mxu0
    %1377 = vmatprep.mubr.f32.mxu0 0.0
    %1378 = vmatmul.mubr.f32.gmra.mxu0 %v1300
    %v1379 = vpop.f32.mrf.mxu0
    %v1380 = vadd.f32 0.0, %v1379
    %v1381 = vpop.f32.mrf.mxu0
    %1382 = vmatprep.mubr.f32.mxu0 0.0
    %1383 = vmatmul.mubr.f32.gmra.mxu0 %v1303
    %v1384 = vpop.f32.mrf.mxu0
    %v1385 = vadd.f32 0.0, %v1384
    %v1386 = vpop.f32.mrf.mxu0
    %1387 = vmatprep.mubr.f32.mxu0 0.0
    %1388 = vmatmul.mubr.f32.gmra.mxu0 %v1306
    %v1389 = vpop.f32.mrf.mxu0
    %v1390 = vadd.f32 0.0, %v1389
    %v1391 = vpop.f32.mrf.mxu0
    %1392 = vdwg.mxu0
    %1395 = vrot.lane.b32.xlu0 %v1375, 96
    %v1396 = vpop.permute.xlu0 %1395
    %1397 = vrot.lane.b32.xlu0 %v1380, 96
    %v1398 = vpop.permute.xlu0 %1397
    %v1399 = vsel %vm485, %v1375, 0
    %v1401 = vsel %vm485, %v1380, 0
    %v1403 = vsel %vm485, %v1396, 0
    %v1405 = vsel %vm485, %v1398, 0
    %1407 = vmatprep.subr.mxu0 0.0
    %1408 = vmatpush1.xpose.msra.mxu0 0.0
    %1409 = vmatprep.subr.mxu0 0.0
    %1410 = vmatpush1.xpose.msra.mxu0 0.0
    %1411 = vmatprep.subr.mxu0 0.0
    %1412 = vmatpush1.xpose.msra.mxu0 0.0
    %1413 = vmatprep.subr.mxu0 0.0
    %1414 = vmatpush1.xpose.msra.mxu0 0.0
    %1415 = vmatprep.subr.mxu0 0.0
    %1416 = vmatpush1.xpose.msra.mxu0 0.0
    %1417 = vmatprep.subr.mxu0 0.0
    %1418 = vmatpush1.xpose.msra.mxu0 0.0
    %1419 = vmatprep.subr.mxu0 0.0
    %1420 = vmatpush1.xpose.msra.mxu0 0.0
    %1421 = vmatprep.subr.mxu0 0.0
    %1422 = vmatpush1.xpose.msra.mxu0 0.0
    %1423 = vmatprep.subr.mxu0 0.0
    %1424 = vmatpush1.xpose.msra.mxu0 0.0
    %1425 = vmatprep.subr.mxu0 0.0
    %1426 = vmatpush1.xpose.msra.mxu0 0.0
    %1427 = vmatprep.subr.mxu0 0.0
    %1428 = vmatpush1.xpose.msra.mxu0 0.0
    %1429 = vmatprep.subr.mxu0 0.0
    %1430 = vmatpush1.xpose.msra.mxu0 0.0
    %1431 = vmatprep.subr.mxu0 0.0
    %1432 = vmatpush1.xpose.msra.mxu0 0.0
    %1433 = vmatprep.subr.mxu0 0.0
    %1434 = vmatpush1.xpose.msra.mxu0 0.0
    %1435 = vmatprep.subr.mxu0 0.0
    %1436 = vmatpush1.xpose.msra.mxu0 %v1405
    %1437 = vmatprep.subr.mxu0 0.0
    %1438 = vmatpush1.xpose.msra.mxu0 %v1403
    %1439 = vmatprep.subr.mxu0 0.0
    %1440 = vmatpush2.xpose.msra.mxu0 0.0
    %1441 = vmatprep.subr.mxu0 0.0
    %1442 = vmatpush2.xpose.msra.mxu0 0.0
    %1443 = vmatprep.subr.mxu0 0.0
    %1444 = vmatpush2.xpose.msra.mxu0 0.0
    %1445 = vmatprep.subr.mxu0 0.0
    %1446 = vmatpush2.xpose.msra.mxu0 0.0
    %1447 = vmatprep.subr.mxu0 0.0
    %1448 = vmatpush2.xpose.msra.mxu0 0.0
    %1449 = vmatprep.subr.mxu0 0.0
    %1450 = vmatpush2.xpose.msra.mxu0 0.0
    %1451 = vmatprep.subr.mxu0 0.0
    %1452 = vmatpush2.xpose.msra.mxu0 0.0
    %1453 = vmatprep.subr.mxu0 0.0
    %1454 = vmatpush2.xpose.msra.mxu0 0.0
    %1455 = vmatprep.subr.mxu0 0.0
    %1456 = vmatpush2.xpose.msra.mxu0 0.0
    %1457 = vmatprep.subr.mxu0 0.0
    %1458 = vmatpush2.xpose.msra.mxu0 0.0
    %1459 = vmatprep.subr.mxu0 0.0
    %1460 = vmatpush2.xpose.msra.mxu0 0.0
    %1461 = vmatprep.subr.mxu0 0.0
    %1462 = vmatpush2.xpose.msra.mxu0 0.0
    %1463 = vmatprep.subr.mxu0 0.0
    %1464 = vmatpush2.xpose.msra.mxu0 0.0
    %1465 = vmatprep.subr.mxu0 0.0
    %1466 = vmatpush2.xpose.msra.mxu0 0.0
    %1467 = vmatprep.subr.mxu0 0.0
    %1468 = vmatpush2.xpose.msra.mxu0 0.0
    %1469 = vmatprep.subr.mxu0 0.0
    %1470 = vmatpush2.xpose.msra.mxu0 0.0
    %1471 = vmatprep.mubr.f32.mxu0 0.0
    %1472 = vmatmul.mubr.f32.gmra.mxu0 %v1399
    %v1473 = vpop.f32.mrf.mxu0
    %v1474 = vadd.f32 0.0, %v1473
    %v1475 = vpop.f32.mrf.mxu0
    %1476 = vmatprep.mubr.f32.mxu0 0.0
    %1477 = vmatmul.mubr.f32.gmra.mxu0 %v1401
    %v1478 = vpop.f32.mrf.mxu0
    %v1479 = vadd.f32 0.0, %v1478
    %v1480 = vpop.f32.mrf.mxu0
    %1481 = vdwg.mxu0
    %1484 = vrot.lane.b32.xlu0 %v1385, 96
    %v1485 = vpop.permute.xlu0 %1484
    %1486 = vrot.lane.b32.xlu0 %v1390, 96
    %v1487 = vpop.permute.xlu0 %1486
    %v1488 = vsel %vm485, %v1385, 0
    %v1490 = vsel %vm485, %v1390, 0
    %v1492 = vsel %vm485, %v1485, 0
    %v1494 = vsel %vm485, %v1487, 0
    %1496 = vmatprep.subr.mxu0 0.0
    %1497 = vmatpush1.xpose.msra.mxu0 0.0
    %1498 = vmatprep.subr.mxu0 0.0
    %1499 = vmatpush1.xpose.msra.mxu0 0.0
    %1500 = vmatprep.subr.mxu0 0.0
    %1501 = vmatpush1.xpose.msra.mxu0 0.0
    %1502 = vmatprep.subr.mxu0 0.0
    %1503 = vmatpush1.xpose.msra.mxu0 0.0
    %1504 = vmatprep.subr.mxu0 0.0
    %1505 = vmatpush1.xpose.msra.mxu0 0.0
    %1506 = vmatprep.subr.mxu0 0.0
    %1507 = vmatpush1.xpose.msra.mxu0 0.0
    %1508 = vmatprep.subr.mxu0 0.0
    %1509 = vmatpush1.xpose.msra.mxu0 0.0
    %1510 = vmatprep.subr.mxu0 0.0
    %1511 = vmatpush1.xpose.msra.mxu0 0.0
    %1512 = vmatprep.subr.mxu0 0.0
    %1513 = vmatpush1.xpose.msra.mxu0 0.0
    %1514 = vmatprep.subr.mxu0 0.0
    %1515 = vmatpush1.xpose.msra.mxu0 0.0
    %1516 = vmatprep.subr.mxu0 0.0
    %1517 = vmatpush1.xpose.msra.mxu0 0.0
    %1518 = vmatprep.subr.mxu0 0.0
    %1519 = vmatpush1.xpose.msra.mxu0 0.0
    %1520 = vmatprep.subr.mxu0 0.0
    %1521 = vmatpush1.xpose.msra.mxu0 0.0
    %1522 = vmatprep.subr.mxu0 0.0
    %1523 = vmatpush1.xpose.msra.mxu0 0.0
    %1524 = vmatprep.subr.mxu0 0.0
    %1525 = vmatpush1.xpose.msra.mxu0 %v1494
    %1526 = vmatprep.subr.mxu0 0.0
    %1527 = vmatpush1.xpose.msra.mxu0 %v1492
    %1528 = vmatprep.subr.mxu0 0.0
    %1529 = vmatpush2.xpose.msra.mxu0 0.0
    %1530 = vmatprep.subr.mxu0 0.0
    %1531 = vmatpush2.xpose.msra.mxu0 0.0
    %1532 = vmatprep.subr.mxu0 0.0
    %1533 = vmatpush2.xpose.msra.mxu0 0.0
    %1534 = vmatprep.subr.mxu0 0.0
    %1535 = vmatpush2.xpose.msra.mxu0 0.0
    %1536 = vmatprep.subr.mxu0 0.0
    %1537 = vmatpush2.xpose.msra.mxu0 0.0
    %1538 = vmatprep.subr.mxu0 0.0
    %1539 = vmatpush2.xpose.msra.mxu0 0.0
    %1540 = vmatprep.subr.mxu0 0.0
    %1541 = vmatpush2.xpose.msra.mxu0 0.0
    %1542 = vmatprep.subr.mxu0 0.0
    %1543 = vmatpush2.xpose.msra.mxu0 0.0
    %1544 = vmatprep.subr.mxu0 0.0
    %1545 = vmatpush2.xpose.msra.mxu0 0.0
    %1546 = vmatprep.subr.mxu0 0.0
    %1547 = vmatpush2.xpose.msra.mxu0 0.0
    %1548 = vmatprep.subr.mxu0 0.0
    %1549 = vmatpush2.xpose.msra.mxu0 0.0
    %1550 = vmatprep.subr.mxu0 0.0
    %1551 = vmatpush2.xpose.msra.mxu0 0.0
    %1552 = vmatprep.subr.mxu0 0.0
    %1553 = vmatpush2.xpose.msra.mxu0 0.0
    %1554 = vmatprep.subr.mxu0 0.0
    %1555 = vmatpush2.xpose.msra.mxu0 0.0
    %1556 = vmatprep.subr.mxu0 0.0
    %1557 = vmatpush2.xpose.msra.mxu0 0.0
    %1558 = vmatprep.subr.mxu0 0.0
    %1559 = vmatpush2.xpose.msra.mxu0 0.0
    %1560 = vmatprep.mubr.f32.mxu0 0.0
    %1561 = vmatmul.mubr.f32.gmra.mxu0 %v1488
    %v1562 = vpop.f32.mrf.mxu0
    %v1563 = vadd.f32 0.0, %v1562
    %v1564 = vpop.f32.mrf.mxu0
    %1565 = vmatprep.mubr.f32.mxu0 0.0
    %1566 = vmatmul.mubr.f32.gmra.mxu0 %v1490
    %v1567 = vpop.f32.mrf.mxu0
    %v1568 = vadd.f32 0.0, %v1567
    %v1569 = vpop.f32.mrf.mxu0
    %1570 = vdwg.mxu0
    %v1571 = vmul.f32 %v1474, 0.17677669
    %v1572 = vmul.f32 %v1479, 0.17677669
    %v1573 = vmul.f32 %v1563, 0.17677669
    %v1574 = vmul.f32 %v1568, 0.17677669
    %vm1575 = vcmask 130048
    %v1576 = vsel %vm1575, %v1571, -inf
    %1577 = vmax.xlane.f32.xlu0 %v1576
    %v1578 = vpop.xlane.xlu0 %1577
    %v1579 = vsel %vm1575, %v1572, -inf
    %1580 = vmax.xlane.f32.xlu0 %v1579
    %v1581 = vpop.xlane.xlu0 %1580
    %v1582 = vsel %vm1575, %v1573, -inf
    %1583 = vmax.xlane.f32.xlu0 %v1582
    %v1584 = vpop.xlane.xlu0 %1583
    %v1585 = vsel %vm1575, %v1574, -inf
    %1586 = vmax.xlane.f32.xlu0 %v1585
    %v1587 = vpop.xlane.xlu0 %1586
    %v1588 = vsub.f32 %v1571, %v1578
    %v1589 = vsub.f32 %v1572, %v1581
    %v1590 = vsub.f32 %v1573, %v1584
    %v1591 = vsub.f32 %v1574, %v1587
    %v1592 = vmul.f32 %v1588, 1.442695
    %v1593 = vpow.pop %v1592
    %v1594 = vmul.f32 %v1589, 1.442695
    %v1595 = vpow.pop %v1594
    %v1596 = vmul.f32 %v1590, 1.442695
    %v1597 = vpow.pop %v1596
    %v1598 = vmul.f32 %v1591, 1.442695
    %v1599 = vpow.pop %v1598
    %v1600 = vsel %vm1575, %v1593, 0.0
    %1601 = vadd.xlane.f32.xlu0 %v1600
    %v1602 = vpop.xlane.xlu0 %1601
    %v1603 = vsel %vm1575, %v1595, 0.0
    %1604 = vadd.xlane.f32.xlu0 %v1603
    %v1605 = vpop.xlane.xlu0 %1604
    %v1606 = vsel %vm1575, %v1597, 0.0
    %1607 = vadd.xlane.f32.xlu0 %v1606
    %v1608 = vpop.xlane.xlu0 %1607
    %v1609 = vsel %vm1575, %v1599, 0.0
    %1610 = vadd.xlane.f32.xlu0 %v1609
    %v1611 = vpop.xlane.xlu0 %1610
    %v1612 = vrcp.pop %v1602
    %v1613 = vrcp.pop %v1605
    %v1614 = vrcp.pop %v1608
    %v1615 = vrcp.pop %v1611
    %v1616 = vmul.f32 %v1593, %v1612
    %v1617 = vmul.f32 %v1595, %v1613
    %v1618 = vmul.f32 %v1597, %v1614
    %v1619 = vmul.f32 %v1599, %v1615
    %1620 = vrot.lane.b32.xlu0 %v1375, 64
    %v1621 = vpop.permute.xlu0 %1620
    %1622 = vrot.lane.b32.xlu0 %v1380, 64
    %v1623 = vpop.permute.xlu0 %1622
    %v1627 = vsel %vm1575, %v1616, 0
    %v1630 = vsel %vm1575, %v1617, 0
    %1632 = vmatprep.subr.mxu0 0.0
    %1633 = vmatpush1.msra.mxu0 0.0
    %1634 = vmatprep.subr.mxu0 0.0
    %1635 = vmatpush1.msra.mxu0 0.0
    %1636 = vmatprep.subr.mxu0 0.0
    %1637 = vmatpush1.msra.mxu0 0.0
    %1638 = vmatprep.subr.mxu0 0.0
    %1639 = vmatpush1.msra.mxu0 0.0
    %1640 = vmatprep.subr.mxu0 0.0
    %1641 = vmatpush1.msra.mxu0 0.0
    %1642 = vmatprep.subr.mxu0 0.0
    %1643 = vmatpush1.msra.mxu0 0.0
    %1644 = vmatprep.subr.mxu0 0.0
    %1645 = vmatpush1.msra.mxu0 0.0
    %1646 = vmatprep.subr.mxu0 0.0
    %1647 = vmatpush1.msra.mxu0 0.0
    %1648 = vmatprep.subr.mxu0 0.0
    %1649 = vmatpush1.msra.mxu0 0.0
    %1650 = vmatprep.subr.mxu0 0.0
    %1651 = vmatpush1.msra.mxu0 0.0
    %1652 = vmatprep.subr.mxu0 0.0
    %1653 = vmatpush1.msra.mxu0 0.0
    %1654 = vmatprep.subr.mxu0 0.0
    %1655 = vmatpush1.msra.mxu0 0.0
    %1656 = vmatprep.subr.mxu0 0.0
    %1657 = vmatpush1.msra.mxu0 0.0
    %1658 = vmatprep.subr.mxu0 0.0
    %1659 = vmatpush1.msra.mxu0 0.0
    %1660 = vmatprep.subr.mxu0 0.0
    %1661 = vmatpush1.msra.mxu0 %v1623
    %1662 = vmatprep.subr.mxu0 0.0
    %1663 = vmatpush1.msra.mxu0 %v1621
    %1664 = vmatprep.subr.mxu0 0.0
    %1665 = vmatpush2.msra.mxu0 0.0
    %1666 = vmatprep.subr.mxu0 0.0
    %1667 = vmatpush2.msra.mxu0 0.0
    %1668 = vmatprep.subr.mxu0 0.0
    %1669 = vmatpush2.msra.mxu0 0.0
    %1670 = vmatprep.subr.mxu0 0.0
    %1671 = vmatpush2.msra.mxu0 0.0
    %1672 = vmatprep.subr.mxu0 0.0
    %1673 = vmatpush2.msra.mxu0 0.0
    %1674 = vmatprep.subr.mxu0 0.0
    %1675 = vmatpush2.msra.mxu0 0.0
    %1676 = vmatprep.subr.mxu0 0.0
    %1677 = vmatpush2.msra.mxu0 0.0
    %1678 = vmatprep.subr.mxu0 0.0
    %1679 = vmatpush2.msra.mxu0 0.0
    %1680 = vmatprep.subr.mxu0 0.0
    %1681 = vmatpush2.msra.mxu0 0.0
    %1682 = vmatprep.subr.mxu0 0.0
    %1683 = vmatpush2.msra.mxu0 0.0
    %1684 = vmatprep.subr.mxu0 0.0
    %1685 = vmatpush2.msra.mxu0 0.0
    %1686 = vmatprep.subr.mxu0 0.0
    %1687 = vmatpush2.msra.mxu0 0.0
    %1688 = vmatprep.subr.mxu0 0.0
    %1689 = vmatpush2.msra.mxu0 0.0
    %1690 = vmatprep.subr.mxu0 0.0
    %1691 = vmatpush2.msra.mxu0 0.0
    %1692 = vmatprep.subr.mxu0 0.0
    %1693 = vmatpush2.msra.mxu0 0.0
    %1694 = vmatprep.subr.mxu0 0.0
    %1695 = vmatpush2.msra.mxu0 0.0
    %1696 = vmatprep.mubr.f32.mxu0 0.0
    %1697 = vmatmul.mubr.f32.gmra.mxu0 %v1627
    %v1698 = vpop.f32.mrf.mxu0
    %v1699 = vadd.f32 0.0, %v1698
    %v1700 = vpop.f32.mrf.mxu0
    %1701 = vmatprep.mubr.f32.mxu0 0.0
    %1702 = vmatmul.mubr.f32.gmra.mxu0 %v1630
    %v1703 = vpop.f32.mrf.mxu0
    %v1704 = vadd.f32 0.0, %v1703
    %v1705 = vpop.f32.mrf.mxu0
    %1706 = vdwg.mxu0
    %1707 = vrot.lane.b32.xlu0 %v1385, 64
    %v1708 = vpop.permute.xlu0 %1707
    %1709 = vrot.lane.b32.xlu0 %v1390, 64
    %v1710 = vpop.permute.xlu0 %1709
    %v1714 = vsel %vm1575, %v1618, 0
    %v1717 = vsel %vm1575, %v1619, 0
    %1719 = vmatprep.subr.mxu0 0.0
    %1720 = vmatpush1.msra.mxu0 0.0
    %1721 = vmatprep.subr.mxu0 0.0
    %1722 = vmatpush1.msra.mxu0 0.0
    %1723 = vmatprep.subr.mxu0 0.0
    %1724 = vmatpush1.msra.mxu0 0.0
    %1725 = vmatprep.subr.mxu0 0.0
    %1726 = vmatpush1.msra.mxu0 0.0
    %1727 = vmatprep.subr.mxu0 0.0
    %1728 = vmatpush1.msra.mxu0 0.0
    %1729 = vmatprep.subr.mxu0 0.0
    %1730 = vmatpush1.msra.mxu0 0.0
    %1731 = vmatprep.subr.mxu0 0.0
    %1732 = vmatpush1.msra.mxu0 0.0
    %1733 = vmatprep.subr.mxu0 0.0
    %1734 = vmatpush1.msra.mxu0 0.0
    %1735 = vmatprep.subr.mxu0 0.0
    %1736 = vmatpush1.msra.mxu0 0.0
    %1737 = vmatprep.subr.mxu0 0.0
    %1738 = vmatpush1.msra.mxu0 0.0
    %1739 = vmatprep.subr.mxu0 0.0
    %1740 = vmatpush1.msra.mxu0 0.0
    %1741 = vmatprep.subr.mxu0 0.0
    %1742 = vmatpush1.msra.mxu0 0.0
    %1743 = vmatprep.subr.mxu0 0.0
    %1744 = vmatpush1.msra.mxu0 0.0
    %1745 = vmatprep.subr.mxu0 0.0
    %1746 = vmatpush1.msra.mxu0 0.0
    %1747 = vmatprep.subr.mxu0 0.0
    %1748 = vmatpush1.msra.mxu0 %v1710
    %1749 = vmatprep.subr.mxu0 0.0
    %1750 = vmatpush1.msra.mxu0 %v1708
    %1751 = vmatprep.subr.mxu0 0.0
    %1752 = vmatpush2.msra.mxu0 0.0
    %1753 = vmatprep.subr.mxu0 0.0
    %1754 = vmatpush2.msra.mxu0 0.0
    %1755 = vmatprep.subr.mxu0 0.0
    %1756 = vmatpush2.msra.mxu0 0.0
    %1757 = vmatprep.subr.mxu0 0.0
    %1758 = vmatpush2.msra.mxu0 0.0
    %1759 = vmatprep.subr.mxu0 0.0
    %1760 = vmatpush2.msra.mxu0 0.0
    %1761 = vmatprep.subr.mxu0 0.0
    %1762 = vmatpush2.msra.mxu0 0.0
    %1763 = vmatprep.subr.mxu0 0.0
    %1764 = vmatpush2.msra.mxu0 0.0
    %1765 = vmatprep.subr.mxu0 0.0
    %1766 = vmatpush2.msra.mxu0 0.0
    %1767 = vmatprep.subr.mxu0 0.0
    %1768 = vmatpush2.msra.mxu0 0.0
    %1769 = vmatprep.subr.mxu0 0.0
    %1770 = vmatpush2.msra.mxu0 0.0
    %1771 = vmatprep.subr.mxu0 0.0
    %1772 = vmatpush2.msra.mxu0 0.0
    %1773 = vmatprep.subr.mxu0 0.0
    %1774 = vmatpush2.msra.mxu0 0.0
    %1775 = vmatprep.subr.mxu0 0.0
    %1776 = vmatpush2.msra.mxu0 0.0
    %1777 = vmatprep.subr.mxu0 0.0
    %1778 = vmatpush2.msra.mxu0 0.0
    %1779 = vmatprep.subr.mxu0 0.0
    %1780 = vmatpush2.msra.mxu0 0.0
    %1781 = vmatprep.subr.mxu0 0.0
    %1782 = vmatpush2.msra.mxu0 0.0
    %1783 = vmatprep.mubr.f32.mxu0 0.0
    %1784 = vmatmul.mubr.f32.gmra.mxu0 %v1714
    %v1785 = vpop.f32.mrf.mxu0
    %v1786 = vadd.f32 0.0, %v1785
    %v1787 = vpop.f32.mrf.mxu0
    %1788 = vmatprep.mubr.f32.mxu0 0.0
    %1789 = vmatmul.mubr.f32.gmra.mxu0 %v1717
    %v1790 = vpop.f32.mrf.mxu0
    %v1791 = vadd.f32 0.0, %v1790
    %v1792 = vpop.f32.mrf.mxu0
    %1793 = vdwg.mxu0
    %1798 = vrot.lane.b32.xlu0 %v1274, 32
    %v1799 = vpop.permute.xlu0 %1798
    %1800 = vrot.lane.b32.xlu0 %v1275, 32
    %v1801 = vpop.permute.xlu0 %1800
    %1802 = vrot.lane.b32.xlu0 %v1276, 32
    %v1803 = vpop.permute.xlu0 %1802
    %1804 = vrot.lane.b32.xlu0 %v1277, 32
    %v1805 = vpop.permute.xlu0 %1804
    %v1811 = vsel %vm485, %v1699, 0
    %v1814 = vsel %vm485, %v1704, 0
    %v1817 = vsel %vm485, %v1786, 0
    %v1820 = vsel %vm485, %v1791, 0
    %1822 = vmatprep.subr.mxu0 0.0
    %1823 = vmatpush1.msra.mxu0 0.0
    %1824 = vmatprep.subr.mxu0 0.0
    %1825 = vmatpush1.msra.mxu0 0.0
    %1826 = vmatprep.subr.mxu0 0.0
    %1827 = vmatpush1.msra.mxu0 0.0
    %1828 = vmatprep.subr.mxu0 0.0
    %1829 = vmatpush1.msra.mxu0 0.0
    %1830 = vmatprep.subr.mxu0 0.0
    %1831 = vmatpush1.msra.mxu0 0.0
    %1832 = vmatprep.subr.mxu0 0.0
    %1833 = vmatpush1.msra.mxu0 0.0
    %1834 = vmatprep.subr.mxu0 0.0
    %1835 = vmatpush1.msra.mxu0 0.0
    %1836 = vmatprep.subr.mxu0 0.0
    %1837 = vmatpush1.msra.mxu0 0.0
    %1838 = vmatprep.subr.mxu0 0.0
    %1839 = vmatpush1.msra.mxu0 0.0
    %1840 = vmatprep.subr.mxu0 0.0
    %1841 = vmatpush1.msra.mxu0 0.0
    %1842 = vmatprep.subr.mxu0 0.0
    %1843 = vmatpush1.msra.mxu0 0.0
    %1844 = vmatprep.subr.mxu0 0.0
    %1845 = vmatpush1.msra.mxu0 0.0
    %1846 = vmatprep.subr.mxu0 0.0
    %1847 = vmatpush1.msra.mxu0 %v1805
    %1848 = vmatprep.subr.mxu0 0.0
    %1849 = vmatpush1.msra.mxu0 %v1803
    %1850 = vmatprep.subr.mxu0 0.0
    %1851 = vmatpush1.msra.mxu0 %v1801
    %1852 = vmatprep.subr.mxu0 0.0
    %1853 = vmatpush1.msra.mxu0 %v1799
    %1854 = vmatprep.subr.mxu0 0.0
    %1855 = vmatpush2.msra.mxu0 0.0
    %1856 = vmatprep.subr.mxu0 0.0
    %1857 = vmatpush2.msra.mxu0 0.0
    %1858 = vmatprep.subr.mxu0 0.0
    %1859 = vmatpush2.msra.mxu0 0.0
    %1860 = vmatprep.subr.mxu0 0.0
    %1861 = vmatpush2.msra.mxu0 0.0
    %1862 = vmatprep.subr.mxu0 0.0
    %1863 = vmatpush2.msra.mxu0 0.0
    %1864 = vmatprep.subr.mxu0 0.0
    %1865 = vmatpush2.msra.mxu0 0.0
    %1866 = vmatprep.subr.mxu0 0.0
    %1867 = vmatpush2.msra.mxu0 0.0
    %1868 = vmatprep.subr.mxu0 0.0
    %1869 = vmatpush2.msra.mxu0 0.0
    %1870 = vmatprep.subr.mxu0 0.0
    %1871 = vmatpush2.msra.mxu0 0.0
    %1872 = vmatprep.subr.mxu0 0.0
    %1873 = vmatpush2.msra.mxu0 0.0
    %1874 = vmatprep.subr.mxu0 0.0
    %1875 = vmatpush2.msra.mxu0 0.0
    %1876 = vmatprep.subr.mxu0 0.0
    %1877 = vmatpush2.msra.mxu0 0.0
    %1878 = vmatprep.subr.mxu0 0.0
    %1879 = vmatpush2.msra.mxu0 0.0
    %1880 = vmatprep.subr.mxu0 0.0
    %1881 = vmatpush2.msra.mxu0 0.0
    %1882 = vmatprep.subr.mxu0 0.0
    %1883 = vmatpush2.msra.mxu0 0.0
    %1884 = vmatprep.subr.mxu0 0.0
    %1885 = vmatpush2.msra.mxu0 0.0
    %1886 = vmatprep.mubr.f32.mxu0 0.0
    %1887 = vmatmul.mubr.f32.gmra.mxu0 %v1811
    %v1888 = vpop.f32.mrf.mxu0
    %v1889 = vadd.f32 0.0, %v1888
    %v1890 = vpop.f32.mrf.mxu0
    %1891 = vmatprep.mubr.f32.mxu0 0.0
    %1892 = vmatmul.mubr.f32.gmra.mxu0 %v1814
    %v1893 = vpop.f32.mrf.mxu0
    %v1894 = vadd.f32 0.0, %v1893
    %v1895 = vpop.f32.mrf.mxu0
    %1896 = vmatprep.mubr.f32.mxu0 0.0
    %1897 = vmatmul.mubr.f32.gmra.mxu0 %v1817
    %v1898 = vpop.f32.mrf.mxu0
    %v1899 = vadd.f32 0.0, %v1898
    %v1900 = vpop.f32.mrf.mxu0
    %1901 = vmatprep.mubr.f32.mxu0 0.0
    %1902 = vmatmul.mubr.f32.gmra.mxu0 %v1820
    %v1903 = vpop.f32.mrf.mxu0
    %v1904 = vadd.f32 0.0, %v1903
    %v1905 = vpop.f32.mrf.mxu0
    %1906 = vdwg.mxu0
    %v1907 = vadd.f32 %v445, %v1889
    %v1908 = vadd.f32 %v450, %v1894
    %v1909 = vadd.f32 %v455, %v1899
    %v1910 = vadd.f32 %v460, %v1904
    %v1911 = vsel %vm485, %v1907, 0.0
    %1912 = vadd.xlane.f32.xlu0 %v1911
    %v1913 = vpop.xlane.xlu0 %1912
    %v1914 = vsel %vm485, %v1908, 0.0
    %1915 = vadd.xlane.f32.xlu0 %v1914
    %v1916 = vpop.xlane.xlu0 %1915
    %v1917 = vsel %vm485, %v1909, 0.0
    %1918 = vadd.xlane.f32.xlu0 %v1917
    %v1919 = vpop.xlane.xlu0 %1918
    %v1920 = vsel %vm485, %v1910, 0.0
    %1921 = vadd.xlane.f32.xlu0 %v1920
    %v1922 = vpop.xlane.xlu0 %1921
    %v1923 = vmul.f32 %v1913, %v1003
    %v1924 = vmul.f32 %v1916, %v1003
    %v1925 = vmul.f32 %v1919, %v1003
    %v1926 = vmul.f32 %v1922, %v1003
    %v1927 = vsub.f32 %v1907, %v1923
    %v1928 = vsub.f32 %v1908, %v1924
    %v1929 = vsub.f32 %v1909, %v1925
    %v1930 = vsub.f32 %v1910, %v1926
    %v1931 = vmul.f32 %v1927, %v1927
    %v1932 = vmul.f32 %v1928, %v1928
    %v1933 = vmul.f32 %v1929, %v1929
    %v1934 = vmul.f32 %v1930, %v1930
    %v1935 = vsel %vm485, %v1931, 0.0
    %1936 = vadd.xlane.f32.xlu0 %v1935
    %v1937 = vpop.xlane.xlu0 %1936
    %v1938 = vsel %vm485, %v1932, 0.0
    %1939 = vadd.xlane.f32.xlu0 %v1938
    %v1940 = vpop.xlane.xlu0 %1939
    %v1941 = vsel %vm485, %v1933, 0.0
    %1942 = vadd.xlane.f32.xlu0 %v1941
    %v1943 = vpop.xlane.xlu0 %1942
    %v1944 = vsel %vm485, %v1934, 0.0
    %1945 = vadd.xlane.f32.xlu0 %v1944
    %v1946 = vpop.xlane.xlu0 %1945
    %v1947 = vmul.f32 %v1937, %v1003
    %v1948 = vmul.f32 %v1940, %v1003
    %v1949 = vmul.f32 %v1943, %v1003
    %v1950 = vmul.f32 %v1946, %v1003
    %v1951 = vadd.f32 %v1947, 1e-05
    %v1952 = vadd.f32 %v1948, 1e-05
    %v1953 = vadd.f32 %v1949, 1e-05
    %v1954 = vadd.f32 %v1950, 1e-05
    %v1955 = vrsqrt.pop %v1951
    %v1956 = vrsqrt.pop %v1952
    %v1957 = vrsqrt.pop %v1953
    %v1958 = vrsqrt.pop %v1954
    %v1959 = vmul.f32 %v1927, %v1955
    %v1960 = vmul.f32 %v1928, %v1956
    %v1961 = vmul.f32 %v1929, %v1957
    %v1962 = vmul.f32 %v1930, %v1958
    %v1964 = vlaneseq
    %v1965 = vshrl.u32 %v1964, 7
    %v1966 = vsub.s32 0, %v1965
    %v1967 = vrot.slane %v1278, %v1966
    %v1969 = vmul.f32 %v1959, %v1967
    %v1970 = vmul.f32 %v1960, %v1967
    %v1971 = vmul.f32 %v1961, %v1967
    %v1972 = vmul.f32 %v1962, %v1967
    %v1974 = vlaneseq
    %v1975 = vshrl.u32 %v1974, 7
    %v1976 = vsub.s32 0, %v1975
    %v1977 = vrot.slane %v1279, %v1976
    %v1979 = vadd.f32 %v1969, %v1977
    %v1980 = vadd.f32 %v1970, %v1977
    %v1981 = vadd.f32 %v1971, %v1977
    %v1982 = vadd.f32 %v1972, %v1977
    %v1984 = vlaneseq
    %v1985 = vshrl.u32 %v1984, 7
    %v1986 = vsub.s32 0, %v1985
    %v1987 = vrot.slane %v1284, %v1986
    %v1990 = vsel %vm485, %v1979, 0
    %v1993 = vsel %vm485, %v1980, 0
    %v1996 = vsel %vm485, %v1981, 0
    %v1999 = vsel %vm485, %v1982, 0
    %2001 = vmatprep.subr.mxu0 0.0
    %2002 = vmatpush1.msra.mxu0 0.0
    %2003 = vmatprep.subr.mxu0 0.0
    %2004 = vmatpush1.msra.mxu0 0.0
    %2005 = vmatprep.subr.mxu0 0.0
    %2006 = vmatpush1.msra.mxu0 0.0
    %2007 = vmatprep.subr.mxu0 0.0
    %2008 = vmatpush1.msra.mxu0 0.0
    %2009 = vmatprep.subr.mxu0 0.0
    %2010 = vmatpush1.msra.mxu0 0.0
    %2011 = vmatprep.subr.mxu0 0.0
    %2012 = vmatpush1.msra.mxu0 0.0
    %2013 = vmatprep.subr.mxu0 0.0
    %2014 = vmatpush1.msra.mxu0 0.0
    %2015 = vmatprep.subr.mxu0 0.0
    %2016 = vmatpush1.msra.mxu0 0.0
    %2017 = vmatprep.subr.mxu0 0.0
    %2018 = vmatpush1.msra.mxu0 0.0
    %2019 = vmatprep.subr.mxu0 0.0
    %2020 = vmatpush1.msra.mxu0 0.0
    %2021 = vmatprep.subr.mxu0 0.0
    %2022 = vmatpush1.msra.mxu0 0.0
    %2023 = vmatprep.subr.mxu0 0.0
    %2024 = vmatpush1.msra.mxu0 0.0
    %2025 = vmatprep.subr.mxu0 0.0
    %2026 = vmatpush1.msra.mxu0 %v1283
    %2027 = vmatprep.subr.mxu0 0.0
    %2028 = vmatpush1.msra.mxu0 %v1282
    %2029 = vmatprep.subr.mxu0 0.0
    %2030 = vmatpush1.msra.mxu0 %v1281
    %2031 = vmatprep.subr.mxu0 0.0
    %2032 = vmatpush1.msra.mxu0 %v1280
    %2033 = vmatprep.subr.mxu0 0.0
    %2034 = vmatpush2.msra.mxu0 0.0
    %2035 = vmatprep.subr.mxu0 0.0
    %2036 = vmatpush2.msra.mxu0 0.0
    %2037 = vmatprep.subr.mxu0 0.0
    %2038 = vmatpush2.msra.mxu0 0.0
    %2039 = vmatprep.subr.mxu0 0.0
    %2040 = vmatpush2.msra.mxu0 0.0
    %2041 = vmatprep.subr.mxu0 0.0
    %2042 = vmatpush2.msra.mxu0 0.0
    %2043 = vmatprep.subr.mxu0 0.0
    %2044 = vmatpush2.msra.mxu0 0.0
    %2045 = vmatprep.subr.mxu0 0.0
    %2046 = vmatpush2.msra.mxu0 0.0
    %2047 = vmatprep.subr.mxu0 0.0
    %2048 = vmatpush2.msra.mxu0 0.0
    %2049 = vmatprep.subr.mxu0 0.0
    %2050 = vmatpush2.msra.mxu0 0.0
    %2051 = vmatprep.subr.mxu0 0.0
    %2052 = vmatpush2.msra.mxu0 0.0
    %2053 = vmatprep.subr.mxu0 0.0
    %2054 = vmatpush2.msra.mxu0 0.0
    %2055 = vmatprep.subr.mxu0 0.0
    %2056 = vmatpush2.msra.mxu0 0.0
    %2057 = vmatprep.subr.mxu0 0.0
    %2058 = vmatpush2.msra.mxu0 0.0
    %2059 = vmatprep.subr.mxu0 0.0
    %2060 = vmatpush2.msra.mxu0 0.0
    %2061 = vmatprep.subr.mxu0 0.0
    %2062 = vmatpush2.msra.mxu0 0.0
    %2063 = vmatprep.subr.mxu0 0.0
    %2064 = vmatpush2.msra.mxu0 0.0
    %2065 = vmatprep.mubr.f32.mxu0 0.0
    %2066 = vmatmul.mubr.f32.gmra.mxu0 %v1990
    %v2067 = vpop.f32.mrf.mxu0
    %v2068 = vadd.f32 %v1987, %v2067
    %v2069 = vpop.f32.mrf.mxu0
    %2070 = vmatprep.mubr.f32.mxu0 0.0
    %2071 = vmatmul.mubr.f32.gmra.mxu0 %v1993
    %v2072 = vpop.f32.mrf.mxu0
    %v2073 = vadd.f32 %v1987, %v2072
    %v2074 = vpop.f32.mrf.mxu0
    %2075 = vmatprep.mubr.f32.mxu0 0.0
    %2076 = vmatmul.mubr.f32.gmra.mxu0 %v1996
    %v2077 = vpop.f32.mrf.mxu0
    %v2078 = vadd.f32 %v1987, %v2077
    %v2079 = vpop.f32.mrf.mxu0
    %2080 = vmatprep.mubr.f32.mxu0 0.0
    %2081 = vmatmul.mubr.f32.gmra.mxu0 %v1999
    %v2082 = vpop.f32.mrf.mxu0
    %v2083 = vadd.f32 %v1987, %v2082
    %v2084 = vpop.f32.mrf.mxu0
    %2085 = vdwg.mxu0
    %v2086 = vmax.f32 %v2068, 0.0
    %v2087 = vmax.f32 %v2073, 0.0
    %v2088 = vmax.f32 %v2078, 0.0
    %v2089 = vmax.f32 %v2083, 0.0
    %v2091 = vlaneseq
    %v2092 = vshrl.u32 %v2091, 7
    %v2093 = vsub.s32 0, %v2092
    %v2094 = vrot.slane %v1293, %v2093
    %v2097 = vsel %vm247, %v2086, 0
    %v2100 = vsel %vm247, %v2087, 0
    %v2103 = vsel %vm247, %v2088, 0
    %v2106 = vsel %vm247, %v2089, 0
    %2108 = vmatprep.subr.mxu0 0.0
    %2109 = vmatpush1.msra.mxu0 0.0
    %2110 = vmatprep.subr.mxu0 0.0
    %2111 = vmatpush1.msra.mxu0 0.0
    %2112 = vmatprep.subr.mxu0 0.0
    %2113 = vmatpush1.msra.mxu0 0.0
    %2114 = vmatprep.subr.mxu0 0.0
    %2115 = vmatpush1.msra.mxu0 0.0
    %2116 = vmatprep.subr.mxu0 0.0
    %2117 = vmatpush1.msra.mxu0 0.0
    %2118 = vmatprep.subr.mxu0 0.0
    %2119 = vmatpush1.msra.mxu0 0.0
    %2120 = vmatprep.subr.mxu0 0.0
    %2121 = vmatpush1.msra.mxu0 0.0
    %2122 = vmatprep.subr.mxu0 0.0
    %2123 = vmatpush1.msra.mxu0 0.0
    %2124 = vmatprep.subr.mxu0 0.0
    %2125 = vmatpush1.msra.mxu0 %v1292
    %2126 = vmatprep.subr.mxu0 0.0
    %2127 = vmatpush1.msra.mxu0 %v1291
    %2128 = vmatprep.subr.mxu0 0.0
    %2129 = vmatpush1.msra.mxu0 %v1290
    %2130 = vmatprep.subr.mxu0 0.0
    %2131 = vmatpush1.msra.mxu0 %v1289
    %2132 = vmatprep.subr.mxu0 0.0
    %2133 = vmatpush1.msra.mxu0 %v1288
    %2134 = vmatprep.subr.mxu0 0.0
    %2135 = vmatpush1.msra.mxu0 %v1287
    %2136 = vmatprep.subr.mxu0 0.0
    %2137 = vmatpush1.msra.mxu0 %v1286
    %2138 = vmatprep.subr.mxu0 0.0
    %2139 = vmatpush1.msra.mxu0 %v1285
    %2140 = vmatprep.subr.mxu0 0.0
    %2141 = vmatpush2.msra.mxu0 0.0
    %2142 = vmatprep.subr.mxu0 0.0
    %2143 = vmatpush2.msra.mxu0 0.0
    %2144 = vmatprep.subr.mxu0 0.0
    %2145 = vmatpush2.msra.mxu0 0.0
    %2146 = vmatprep.subr.mxu0 0.0
    %2147 = vmatpush2.msra.mxu0 0.0
    %2148 = vmatprep.subr.mxu0 0.0
    %2149 = vmatpush2.msra.mxu0 0.0
    %2150 = vmatprep.subr.mxu0 0.0
    %2151 = vmatpush2.msra.mxu0 0.0
    %2152 = vmatprep.subr.mxu0 0.0
    %2153 = vmatpush2.msra.mxu0 0.0
    %2154 = vmatprep.subr.mxu0 0.0
    %2155 = vmatpush2.msra.mxu0 0.0
    %2156 = vmatprep.subr.mxu0 0.0
    %2157 = vmatpush2.msra.mxu0 0.0
    %2158 = vmatprep.subr.mxu0 0.0
    %2159 = vmatpush2.msra.mxu0 0.0
    %2160 = vmatprep.subr.mxu0 0.0
    %2161 = vmatpush2.msra.mxu0 0.0
    %2162 = vmatprep.subr.mxu0 0.0
    %2163 = vmatpush2.msra.mxu0 0.0
    %2164 = vmatprep.subr.mxu0 0.0
    %2165 = vmatpush2.msra.mxu0 0.0
    %2166 = vmatprep.subr.mxu0 0.0
    %2167 = vmatpush2.msra.mxu0 0.0
    %2168 = vmatprep.subr.mxu0 0.0
    %2169 = vmatpush2.msra.mxu0 0.0
    %2170 = vmatprep.subr.mxu0 0.0
    %2171 = vmatpush2.msra.mxu0 0.0
    %2172 = vmatprep.mubr.f32.mxu0 0.0
    %2173 = vmatmul.mubr.f32.gmra.mxu0 %v2097
    %v2174 = vpop.f32.mrf.mxu0
    %v2175 = vadd.f32 %v2094, %v2174
    %v2176 = vpop.f32.mrf.mxu0
    %2177 = vmatprep.mubr.f32.mxu0 0.0
    %2178 = vmatmul.mubr.f32.gmra.mxu0 %v2100
    %v2179 = vpop.f32.mrf.mxu0
    %v2180 = vadd.f32 %v2094, %v2179
    %v2181 = vpop.f32.mrf.mxu0
    %2182 = vmatprep.mubr.f32.mxu0 0.0
    %2183 = vmatmul.mubr.f32.gmra.mxu0 %v2103
    %v2184 = vpop.f32.mrf.mxu0
    %v2185 = vadd.f32 %v2094, %v2184
    %v2186 = vpop.f32.mrf.mxu0
    %2187 = vmatprep.mubr.f32.mxu0 0.0
    %2188 = vmatmul.mubr.f32.gmra.mxu0 %v2106
    %v2189 = vpop.f32.mrf.mxu0
    %v2190 = vadd.f32 %v2094, %v2189
    %v2191 = vpop.f32.mrf.mxu0
    %2192 = vdwg.mxu0
    %v2193 = vadd.f32 %v1979, %v2175
    %v2194 = vadd.f32 %v1980, %v2180
    %v2195 = vadd.f32 %v1981, %v2185
    %v2196 = vadd.f32 %v1982, %v2190
    %v2197 = vsel %vm485, %v2193, 0.0
    %2198 = vadd.xlane.f32.xlu0 %v2197
    %v2199 = vpop.xlane.xlu0 %2198
    %v2200 = vsel %vm485, %v2194, 0.0
    %2201 = vadd.xlane.f32.xlu0 %v2200
    %v2202 = vpop.xlane.xlu0 %2201
    %v2203 = vsel %vm485, %v2195, 0.0
    %2204 = vadd.xlane.f32.xlu0 %v2203
    %v2205 = vpop.xlane.xlu0 %2204
    %v2206 = vsel %vm485, %v2196, 0.0
    %2207 = vadd.xlane.f32.xlu0 %v2206
    %v2208 = vpop.xlane.xlu0 %2207
    %v2209 = vmul.f32 %v2199, %v1003
    %v2210 = vmul.f32 %v2202, %v1003
    %v2211 = vmul.f32 %v2205, %v1003
    %v2212 = vmul.f32 %v2208, %v1003
    %v2213 = vsub.f32 %v2193, %v2209
    %v2214 = vsub.f32 %v2194, %v2210
    %v2215 = vsub.f32 %v2195, %v2211
    %v2216 = vsub.f32 %v2196, %v2212
    %v2217 = vmul.f32 %v2213, %v2213
    %v2218 = vmul.f32 %v2214, %v2214
    %v2219 = vmul.f32 %v2215, %v2215
    %v2220 = vmul.f32 %v2216, %v2216
    %v2221 = vsel %vm485, %v2217, 0.0
    %2222 = vadd.xlane.f32.xlu0 %v2221
    %v2223 = vpop.xlane.xlu0 %2222
    %v2224 = vsel %vm485, %v2218, 0.0
    %2225 = vadd.xlane.f32.xlu0 %v2224
    %v2226 = vpop.xlane.xlu0 %2225
    %v2227 = vsel %vm485, %v2219, 0.0
    %2228 = vadd.xlane.f32.xlu0 %v2227
    %v2229 = vpop.xlane.xlu0 %2228
    %v2230 = vsel %vm485, %v2220, 0.0
    %2231 = vadd.xlane.f32.xlu0 %v2230
    %v2232 = vpop.xlane.xlu0 %2231
    %v2233 = vmul.f32 %v2223, %v1003
    %v2234 = vmul.f32 %v2226, %v1003
    %v2235 = vmul.f32 %v2229, %v1003
    %v2236 = vmul.f32 %v2232, %v1003
    %v2237 = vadd.f32 %v2233, 1e-05
    %v2238 = vadd.f32 %v2234, 1e-05
    %v2239 = vadd.f32 %v2235, 1e-05
    %v2240 = vadd.f32 %v2236, 1e-05
    %v2241 = vrsqrt.pop %v2237
    %v2242 = vrsqrt.pop %v2238
    %v2243 = vrsqrt.pop %v2239
    %v2244 = vrsqrt.pop %v2240
    %v2245 = vmul.f32 %v2213, %v2241
    %v2246 = vmul.f32 %v2214, %v2242
    %v2247 = vmul.f32 %v2215, %v2243
    %v2248 = vmul.f32 %v2216, %v2244
    %v2250 = vlaneseq
    %v2251 = vshrl.u32 %v2250, 7
    %v2252 = vsub.s32 0, %v2251
    %v2253 = vrot.slane %v1294, %v2252
    %v2255 = vmul.f32 %v2245, %v2253
    %v2256 = vmul.f32 %v2246, %v2253
    %v2257 = vmul.f32 %v2247, %v2253
    %v2258 = vmul.f32 %v2248, %v2253
    %v2260 = vlaneseq
    %v2261 = vshrl.u32 %v2260, 7
    %v2262 = vsub.s32 0, %v2261
    %v2263 = vrot.slane %v1295, %v2262
    %v2265 = vadd.f32 %v2255, %v2263
    %v2266 = vadd.f32 %v2256, %v2263
    %v2267 = vadd.f32 %v2257, %v2263
    %v2268 = vadd.f32 %v2258, %v2263
    %v2269 = vsel %vm485, %v2265, -inf
    %v2270 = vsel %vm485, %v2266, -inf
    %v2271 = vmax.f32 %v2269, %v2270
    %v2272 = vrot.slane %v2271, 4
    %v2273 = vmax.f32 %v2271, %v2272
    %v2274 = vrot.slane %v2273, 2
    %v2275 = vmax.f32 %v2273, %v2274
    %v2276 = vrot.slane %v2275, 1
    %v2277 = vmax.f32 %v2275, %v2276
    %v2278 = vsel %vm485, %v2267, -inf
    %v2279 = vsel %vm485, %v2268, -inf
    %v2280 = vmax.f32 %v2278, %v2279
    %v2281 = vrot.slane %v2280, 4
    %v2282 = vmax.f32 %v2280, %v2281
    %v2283 = vrot.slane %v2282, 2
    %v2284 = vmax.f32 %v2282, %v2283
    %v2285 = vrot.slane %v2284, 1
    %v2286 = vmax.f32 %v2284, %v2285
    %v2287 = vld [vmem:[#allocation14] sm:$0xff]
    %v2288 = vld [vmem:[#allocation14 + $0x8] sm:$0xff]
    %v2289 = vld [vmem:[#allocation14 + $0x10] sm:$0xff]
    %v2290 = vld [vmem:[#allocation14 + $0x18] sm:$0xff]
    %v2291 = vld [vmem:[#allocation14 + $0x20] sm:$0xff]
    %v2292 = vld [vmem:[#allocation14 + $0x28] sm:$0xff]
    %v2293 = vld [vmem:[#allocation14 + $0x30] sm:$0xff]
    %v2294 = vld [vmem:[#allocation14 + $0x38] sm:$0xff]
    %v2295 = vld [vmem:[#allocation14 + $0x40] sm:$0xff]
    %v2296 = vld [vmem:[#allocation14 + $0x48] sm:$0xff]
    %v2297 = vld [vmem:[#allocation14 + $0x50] sm:$0xff]
    %v2298 = vld [vmem:[#allocation14 + $0x58] sm:$0xff]
    %v2299 = vld [vmem:[#allocation14 + $0x60] sm:$0xff]
    %v2300 = vld [vmem:[#allocation14 + $0x68] sm:$0xff]
    %v2301 = vld [vmem:[#allocation14 + $0x70] sm:$0xff]
    %v2302 = vld [vmem:[#allocation14 + $0x78] sm:$0xff]
    %v2303 = vld [vmem:[#allocation16] sm:$0xff]
    %v2304 = vld [vmem:[#allocation16 + $0x8] sm:$0xff]
    %v2305 = vld [vmem:[#allocation16 + $0x10] sm:$0xff]
    %v2306 = vld [vmem:[#allocation16 + $0x18] sm:$0xff]
    %v2307 = vld [vmem:[#allocation16 + $0x20] sm:$0xff]
    %v2308 = vld [vmem:[#allocation16 + $0x28] sm:$0xff]
    %v2309 = vld [vmem:[#allocation16 + $0x30] sm:$0xff]
    %v2310 = vld [vmem:[#allocation16 + $0x38] sm:$0xff]
    %v2311 = vld [vmem:[#allocation16 + $0x40] sm:$0xff]
    %v2312 = vld [vmem:[#allocation16 + $0x48] sm:$0xff]
    %v2313 = vld [vmem:[#allocation16 + $0x50] sm:$0xff]
    %v2314 = vld [vmem:[#allocation16 + $0x58] sm:$0xff]
    %v2315 = vld [vmem:[#allocation16 + $0x60] sm:$0xff]
    %v2316 = vld [vmem:[#allocation16 + $0x68] sm:$0xff]
    %v2317 = vld [vmem:[#allocation16 + $0x70] sm:$0xff]
    %v2318 = vld [vmem:[#allocation16 + $0x78] sm:$0xff]
    %vm2321 = vcmask 1041409
    %v2322 = vsel %vm2321, %v2286, %v2277
    %v2323 = vsel %vm485, %v2322, 0
    %2325 = vmatprep.subr.mxu0 0.0
    %2326 = vmatpush1.msra.mxu0 0.0
    %2327 = vmatprep.subr.mxu0 0.0
    %2328 = vmatpush1.msra.mxu0 0.0
    %2329 = vmatprep.subr.mxu0 0.0
    %2330 = vmatpush1.msra.mxu0 0.0
    %2331 = vmatprep.subr.mxu0 0.0
    %2332 = vmatpush1.msra.mxu0 0.0
    %2333 = vmatprep.subr.mxu0 0.0
    %2334 = vmatpush1.msra.mxu0 0.0
    %2335 = vmatprep.subr.mxu0 0.0
    %2336 = vmatpush1.msra.mxu0 0.0
    %2337 = vmatprep.subr.mxu0 0.0
    %2338 = vmatpush1.msra.mxu0 0.0
    %2339 = vmatprep.subr.mxu0 0.0
    %2340 = vmatpush1.msra.mxu0 0.0
    %2341 = vmatprep.subr.mxu0 0.0
    %2342 = vmatpush1.msra.mxu0 0.0
    %2343 = vmatprep.subr.mxu0 0.0
    %2344 = vmatpush1.msra.mxu0 0.0
    %2345 = vmatprep.subr.mxu0 0.0
    %2346 = vmatpush1.msra.mxu0 0.0
    %2347 = vmatprep.subr.mxu0 0.0
    %2348 = vmatpush1.msra.mxu0 0.0
    %2349 = vmatprep.subr.mxu0 %v2316
    %2350 = vmatpush1.msra.mxu0 %v2315
    %2351 = vmatprep.subr.mxu0 %v2312
    %2352 = vmatpush1.msra.mxu0 %v2311
    %2353 = vmatprep.subr.mxu0 %v2308
    %2354 = vmatpush1.msra.mxu0 %v2307
    %2355 = vmatprep.subr.mxu0 %v2304
    %2356 = vmatpush1.msra.mxu0 %v2303
    %2357 = vmatprep.subr.mxu0 0.0
    %2358 = vmatpush2.msra.mxu0 0.0
    %2359 = vmatprep.subr.mxu0 0.0
    %2360 = vmatpush2.msra.mxu0 0.0
    %2361 = vmatprep.subr.mxu0 0.0
    %2362 = vmatpush2.msra.mxu0 0.0
    %2363 = vmatprep.subr.mxu0 0.0
    %2364 = vmatpush2.msra.mxu0 0.0
    %2365 = vmatprep.subr.mxu0 0.0
    %2366 = vmatpush2.msra.mxu0 0.0
    %2367 = vmatprep.subr.mxu0 0.0
    %2368 = vmatpush2.msra.mxu0 0.0
    %2369 = vmatprep.subr.mxu0 0.0
    %2370 = vmatpush2.msra.mxu0 0.0
    %2371 = vmatprep.subr.mxu0 0.0
    %2372 = vmatpush2.msra.mxu0 0.0
    %2373 = vmatprep.subr.mxu0 0.0
    %2374 = vmatpush2.msra.mxu0 0.0
    %2375 = vmatprep.subr.mxu0 0.0
    %2376 = vmatpush2.msra.mxu0 0.0
    %2377 = vmatprep.subr.mxu0 0.0
    %2378 = vmatpush2.msra.mxu0 0.0
    %2379 = vmatprep.subr.mxu0 0.0
    %2380 = vmatpush2.msra.mxu0 0.0
    %2381 = vmatprep.subr.mxu0 0.0
    %2382 = vmatpush2.msra.mxu0 0.0
    %2383 = vmatprep.subr.mxu0 0.0
    %2384 = vmatpush2.msra.mxu0 0.0
    %2385 = vmatprep.subr.mxu0 0.0
    %2386 = vmatpush2.msra.mxu0 0.0
    %2387 = vmatprep.subr.mxu0 0.0
    %2388 = vmatpush2.msra.mxu0 0.0
    %2389 = vmatprep.mubr.f32.mxu0 0.0
    %2390 = vmatmul.mubr.f32.gmra.mxu0 %v2323
    %v2391 = vpop.f32.mrf.mxu0
    %v2392 = vadd.f32 0.0, %v2391
    %v2393 = vpop.f32.mrf.mxu0
    %v2394 = vadd.f32 0.0, %v2393
    %2395 = vdwg.mxu0
    %2396 = vmatprep.subr.mxu0 0.0
    %2397 = vmatpush1.msra.mxu0 0.0
    %2398 = vmatprep.subr.mxu0 0.0
    %2399 = vmatpush1.msra.mxu0 0.0
    %2400 = vmatprep.subr.mxu0 0.0
    %2401 = vmatpush1.msra.mxu0 0.0
    %2402 = vmatprep.subr.mxu0 0.0
    %2403 = vmatpush1.msra.mxu0 0.0
    %2404 = vmatprep.subr.mxu0 0.0
    %2405 = vmatpush1.msra.mxu0 0.0
    %2406 = vmatprep.subr.mxu0 0.0
    %2407 = vmatpush1.msra.mxu0 0.0
    %2408 = vmatprep.subr.mxu0 0.0
    %2409 = vmatpush1.msra.mxu0 0.0
    %2410 = vmatprep.subr.mxu0 0.0
    %2411 = vmatpush1.msra.mxu0 0.0
    %2412 = vmatprep.subr.mxu0 0.0
    %2413 = vmatpush1.msra.mxu0 0.0
    %2414 = vmatprep.subr.mxu0 0.0
    %2415 = vmatpush1.msra.mxu0 0.0
    %2416 = vmatprep.subr.mxu0 0.0
    %2417 = vmatpush1.msra.mxu0 0.0
    %2418 = vmatprep.subr.mxu0 0.0
    %2419 = vmatpush1.msra.mxu0 0.0
    %2420 = vmatprep.subr.mxu0 %v2318
    %2421 = vmatpush1.msra.mxu0 %v2317
    %2422 = vmatprep.subr.mxu0 %v2314
    %2423 = vmatpush1.msra.mxu0 %v2313
    %2424 = vmatprep.subr.mxu0 %v2310
    %2425 = vmatpush1.msra.mxu0 %v2309
    %2426 = vmatprep.subr.mxu0 %v2306
    %2427 = vmatpush1.msra.mxu0 %v2305
    %2428 = vmatprep.subr.mxu0 0.0
    %2429 = vmatpush2.msra.mxu0 0.0
    %2430 = vmatprep.subr.mxu0 0.0
    %2431 = vmatpush2.msra.mxu0 0.0
    %2432 = vmatprep.subr.mxu0 0.0
    %2433 = vmatpush2.msra.mxu0 0.0
    %2434 = vmatprep.subr.mxu0 0.0
    %2435 = vmatpush2.msra.mxu0 0.0
    %2436 = vmatprep.subr.mxu0 0.0
    %2437 = vmatpush2.msra.mxu0 0.0
    %2438 = vmatprep.subr.mxu0 0.0
    %2439 = vmatpush2.msra.mxu0 0.0
    %2440 = vmatprep.subr.mxu0 0.0
    %2441 = vmatpush2.msra.mxu0 0.0
    %2442 = vmatprep.subr.mxu0 0.0
    %2443 = vmatpush2.msra.mxu0 0.0
    %2444 = vmatprep.subr.mxu0 0.0
    %2445 = vmatpush2.msra.mxu0 0.0
    %2446 = vmatprep.subr.mxu0 0.0
    %2447 = vmatpush2.msra.mxu0 0.0
    %2448 = vmatprep.subr.mxu0 0.0
    %2449 = vmatpush2.msra.mxu0 0.0
    %2450 = vmatprep.subr.mxu0 0.0
    %2451 = vmatpush2.msra.mxu0 0.0
    %2452 = vmatprep.subr.mxu0 0.0
    %2453 = vmatpush2.msra.mxu0 0.0
    %2454 = vmatprep.subr.mxu0 0.0
    %2455 = vmatpush2.msra.mxu0 0.0
    %2456 = vmatprep.subr.mxu0 0.0
    %2457 = vmatpush2.msra.mxu0 0.0
    %2458 = vmatprep.subr.mxu0 0.0
    %2459 = vmatpush2.msra.mxu0 0.0
    %2460 = vmatprep.mubr.f32.mxu0 0.0
    %2461 = vmatmul.mubr.f32.gmra.mxu0 %v2323
    %v2462 = vpop.f32.mrf.mxu0
    %v2463 = vadd.f32 0.0, %v2462
    %v2464 = vpop.f32.mrf.mxu0
    %v2465 = vadd.f32 0.0, %v2464
    %2466 = vdwg.mxu0
    %v2469 = vsel %vm2321, %v1273, %v1266
    %v2470 = vsel %vm485, %v2469, 0
    %2472 = vmatprep.subr.mxu0 0.0
    %2473 = vmatpush1.msra.mxu0 0.0
    %2474 = vmatprep.subr.mxu0 0.0
    %2475 = vmatpush1.msra.mxu0 0.0
    %2476 = vmatprep.subr.mxu0 0.0
    %2477 = vmatpush1.msra.mxu0 0.0
    %2478 = vmatprep.subr.mxu0 0.0
    %2479 = vmatpush1.msra.mxu0 0.0
    %2480 = vmatprep.subr.mxu0 0.0
    %2481 = vmatpush1.msra.mxu0 0.0
    %2482 = vmatprep.subr.mxu0 0.0
    %2483 = vmatpush1.msra.mxu0 0.0
    %2484 = vmatprep.subr.mxu0 0.0
    %2485 = vmatpush1.msra.mxu0 0.0
    %2486 = vmatprep.subr.mxu0 0.0
    %2487 = vmatpush1.msra.mxu0 0.0
    %2488 = vmatprep.subr.mxu0 0.0
    %2489 = vmatpush1.msra.mxu0 0.0
    %2490 = vmatprep.subr.mxu0 0.0
    %2491 = vmatpush1.msra.mxu0 0.0
    %2492 = vmatprep.subr.mxu0 0.0
    %2493 = vmatpush1.msra.mxu0 0.0
    %2494 = vmatprep.subr.mxu0 0.0
    %2495 = vmatpush1.msra.mxu0 0.0
    %2496 = vmatprep.subr.mxu0 %v2300
    %2497 = vmatpush1.msra.mxu0 %v2299
    %2498 = vmatprep.subr.mxu0 %v2296
    %2499 = vmatpush1.msra.mxu0 %v2295
    %2500 = vmatprep.subr.mxu0 %v2292
    %2501 = vmatpush1.msra.mxu0 %v2291
    %2502 = vmatprep.subr.mxu0 %v2288
    %2503 = vmatpush1.msra.mxu0 %v2287
    %2504 = vmatprep.subr.mxu0 0.0
    %2505 = vmatpush2.msra.mxu0 0.0
    %2506 = vmatprep.subr.mxu0 0.0
    %2507 = vmatpush2.msra.mxu0 0.0
    %2508 = vmatprep.subr.mxu0 0.0
    %2509 = vmatpush2.msra.mxu0 0.0
    %2510 = vmatprep.subr.mxu0 0.0
    %2511 = vmatpush2.msra.mxu0 0.0
    %2512 = vmatprep.subr.mxu0 0.0
    %2513 = vmatpush2.msra.mxu0 0.0
    %2514 = vmatprep.subr.mxu0 0.0
    %2515 = vmatpush2.msra.mxu0 0.0
    %2516 = vmatprep.subr.mxu0 0.0
    %2517 = vmatpush2.msra.mxu0 0.0
    %2518 = vmatprep.subr.mxu0 0.0
    %2519 = vmatpush2.msra.mxu0 0.0
    %2520 = vmatprep.subr.mxu0 0.0
    %2521 = vmatpush2.msra.mxu0 0.0
    %2522 = vmatprep.subr.mxu0 0.0
    %2523 = vmatpush2.msra.mxu0 0.0
    %2524 = vmatprep.subr.mxu0 0.0
    %2525 = vmatpush2.msra.mxu0 0.0
    %2526 = vmatprep.subr.mxu0 0.0
    %2527 = vmatpush2.msra.mxu0 0.0
    %2528 = vmatprep.subr.mxu0 0.0
    %2529 = vmatpush2.msra.mxu0 0.0
    %2530 = vmatprep.subr.mxu0 0.0
    %2531 = vmatpush2.msra.mxu0 0.0
    %2532 = vmatprep.subr.mxu0 0.0
    %2533 = vmatpush2.msra.mxu0 0.0
    %2534 = vmatprep.subr.mxu0 0.0
    %2535 = vmatpush2.msra.mxu0 0.0
    %2536 = vmatprep.mubr.f32.mxu0 0.0
    %2537 = vmatmul.mubr.f32.gmra.mxu0 %v2470
    %v2538 = vpop.f32.mrf.mxu0
    %v2539 = vadd.f32 %v2392, %v2538
    %v2540 = vpop.f32.mrf.mxu0
    %v2541 = vadd.f32 %v2394, %v2540
    %2542 = vdwg.mxu0
    %2543 = vmatprep.subr.mxu0 0.0
    %2544 = vmatpush1.msra.mxu0 0.0
    %2545 = vmatprep.subr.mxu0 0.0
    %2546 = vmatpush1.msra.mxu0 0.0
    %2547 = vmatprep.subr.mxu0 0.0
    %2548 = vmatpush1.msra.mxu0 0.0
    %2549 = vmatprep.subr.mxu0 0.0
    %2550 = vmatpush1.msra.mxu0 0.0
    %2551 = vmatprep.subr.mxu0 0.0
    %2552 = vmatpush1.msra.mxu0 0.0
    %2553 = vmatprep.subr.mxu0 0.0
    %2554 = vmatpush1.msra.mxu0 0.0
    %2555 = vmatprep.subr.mxu0 0.0
    %2556 = vmatpush1.msra.mxu0 0.0
    %2557 = vmatprep.subr.mxu0 0.0
    %2558 = vmatpush1.msra.mxu0 0.0
    %2559 = vmatprep.subr.mxu0 0.0
    %2560 = vmatpush1.msra.mxu0 0.0
    %2561 = vmatprep.subr.mxu0 0.0
    %2562 = vmatpush1.msra.mxu0 0.0
    %2563 = vmatprep.subr.mxu0 0.0
    %2564 = vmatpush1.msra.mxu0 0.0
    %2565 = vmatprep.subr.mxu0 0.0
    %2566 = vmatpush1.msra.mxu0 0.0
    %2567 = vmatprep.subr.mxu0 %v2302
    %2568 = vmatpush1.msra.mxu0 %v2301
    %2569 = vmatprep.subr.mxu0 %v2298
    %2570 = vmatpush1.msra.mxu0 %v2297
    %2571 = vmatprep.subr.mxu0 %v2294
    %2572 = vmatpush1.msra.mxu0 %v2293
    %2573 = vmatprep.subr.mxu0 %v2290
    %2574 = vmatpush1.msra.mxu0 %v2289
    %2575 = vmatprep.subr.mxu0 0.0
    %2576 = vmatpush2.msra.mxu0 0.0
    %2577 = vmatprep.subr.mxu0 0.0
    %2578 = vmatpush2.msra.mxu0 0.0
    %2579 = vmatprep.subr.mxu0 0.0
    %2580 = vmatpush2.msra.mxu0 0.0
    %2581 = vmatprep.subr.mxu0 0.0
    %2582 = vmatpush2.msra.mxu0 0.0
    %2583 = vmatprep.subr.mxu0 0.0
    %2584 = vmatpush2.msra.mxu0 0.0
    %2585 = vmatprep.subr.mxu0 0.0
    %2586 = vmatpush2.msra.mxu0 0.0
    %2587 = vmatprep.subr.mxu0 0.0
    %2588 = vmatpush2.msra.mxu0 0.0
    %2589 = vmatprep.subr.mxu0 0.0
    %2590 = vmatpush2.msra.mxu0 0.0
    %2591 = vmatprep.subr.mxu0 0.0
    %2592 = vmatpush2.msra.mxu0 0.0
    %2593 = vmatprep.subr.mxu0 0.0
    %2594 = vmatpush2.msra.mxu0 0.0
    %2595 = vmatprep.subr.mxu0 0.0
    %2596 = vmatpush2.msra.mxu0 0.0
    %2597 = vmatprep.subr.mxu0 0.0
    %2598 = vmatpush2.msra.mxu0 0.0
    %2599 = vmatprep.subr.mxu0 0.0
    %2600 = vmatpush2.msra.mxu0 0.0
    %2601 = vmatprep.subr.mxu0 0.0
    %2602 = vmatpush2.msra.mxu0 0.0
    %2603 = vmatprep.subr.mxu0 0.0
    %2604 = vmatpush2.msra.mxu0 0.0
    %2605 = vmatprep.subr.mxu0 0.0
    %2606 = vmatpush2.msra.mxu0 0.0
    %2607 = vmatprep.mubr.f32.mxu0 0.0
    %2608 = vmatmul.mubr.f32.gmra.mxu0 %v2470
    %v2609 = vpop.f32.mrf.mxu0
    %v2610 = vadd.f32 %v2463, %v2609
    %v2611 = vpop.f32.mrf.mxu0
    %v2612 = vadd.f32 %v2465, %v2611
    %2613 = vdwg.mxu0
    %v2614 = vld [vmem:[%s24] sm:$0xf]
    %v2616 = vlaneseq
    %v2617 = vshrl.u32 %v2616, 7
    %v2618 = vsub.s32 0, %v2617
    %v2619 = vrot.slane %v2614, %v2618
    %v2620 = vlaneseq
    %v2621 = vshrl.u32 %v2620, 7
    %v2622 = vsub.s32 1, %v2621
    %v2623 = vrot.slane %v2614, %v2622
    %v2624 = vlaneseq
    %v2625 = vshrl.u32 %v2624, 7
    %v2626 = vsub.s32 2, %v2625
    %v2627 = vrot.slane %v2614, %v2626
    %v2628 = vlaneseq
    %v2629 = vshrl.u32 %v2628, 7
    %v2630 = vsub.s32 3, %v2629
    %v2631 = vrot.slane %v2614, %v2630
    %v2636 = vadd.f32 %v2539, %v2619
    %v2637 = vadd.f32 %v2541, %v2623
    %v2638 = vadd.f32 %v2610, %v2627
    %v2639 = vadd.f32 %v2612, %v2631
    %v2640 = vmax.f32 %v2636, 0.0
    %v2641 = vmax.f32 %v2637, 0.0
    %v2642 = vmax.f32 %v2638, 0.0
    %v2643 = vmax.f32 %v2639, 0.0
    %v2644 = vld [vmem:[#allocation17] sm:$0xff]
    %v2645 = vld [vmem:[#allocation17 + $0x8] sm:$0xff]
    %v2646 = vld [vmem:[#allocation17 + $0x10] sm:$0xff]
    %v2647 = vld [vmem:[#allocation17 + $0x18] sm:$0xff]
    %v2648 = vld [vmem:[#allocation17 + $0x20] sm:$0xff]
    %v2649 = vld [vmem:[#allocation17 + $0x28] sm:$0xff]
    %v2650 = vld [vmem:[#allocation17 + $0x30] sm:$0xff]
    %v2651 = vld [vmem:[#allocation17 + $0x38] sm:$0xff]
    %v2652 = vld [vmem:[#allocation17 + $0x40] sm:$0xff]
    %v2653 = vld [vmem:[#allocation17 + $0x48] sm:$0xff]
    %v2654 = vld [vmem:[#allocation17 + $0x50] sm:$0xff]
    %v2655 = vld [vmem:[#allocation17 + $0x58] sm:$0xff]
    %v2656 = vld [vmem:[#allocation17 + $0x60] sm:$0xff]
    %v2657 = vld [vmem:[#allocation17 + $0x68] sm:$0xff]
    %v2658 = vld [vmem:[#allocation17 + $0x70] sm:$0xff]
    %v2659 = vld [vmem:[#allocation17 + $0x78] sm:$0xff]
    %v2660 = vld [vmem:[#allocation17 + $0x80] sm:$0xff]
    %v2661 = vld [vmem:[#allocation17 + $0x88] sm:$0xff]
    %v2662 = vld [vmem:[#allocation17 + $0x90] sm:$0xff]
    %v2663 = vld [vmem:[#allocation17 + $0x98] sm:$0xff]
    %v2664 = vld [vmem:[#allocation17 + $0xa0] sm:$0xff]
    %v2665 = vld [vmem:[#allocation17 + $0xa8] sm:$0xff]
    %v2666 = vld [vmem:[#allocation17 + $0xb0] sm:$0xff]
    %v2667 = vld [vmem:[#allocation17 + $0xb8] sm:$0xff]
    %v2668 = vld [vmem:[#allocation17 + $0xc0] sm:$0xff]
    %v2669 = vld [vmem:[#allocation17 + $0xc8] sm:$0xff]
    %v2670 = vld [vmem:[#allocation17 + $0xd0] sm:$0xff]
    %v2671 = vld [vmem:[#allocation17 + $0xd8] sm:$0xff]
    %v2672 = vld [vmem:[#allocation17 + $0xe0] sm:$0xff]
    %v2673 = vld [vmem:[#allocation17 + $0xe8] sm:$0xff]
    %v2674 = vld [vmem:[#allocation17 + $0xf0] sm:$0xff]
    %v2675 = vld [vmem:[#allocation17 + $0xf8] sm:$0xff]
    %v2676 = vld [vmem:[#allocation17 + $0x100] sm:$0xff]
    %v2677 = vld [vmem:[#allocation17 + $0x108] sm:$0xff]
    %v2678 = vld [vmem:[#allocation17 + $0x110] sm:$0xff]
    %v2679 = vld [vmem:[#allocation17 + $0x118] sm:$0xff]
    %v2680 = vld [vmem:[#allocation17 + $0x120] sm:$0xff]
    %v2681 = vld [vmem:[#allocation17 + $0x128] sm:$0xff]
    %v2682 = vld [vmem:[#allocation17 + $0x130] sm:$0xff]
    %v2683 = vld [vmem:[#allocation17 + $0x138] sm:$0xff]
    %v2684 = vld [vmem:[#allocation17 + $0x140] sm:$0xff]
    %v2685 = vld [vmem:[#allocation17 + $0x148] sm:$0xff]
    %v2686 = vld [vmem:[#allocation17 + $0x150] sm:$0xff]
    %v2687 = vld [vmem:[#allocation17 + $0x158] sm:$0xff]
    %v2688 = vld [vmem:[#allocation17 + $0x160] sm:$0xff]
    %v2689 = vld [vmem:[#allocation17 + $0x168] sm:$0xff]
    %v2690 = vld [vmem:[#allocation17 + $0x170] sm:$0xff]
    %v2691 = vld [vmem:[#allocation17 + $0x178] sm:$0xff]
    %v2692 = vld [vmem:[#allocation17 + $0x180] sm:$0xff]
    %v2693 = vld [vmem:[#allocation17 + $0x188] sm:$0xff]
    %v2694 = vld [vmem:[#allocation17 + $0x190] sm:$0xff]
    %v2695 = vld [vmem:[#allocation17 + $0x198] sm:$0xff]
    %v2696 = vld [vmem:[#allocation17 + $0x1a0] sm:$0xff]
    %v2697 = vld [vmem:[#allocation17 + $0x1a8] sm:$0xff]
    %v2698 = vld [vmem:[#allocation17 + $0x1b0] sm:$0xff]
    %v2699 = vld [vmem:[#allocation17 + $0x1b8] sm:$0xff]
    %v2700 = vld [vmem:[#allocation17 + $0x1c0] sm:$0xff]
    %v2701 = vld [vmem:[#allocation17 + $0x1c8] sm:$0xff]
    %v2702 = vld [vmem:[#allocation17 + $0x1d0] sm:$0xff]
    %v2703 = vld [vmem:[#allocation17 + $0x1d8] sm:$0xff]
    %v2704 = vld [vmem:[#allocation17 + $0x1e0] sm:$0xff]
    %v2705 = vld [vmem:[#allocation17 + $0x1e8] sm:$0xff]
    %v2706 = vld [vmem:[#allocation17 + $0x1f0] sm:$0xff]
    %v2707 = vld [vmem:[#allocation17 + $0x1f8] sm:$0xff]
    %v2708 = vld [vmem:[%s26] sm:$0x1]
    %v2710 = vlaneseq
    %v2711 = vshrl.u32 %v2710, 7
    %v2712 = vsub.s32 0, %v2711
    %v2713 = vrot.slane %v2708, %v2712
    %2715 = vmatprep.subr.mxu0 0.0
    %2716 = vmatpush1.msra.mxu0 %v2659
    %2717 = vmatprep.subr.mxu0 0.0
    %2718 = vmatpush1.msra.mxu0 %v2658
    %2719 = vmatprep.subr.mxu0 0.0
    %2720 = vmatpush1.msra.mxu0 %v2657
    %2721 = vmatprep.subr.mxu0 0.0
    %2722 = vmatpush1.msra.mxu0 %v2656
    %2723 = vmatprep.subr.mxu0 0.0
    %2724 = vmatpush1.msra.mxu0 %v2655
    %2725 = vmatprep.subr.mxu0 0.0
    %2726 = vmatpush1.msra.mxu0 %v2654
    %2727 = vmatprep.subr.mxu0 0.0
    %2728 = vmatpush1.msra.mxu0 %v2653
    %2729 = vmatprep.subr.mxu0 0.0
    %2730 = vmatpush1.msra.mxu0 %v2652
    %2731 = vmatprep.subr.mxu0 0.0
    %2732 = vmatpush1.msra.mxu0 %v2651
    %2733 = vmatprep.subr.mxu0 0.0
    %2734 = vmatpush1.msra.mxu0 %v2650
    %2735 = vmatprep.subr.mxu0 0.0
    %2736 = vmatpush1.msra.mxu0 %v2649
    %2737 = vmatprep.subr.mxu0 0.0
    %2738 = vmatpush1.msra.mxu0 %v2648
    %2739 = vmatprep.subr.mxu0 0.0
    %2740 = vmatpush1.msra.mxu0 %v2647
    %2741 = vmatprep.subr.mxu0 0.0
    %2742 = vmatpush1.msra.mxu0 %v2646
    %2743 = vmatprep.subr.mxu0 0.0
    %2744 = vmatpush1.msra.mxu0 %v2645
    %2745 = vmatprep.subr.mxu0 0.0
    %2746 = vmatpush1.msra.mxu0 %v2644
    %2747 = vmatprep.subr.mxu0 0.0
    %2748 = vmatpush2.msra.mxu0 %v2675
    %2749 = vmatprep.subr.mxu0 0.0
    %2750 = vmatpush2.msra.mxu0 %v2674
    %2751 = vmatprep.subr.mxu0 0.0
    %2752 = vmatpush2.msra.mxu0 %v2673
    %2753 = vmatprep.subr.mxu0 0.0
    %2754 = vmatpush2.msra.mxu0 %v2672
    %2755 = vmatprep.subr.mxu0 0.0
    %2756 = vmatpush2.msra.mxu0 %v2671
    %2757 = vmatprep.subr.mxu0 0.0
    %2758 = vmatpush2.msra.mxu0 %v2670
    %2759 = vmatprep.subr.mxu0 0.0
    %2760 = vmatpush2.msra.mxu0 %v2669
    %2761 = vmatprep.subr.mxu0 0.0
    %2762 = vmatpush2.msra.mxu0 %v2668
    %2763 = vmatprep.subr.mxu0 0.0
    %2764 = vmatpush2.msra.mxu0 %v2667
    %2765 = vmatprep.subr.mxu0 0.0
    %2766 = vmatpush2.msra.mxu0 %v2666
    %2767 = vmatprep.subr.mxu0 0.0
    %2768 = vmatpush2.msra.mxu0 %v2665
    %2769 = vmatprep.subr.mxu0 0.0
    %2770 = vmatpush2.msra.mxu0 %v2664
    %2771 = vmatprep.subr.mxu0 0.0
    %2772 = vmatpush2.msra.mxu0 %v2663
    %2773 = vmatprep.subr.mxu0 0.0
    %2774 = vmatpush2.msra.mxu0 %v2662
    %2775 = vmatprep.subr.mxu0 0.0
    %2776 = vmatpush2.msra.mxu0 %v2661
    %2777 = vmatprep.subr.mxu0 0.0
    %2778 = vmatpush2.msra.mxu0 %v2660
    %2779 = vmatprep.mubr.f32.mxu0 %v2641
    %2780 = vmatmul.mubr.f32.gmra.mxu0 %v2640
    %v2781 = vpop.f32.mrf.mxu0
    %v2782 = vadd.f32 %v2713, %v2781
    %v2783 = vpop.f32.mrf.mxu0
    %2784 = vdwg.mxu0
    %2785 = vmatprep.subr.mxu0 0.0
    %2786 = vmatpush1.msra.mxu0 %v2691
    %2787 = vmatprep.subr.mxu0 0.0
    %2788 = vmatpush1.msra.mxu0 %v2690
    %2789 = vmatprep.subr.mxu0 0.0
    %2790 = vmatpush1.msra.mxu0 %v2689
    %2791 = vmatprep.subr.mxu0 0.0
    %2792 = vmatpush1.msra.mxu0 %v2688
    %2793 = vmatprep.subr.mxu0 0.0
    %2794 = vmatpush1.msra.mxu0 %v2687
    %2795 = vmatprep.subr.mxu0 0.0
    %2796 = vmatpush1.msra.mxu0 %v2686
    %2797 = vmatprep.subr.mxu0 0.0
    %2798 = vmatpush1.msra.mxu0 %v2685
    %2799 = vmatprep.subr.mxu0 0.0
    %2800 = vmatpush1.msra.mxu0 %v2684
    %2801 = vmatprep.subr.mxu0 0.0
    %2802 = vmatpush1.msra.mxu0 %v2683
    %2803 = vmatprep.subr.mxu0 0.0
    %2804 = vmatpush1.msra.mxu0 %v2682
    %2805 = vmatprep.subr.mxu0 0.0
    %2806 = vmatpush1.msra.mxu0 %v2681
    %2807 = vmatprep.subr.mxu0 0.0
    %2808 = vmatpush1.msra.mxu0 %v2680
    %2809 = vmatprep.subr.mxu0 0.0
    %2810 = vmatpush1.msra.mxu0 %v2679
    %2811 = vmatprep.subr.mxu0 0.0
    %2812 = vmatpush1.msra.mxu0 %v2678
    %2813 = vmatprep.subr.mxu0 0.0
    %2814 = vmatpush1.msra.mxu0 %v2677
    %2815 = vmatprep.subr.mxu0 0.0
    %2816 = vmatpush1.msra.mxu0 %v2676
    %2817 = vmatprep.subr.mxu0 0.0
    %2818 = vmatpush2.msra.mxu0 %v2707
    %2819 = vmatprep.subr.mxu0 0.0
    %2820 = vmatpush2.msra.mxu0 %v2706
    %2821 = vmatprep.subr.mxu0 0.0
    %2822 = vmatpush2.msra.mxu0 %v2705
    %2823 = vmatprep.subr.mxu0 0.0
    %2824 = vmatpush2.msra.mxu0 %v2704
    %2825 = vmatprep.subr.mxu0 0.0
    %2826 = vmatpush2.msra.mxu0 %v2703
    %2827 = vmatprep.subr.mxu0 0.0
    %2828 = vmatpush2.msra.mxu0 %v2702
    %2829 = vmatprep.subr.mxu0 0.0
    %2830 = vmatpush2.msra.mxu0 %v2701
    %2831 = vmatprep.subr.mxu0 0.0
    %2832 = vmatpush2.msra.mxu0 %v2700
    %2833 = vmatprep.subr.mxu0 0.0
    %2834 = vmatpush2.msra.mxu0 %v2699
    %2835 = vmatprep.subr.mxu0 0.0
    %2836 = vmatpush2.msra.mxu0 %v2698
    %2837 = vmatprep.subr.mxu0 0.0
    %2838 = vmatpush2.msra.mxu0 %v2697
    %2839 = vmatprep.subr.mxu0 0.0
    %2840 = vmatpush2.msra.mxu0 %v2696
    %2841 = vmatprep.subr.mxu0 0.0
    %2842 = vmatpush2.msra.mxu0 %v2695
    %2843 = vmatprep.subr.mxu0 0.0
    %2844 = vmatpush2.msra.mxu0 %v2694
    %2845 = vmatprep.subr.mxu0 0.0
    %2846 = vmatpush2.msra.mxu0 %v2693
    %2847 = vmatprep.subr.mxu0 0.0
    %2848 = vmatpush2.msra.mxu0 %v2692
    %2849 = vmatprep.mubr.f32.mxu0 %v2643
    %2850 = vmatmul.mubr.f32.gmra.mxu0 %v2642
    %v2851 = vpop.f32.mrf.mxu0
    %v2852 = vadd.f32 %v2782, %v2851
    %v2853 = vpop.f32.mrf.mxu0
    %2854 = vdwg.mxu0
    %vm2855 = vcmask 9216
    %2856 = vst.msk [vmem:[#allocation19] sm:$0x3] %vm2855, %v2852
    // Predicated region
    $region150: #{trans_forward.1} parent=1 // pred_check
      _
    $region151: #{trans_forward.1} parent=1 // pred_check_branch
      %2858 = sbr.rel (0) target = $region153
    $region152: #{trans_forward.1} parent=1 // pred_region
      %s2860 = ssub.s32 32, 32
      %2861 = vsyncadd [#allocation4], %s2860
      %s2863 = sshll.u32 [#allocation19], 4
      %s2864 = int_to_ptr.vmem [resolvable:$true] %s2863
      %2866 = dma.vmem_to_hbm [thread:$0]  %s2864, 32, %s27, [#allocation4]
    $region153: #{trans_forward.1} parent=1 // pred_fallthru
      _
    // Predicated region
    $region154: #{trans_forward.1} parent=1 // pred_check
      _
    $region155: #{trans_forward.1} parent=1 // pred_check_branch
      %2868 = sbr.rel (0) target = $region157
    $region156: #{trans_forward.1} parent=1 // pred_region
      %2869 = dma.done [#allocation4], 32
    $region157: #{trans_forward.1} parent=1 // pred_fallthru
      _
    %2870 = vsyncpa [#allocation3], 1
    %2871 = vsyncpa [#allocation6], 1
    %2872 = vsyncpa [#allocation9], 1
    %2873 = vsyncpa [#allocation12], 1
    %2874 = vsyncpa [#allocation15], 1
    %2875 = vsyncpa [#allocation18], 1
    %2876 = vsyncpa [#allocation4], 1

</llo_original>
